<compile_context>
chip_gen: v7x
topology: tpu7x:2x2x1
jax: 0.10.0
libtpu: 0.0.40
codegen_flags: <defaults>
</compile_context>

<pallas_src>
import functools

import jax
import jax.numpy as jnp
import numpy as np
from jax import lax
from jax.experimental import pallas as pl
from jax.experimental.pallas import tpu as pltpu


def _asf_kernel(group, C, Cm, W, S, HALO, compute_dtype, *refs):
    """One grid step = (batch b, spatial tile t); lane axis = S flattened pixels.

    refs layout (inputs, then output):
      per g: cur_g (1, C, S), prev_g (1, C, HALO), next_g (1, C, HALO)
      masks (8, S)          boundary-validity per non-center 3x3 tap (compute dtype)
      w1    (9*G, Cm, C)    folded (BN1-scaled) 3x3 conv weight, [tap*G+g] blocks
      b1    (Cm, 1)         folded conv1 + BN1 bias (f32)
      w2    (G, Cm)         1x1 conv weight (f32)
      b2    (G, 1)          1x1 conv bias (f32)
      bns   (C, 1)          folded output-BN scale (f32)
      bnb   (C, 1)          folded output-BN bias  (f32)
      o     (1, C, S)       output tile (lane-dense store)
    """
    n_x = 3 * group
    x_refs = refs[:n_x]
    (masks_ref, w1_ref, b1_ref, w2_ref, b2_ref,
     bns_ref, bnb_ref) = refs[n_x:n_x + 7]
    o_ref = refs[n_x + 7]

    masks = masks_ref[...]                                   # (8, S)

    # --- 3x3 conv (+ folded BN1) as per-(tap, group) MXU accumulation ---------
    h = None
    for g in range(group):
        cur_ref, prev_ref, next_ref = x_refs[3 * g:3 * g + 3]
        mid = cur_ref[0].astype(compute_dtype)               # (C, S)
        # lane-aligned concat (HALO and S are multiples of 128 when tiled):
        # ext covers global flat positions [tile*S - HALO, tile*S + S + HALO)
        ext = jnp.concatenate(
            [prev_ref[0].astype(compute_dtype), mid,
             next_ref[0].astype(compute_dtype)], axis=-1)    # (C, S + 2*HALO)
        bases = (ext[:, HALO - W:HALO - W + S],               # dy = -1 (value at i-W)
                 mid,                                         # dy =  0
                 ext[:, HALO + W:HALO + W + S])               # dy = +1 (value at i+W)
        for dy in (-1, 0, 1):
            base = bases[dy + 1]
            for dx in (-1, 0, 1):
                tap = (dy + 1) * 3 + (dx + 1)
                # +-1 lane roll wraps only at image column edges -> masked below
                slab = base if dx == 0 else pltpu.roll(base, shift=(-dx) % S, axis=1)
                if tap != 4:                                  # center tap always valid
                    mrow = tap if tap < 4 else tap - 1
                    slab = slab * masks[mrow:mrow + 1, :]
                p = jnp.dot(w1_ref[tap * group + g], slab,
                            preferred_element_type=jnp.float32)   # (Cm, S) f32 acc
                h = p if h is None else h + p

    h = jnp.maximum(h + b1_ref[...], 0.0)                    # conv1 + BN1 + ReLU, f32

    # --- 1x1 conv -> group logits (kept f32: tiny K, tighter attention) -------
    logits = jnp.dot(w2_ref[...], h, preferred_element_type=jnp.float32) + b2_ref[...]

    # --- softmax over the group axis ------------------------------------------
    if group == 2:
        # softmax_2(l0, l1) = (sigmoid(l0-l1), 1-sigmoid(l0-l1)): one exp, exact
        a0 = 1.0 / (1.0 + jnp.exp(logits[1:2, :] - logits[0:1, :]))
        attn = (a0, 1.0 - a0)
    else:
        m = jnp.max(logits, axis=0, keepdims=True)
        e = jnp.exp(logits - m)
        inv = pl.reciprocal(jnp.sum(e, axis=0, keepdims=True), approx=True)
        attn = tuple(e[gg:gg + 1, :] * inv for gg in range(group))

    # --- attention-weighted fusion (f32) + folded output BN --------------------
    acc = x_refs[0][0] * attn[0]
    for g in range(1, group):
        acc = acc + x_refs[3 * g][0] * attn[g]
    o_ref[0] = (acc * bns_ref[...] + bnb_ref[...]).astype(o_ref.dtype)


def attention_scale_fusion_forward(xs, params, *, compute_dtype=jnp.float32,
                                   out_dtype=jnp.float32, rows_per_tile=None,
                                   tile_budget_bytes=12 << 20, eps=1e-5):
    """xs: list of `group` arrays (B, C, H, W) f32. Returns (B, C, H, W) out_dtype."""
    group = len(xs)
    B, C, H, W = xs[0].shape
    for x in xs[1:]:
        if x.shape != xs[0].shape:
            raise ValueError("all group inputs must share the same shape")
    HW = H * W
    Cm = params["w1"].shape[0]

    # ---- host-side constant folding + weight pre-cast (once) -----------------
    s1 = params["bn1_gamma"] / jnp.sqrt(params["bn1_var"] + eps)
    w1f = (params["w1"] * s1[:, None, None, None]).reshape(Cm, group, C, 3, 3)
    w1f = jnp.transpose(w1f, (3, 4, 1, 0, 2)).reshape(9 * group, Cm, C)
    w1f = w1f.astype(compute_dtype)
    b1f = (s1 * (params["b1"] - params["bn1_mean"]) + params["bn1_beta"]).reshape(Cm, 1)
    w2f = params["w2"].reshape(group, Cm)                    # f32 (tiny second matmul)
    b2f = params["b2"].reshape(group, 1)
    so = params["bn_out_gamma"] / jnp.sqrt(params["bn_out_var"] + eps)
    bn_scale = so.reshape(C, 1)
    bn_bias = (params["bn_out_beta"] - params["bn_out_mean"] * so).reshape(C, 1)

    # ---- spatial tiling over rows of the flattened HW axis -------------------
    HALO = min(128 * pl.cdiv(W, 128), HW)      # halo block lanes: >= W, 128-aligned
    cbytes = jnp.dtype(compute_dtype).itemsize
    obytes = jnp.dtype(out_dtype).itemsize

    def live_bytes(rows):                      # rough per-step VMEM footprint
        s = rows * W
        return (2 * group * C * (s + 2 * HALO) * 4       # inputs (f32, double-buffered)
                + 2 * C * s * obytes                      # output (double-buffered)
                + 2 * 8 * s * cbytes                      # mask tiles
                + C * (4 * s + 2 * HALO) * cbytes         # ext + shifted-tap temporaries
                + (Cm + 2 * group + C) * s * 4)           # h, logits, attn, acc (f32)

    if rows_per_tile is None:
        valid = [r for r in range(1, H + 1) if H % r == 0 and (r * W) % HALO == 0]
        if not valid:
            rows = H                                       # single-tile fallback
        else:
            fitting = [r for r in valid if live_bytes(r) <= tile_budget_bytes]
            rows = max(fitting) if fitting else min(valid)
    else:
        rows = int(rows_per_tile)
        if H % rows != 0:
            raise ValueError("rows_per_tile must divide H")
        if H // rows > 1 and (rows * W) % HALO != 0:
            raise ValueError(f"rows_per_tile*W must be a multiple of HALO={HALO}")

    S = rows * W                      # lanes per tile (multiple of 128 when T > 1)
    T = H // rows
    SB = max(S // HALO, 1)            # tile size in halo-block units (exact for T > 1)
    NB = max(HW // HALO, 1)           # halo blocks along HW

    # inputs stay separate (no concat); reshape to (B, C, HW) is free (no transpose)
    xr = [x.reshape(B, C, HW) for x in xs]

    # per-tap image-boundary validity masks (center tap dropped), compute dtype
    hh, ww = np.meshgrid(np.arange(H), np.arange(W), indexing="ij")
    mask_rows = []
    for ky in range(3):
        for kx in range(3):
            if (ky, kx) == (1, 1):
                continue
            dy, dx = ky - 1, kx - 1
            valid_m = (hh + dy >= 0) & (hh + dy < H) & (ww + dx >= 0) & (ww + dx < W)
            mask_rows.append(valid_m.reshape(-1).astype(np.float32))
    masks = jnp.asarray(np.stack(mask_rows)).astype(compute_dtype)       # (8, HW)

    # ---- BlockSpecs -----------------------------------------------------------
    def cur_map(b, t):
        return (b, 0, t)

    def prev_map(b, t):   # halo block just before the tile (clamped; clamp is masked)
        return (b, 0, jnp.maximum(t * SB - 1, 0))

    def next_map(b, t):   # halo block just after the tile (clamped; clamp is masked)
        return (b, 0, jnp.minimum((t + 1) * SB, NB - 1))

    def const_spec(shape):
        return pl.BlockSpec(shape, lambda b, t, n=len(shape): (0,) * n)

    in_specs, args = [], []
    for g in range(group):
        in_specs += [pl.BlockSpec((1, C, S), cur_map),
                     pl.BlockSpec((1, C, HALO), prev_map),
                     pl.BlockSpec((1, C, HALO), next_map)]
        args += [xr[g], xr[g], xr[g]]
    in_specs += [pl.BlockSpec((8, S), lambda b, t: (0, t)),   # tap masks
                 const_spec((9 * group, Cm, C)), const_spec((Cm, 1)),
                 const_spec((group, Cm)), const_spec((group, 1)),
                 const_spec((C, 1)), const_spec((C, 1))]
    args += [masks, w1f, b1f, w2f, b2f, bn_scale, bn_bias]

    weight_bytes = 9 * group * Cm * C * cbytes + (Cm + 2 * group + 2 * C) * 4
    vmem_limit = int(min(max(2 * live_bytes(rows) + weight_bytes, 16 << 20), 48 << 20))

    kernel = functools.partial(_asf_kernel, group, C, Cm, W, S, HALO, compute_dtype)

    out = pl.pallas_call(
        kernel,
        out_shape=jax.ShapeDtypeStruct((B, C, HW), out_dtype),
        grid=(B, T),
        in_specs=in_specs,
        out_specs=pl.BlockSpec((1, C, S), cur_map),
        compiler_params=pltpu.CompilerParams(
            dimension_semantics=("parallel", "parallel"),
            vmem_limit_bytes=vmem_limit),
    )(*args)

    return out.reshape(B, C, H, W)


def init_params(key, C, group, ratio):
    """Deterministic synthetic parameters in PyTorch layouts (OIHW conv weights)."""
    Cg = C * group
    Cm = C // ratio
    ks = jax.random.split(key, 12)

    def unif(k, shape, fan_in):
        b = 1.0 / np.sqrt(fan_in)
        return jax.random.uniform(k, shape, jnp.float32, -b, b)

    return dict(
        w1=unif(ks[0], (Cm, Cg, 3, 3), Cg * 9), b1=unif(ks[1], (Cm,), Cg * 9),
        w2=unif(ks[2], (group, Cm, 1, 1), Cm), b2=unif(ks[3], (group,), Cm),
        bn1_gamma=jax.random.uniform(ks[4], (Cm,), jnp.float32, 0.5, 1.5),
        bn1_beta=jax.random.uniform(ks[5], (Cm,), jnp.float32, -0.5, 0.5),
        bn1_mean=jax.random.uniform(ks[6], (Cm,), jnp.float32, -0.5, 0.5),
        bn1_var=jax.random.uniform(ks[7], (Cm,), jnp.float32, 0.5, 1.5),
        bn_out_gamma=jax.random.uniform(ks[8], (C,), jnp.float32, 0.5, 1.5),
        bn_out_beta=jax.random.uniform(ks[9], (C,), jnp.float32, -0.5, 0.5),
        bn_out_mean=jax.random.uniform(ks[10], (C,), jnp.float32, -0.5, 0.5),
        bn_out_var=jax.random.uniform(ks[11], (C,), jnp.float32, 0.5, 1.5),
    )


def _reference_forward(xs, params, eps=1e-5):
    """Pure-JAX reference matching the PyTorch forward (independent code path)."""
    group = len(xs)
    x_fuse = jnp.concatenate(xs, axis=1)
    hi = lax.conv_general_dilated(
        x_fuse, params["w1"], window_strides=(1, 1), padding=((1, 1), (1, 1)),
        dimension_numbers=("NCHW", "OIHW", "NCHW"), precision=lax.Precision.HIGHEST)
    hi = hi + params["b1"][None, :, None, None]
    s1 = params["bn1_gamma"] / jnp.sqrt(params["bn1_var"] + eps)
    hi = (hi - params["bn1_mean"][None, :, None, None]) * s1[None, :, None, None] \
        + params["bn1_beta"][None, :, None, None]
    hi = jnp.maximum(hi, 0.0)
    logits = lax.conv_general_dilated(
        hi, params["w2"], window_strides=(1, 1), padding="VALID",
        dimension_numbers=("NCHW", "OIHW", "NCHW"), precision=lax.Precision.HIGHEST)
    logits = logits + params["b2"][None, :, None, None]
    attn = jax.nn.softmax(logits, axis=1)
    x_out = xs[0] * attn[:, 0:1]
    for g in range(1, group):
        x_out = x_out + xs[g] * attn[:, g:g + 1]
    so = params["bn_out_gamma"] / jnp.sqrt(params["bn_out_var"] + eps)
    out = (x_out - params["bn_out_mean"][None, :, None, None]) * so[None, :, None, None] \
        + params["bn_out_beta"][None, :, None, None]
    return out


if __name__ == "__main__":
    B, C, H, W = 2, 16, 16, 16
    group, ratio = 2, 4

    key = jax.random.PRNGKey(0)
    kx0, kx1, kp = jax.random.split(key, 3)
    xs = [jax.random.normal(kx0, (B, C, H, W), jnp.float32),
          jax.random.normal(kx1, (B, C, H, W), jnp.float32)]
    params = init_params(kp, C, group, ratio)
    ref = _reference_forward(xs, params)

    # f32, auto tile selection (single spatial tile at this size)
    out = jax.block_until_ready(attention_scale_fusion_forward(xs, params))
    np.testing.assert_allclose(np.asarray(out), np.asarray(ref), rtol=2e-3, atol=2e-3)

    # f32, forced 2 spatial tiles per image (exercises the row-halo / mask path)
    out_t = jax.block_until_ready(
        attention_scale_fusion_forward(xs, params, rows_per_tile=8))
    np.testing.assert_allclose(np.asarray(out_t), np.asarray(ref), rtol=2e-3, atol=2e-3)

    # bf16 tap/MXU path (v6e/v7x), f32 accumulation + f32 attention; looser tolerance
    out_bf = jax.block_until_ready(
        attention_scale_fusion_forward(xs, params, compute_dtype=jnp.bfloat16,
                                       rows_per_tile=8))
    np.testing.assert_allclose(np.asarray(out_bf), np.asarray(ref), rtol=1e-1, atol=1e-1)

    print("KERNEL_OK")
</pallas_src>

<mosaic_0001>
module attributes {stable_mosaic.version = 11 : i64} {
  func.func @_asf_kernel(%arg0: i32, %arg1: i32, %arg2: memref<1x16x256xf32, #tpu.memory_space<vmem>>, %arg3: memref<1x16x128xf32, #tpu.memory_space<vmem>>, %arg4: memref<1x16x128xf32, #tpu.memory_space<vmem>>, %arg5: memref<1x16x256xf32, #tpu.memory_space<vmem>>, %arg6: memref<1x16x128xf32, #tpu.memory_space<vmem>>, %arg7: memref<1x16x128xf32, #tpu.memory_space<vmem>>, %arg8: memref<8x256xf32, #tpu.memory_space<vmem>>, %arg9: memref<18x4x16xf32, #tpu.memory_space<vmem>>, %arg10: memref<4x1xf32, #tpu.memory_space<vmem>>, %arg11: memref<2x4xf32, #tpu.memory_space<vmem>>, %arg12: memref<2x1xf32, #tpu.memory_space<vmem>>, %arg13: memref<16x1xf32, #tpu.memory_space<vmem>>, %arg14: memref<16x1xf32, #tpu.memory_space<vmem>>, %arg15: memref<1x16x256xf32, #tpu.memory_space<vmem>>) attributes {dimension_semantics = [#tpu.dimension_semantics<parallel>, #tpu.dimension_semantics<parallel>], iteration_bounds = array<i64: 2, 1>, scalar_prefetch = 0 : i64, scratch_operands = 0 : i64, tpu.core_type = #tpu.core_type<tc>, window_params = [{transform_indices = @transform_0, window_bounds = array<i64: 1, 16, 256>}, {transform_indices = @transform_1, window_bounds = array<i64: 1, 16, 128>}, {transform_indices = @transform_2, window_bounds = array<i64: 1, 16, 128>}, {transform_indices = @transform_3, window_bounds = array<i64: 1, 16, 256>}, {transform_indices = @transform_4, window_bounds = array<i64: 1, 16, 128>}, {transform_indices = @transform_5, window_bounds = array<i64: 1, 16, 128>}, {transform_indices = @transform_6, window_bounds = array<i64: 8, 256>}, {pipeline_mode = #tpu.pipeline_mode<synchronous>, transform_indices = @transform_7, window_bounds = array<i64: 18, 4, 16>}, {pipeline_mode = #tpu.pipeline_mode<synchronous>, transform_indices = @transform_8, window_bounds = array<i64: 4, 1>}, {pipeline_mode = #tpu.pipeline_mode<synchronous>, transform_indices = @transform_9, window_bounds = array<i64: 2, 4>}, {pipeline_mode = #tpu.pipeline_mode<synchronous>, transform_indices = @transform_10, window_bounds = array<i64: 2, 1>}, {pipeline_mode = #tpu.pipeline_mode<synchronous>, transform_indices = @transform_11, window_bounds = array<i64: 16, 1>}, {pipeline_mode = #tpu.pipeline_mode<synchronous>, transform_indices = @transform_12, window_bounds = array<i64: 16, 1>}, {transform_indices = @transform_13, window_bounds = array<i64: 1, 16, 256>}]} {
    %c0 = arith.constant 0 : index
    %c0_0 = arith.constant 0 : index
    %0 = vector.load %arg8[%c0, %c0_0] : memref<8x256xf32, #tpu.memory_space<vmem>>, vector<8x256xf32>
    %c0_1 = arith.constant 0 : index
    %c0_2 = arith.constant 0 : index
    %c0_3 = arith.constant 0 : index
    %1 = vector.load %arg2[%c0_1, %c0_2, %c0_3] : memref<1x16x256xf32, #tpu.memory_space<vmem>>, vector<1x16x256xf32>
    %2 = vector.shape_cast %1 : vector<1x16x256xf32> to vector<16x256xf32>
    %c0_4 = arith.constant 0 : index
    %c0_5 = arith.constant 0 : index
    %c0_6 = arith.constant 0 : index
    %3 = vector.load %arg3[%c0_4, %c0_5, %c0_6] : memref<1x16x128xf32, #tpu.memory_space<vmem>>, vector<1x16x128xf32>
    %4 = vector.shape_cast %3 : vector<1x16x128xf32> to vector<16x128xf32>
    %c0_7 = arith.constant 0 : index
    %c0_8 = arith.constant 0 : index
    %c0_9 = arith.constant 0 : index
    %5 = vector.load %arg4[%c0_7, %c0_8, %c0_9] : memref<1x16x128xf32, #tpu.memory_space<vmem>>, vector<1x16x128xf32>
    %6 = vector.shape_cast %5 : vector<1x16x128xf32> to vector<16x128xf32>
    %7 = tpu.concatenate %4, %2, %6 in 1 : vector<16x128xf32>, vector<16x256xf32>, vector<16x128xf32> -> vector<16x512xf32>
    %8 = vector.extract_strided_slice %7 {offsets = [0, 112], sizes = [16, 256], strides = [1, 1]} : vector<16x512xf32> to vector<16x256xf32>
    %9 = vector.extract_strided_slice %7 {offsets = [0, 144], sizes = [16, 256], strides = [1, 1]} : vector<16x512xf32> to vector<16x256xf32>
    %c1_i32 = arith.constant 1 : i32
    %10 = tpu.dynamic_rotate %8 by %c1_i32 dim 1 : vector<16x256xf32>, i32 -> vector<16x256xf32>
    %11 = vector.extract_strided_slice %0 {offsets = [0, 0], sizes = [1, 256], strides = [1, 1]} : vector<8x256xf32> to vector<1x256xf32>
    %12 = vector.broadcast %11 : vector<1x256xf32> to vector<16x256xf32>
    %13 = arith.mulf %10, %12 : vector<16x256xf32>
    %c0_10 = arith.constant 0 : index
    %c0_11 = arith.constant 0 : index
    %c0_12 = arith.constant 0 : index
    %14 = vector.load %arg9[%c0_10, %c0_11, %c0_12] : memref<18x4x16xf32, #tpu.memory_space<vmem>>, vector<1x4x16xf32>
    %15 = vector.shape_cast %14 : vector<1x4x16xf32> to vector<4x16xf32>
    %cst = arith.constant dense<0.000000e+00> : vector<4x256xf32>
    %16 = tpu.matmul %15, %13, %cst {dimension_numbers = #tpu.dot_dimension_numbers<[1], [0], [0], [1], [0, 0, 1, 1], [], []>} : vector<4x16xf32>, vector<16x256xf32>, vector<4x256xf32> -> vector<4x256xf32>
    %17 = vector.extract_strided_slice %0 {offsets = [1, 0], sizes = [1, 256], strides = [1, 1]} : vector<8x256xf32> to vector<1x256xf32>
    %18 = vector.broadcast %17 : vector<1x256xf32> to vector<16x256xf32>
    %19 = arith.mulf %8, %18 : vector<16x256xf32>
    %c2 = arith.constant 2 : index
    %c0_13 = arith.constant 0 : index
    %c0_14 = arith.constant 0 : index
    %20 = vector.load %arg9[%c2, %c0_13, %c0_14] : memref<18x4x16xf32, #tpu.memory_space<vmem>>, vector<1x4x16xf32>
    %21 = vector.shape_cast %20 : vector<1x4x16xf32> to vector<4x16xf32>
    %cst_15 = arith.constant dense<0.000000e+00> : vector<4x256xf32>
    %22 = tpu.matmul %21, %19, %cst_15 {dimension_numbers = #tpu.dot_dimension_numbers<[1], [0], [0], [1], [0, 0, 1, 1], [], []>} : vector<4x16xf32>, vector<16x256xf32>, vector<4x256xf32> -> vector<4x256xf32>
    %23 = arith.addf %16, %22 : vector<4x256xf32>
    %c255_i32 = arith.constant 255 : i32
    %24 = tpu.dynamic_rotate %8 by %c255_i32 dim 1 : vector<16x256xf32>, i32 -> vector<16x256xf32>
    %25 = vector.extract_strided_slice %0 {offsets = [2, 0], sizes = [1, 256], strides = [1, 1]} : vector<8x256xf32> to vector<1x256xf32>
    %26 = vector.broadcast %25 : vector<1x256xf32> to vector<16x256xf32>
    %27 = arith.mulf %24, %26 : vector<16x256xf32>
    %c4 = arith.constant 4 : index
    %c0_16 = arith.constant 0 : index
    %c0_17 = arith.constant 0 : index
    %28 = vector.load %arg9[%c4, %c0_16, %c0_17] : memref<18x4x16xf32, #tpu.memory_space<vmem>>, vector<1x4x16xf32>
    %29 = vector.shape_cast %28 : vector<1x4x16xf32> to vector<4x16xf32>
    %cst_18 = arith.constant dense<0.000000e+00> : vector<4x256xf32>
    %30 = tpu.matmul %29, %27, %cst_18 {dimension_numbers = #tpu.dot_dimension_numbers<[1], [0], [0], [1], [0, 0, 1, 1], [], []>} : vector<4x16xf32>, vector<16x256xf32>, vector<4x256xf32> -> vector<4x256xf32>
    %31 = arith.addf %23, %30 : vector<4x256xf32>
    %c1_i32_19 = arith.constant 1 : i32
    %32 = tpu.dynamic_rotate %2 by %c1_i32_19 dim 1 : vector<16x256xf32>, i32 -> vector<16x256xf32>
    %33 = vector.extract_strided_slice %0 {offsets = [3, 0], sizes = [1, 256], strides = [1, 1]} : vector<8x256xf32> to vector<1x256xf32>
    %34 = vector.broadcast %33 : vector<1x256xf32> to vector<16x256xf32>
    %35 = arith.mulf %32, %34 : vector<16x256xf32>
    %c6 = arith.constant 6 : index
    %c0_20 = arith.constant 0 : index
    %c0_21 = arith.constant 0 : index
    %36 = vector.load %arg9[%c6, %c0_20, %c0_21] : memref<18x4x16xf32, #tpu.memory_space<vmem>>, vector<1x4x16xf32>
    %37 = vector.shape_cast %36 : vector<1x4x16xf32> to vector<4x16xf32>
    %cst_22 = arith.constant dense<0.000000e+00> : vector<4x256xf32>
    %38 = tpu.matmul %37, %35, %cst_22 {dimension_numbers = #tpu.dot_dimension_numbers<[1], [0], [0], [1], [0, 0, 1, 1], [], []>} : vector<4x16xf32>, vector<16x256xf32>, vector<4x256xf32> -> vector<4x256xf32>
    %39 = arith.addf %31, %38 : vector<4x256xf32>
    %c8 = arith.constant 8 : index
    %c0_23 = arith.constant 0 : index
    %c0_24 = arith.constant 0 : index
    %40 = vector.load %arg9[%c8, %c0_23, %c0_24] : memref<18x4x16xf32, #tpu.memory_space<vmem>>, vector<1x4x16xf32>
    %41 = vector.shape_cast %40 : vector<1x4x16xf32> to vector<4x16xf32>
    %cst_25 = arith.constant dense<0.000000e+00> : vector<4x256xf32>
    %42 = tpu.matmul %41, %2, %cst_25 {dimension_numbers = #tpu.dot_dimension_numbers<[1], [0], [0], [1], [0, 0, 1, 1], [], []>} : vector<4x16xf32>, vector<16x256xf32>, vector<4x256xf32> -> vector<4x256xf32>
    %43 = arith.addf %39, %42 : vector<4x256xf32>
    %c255_i32_26 = arith.constant 255 : i32
    %44 = tpu.dynamic_rotate %2 by %c255_i32_26 dim 1 : vector<16x256xf32>, i32 -> vector<16x256xf32>
    %45 = vector.extract_strided_slice %0 {offsets = [4, 0], sizes = [1, 256], strides = [1, 1]} : vector<8x256xf32> to vector<1x256xf32>
    %46 = vector.broadcast %45 : vector<1x256xf32> to vector<16x256xf32>
    %47 = arith.mulf %44, %46 : vector<16x256xf32>
    %c10 = arith.constant 10 : index
    %c0_27 = arith.constant 0 : index
    %c0_28 = arith.constant 0 : index
    %48 = vector.load %arg9[%c10, %c0_27, %c0_28] : memref<18x4x16xf32, #tpu.memory_space<vmem>>, vector<1x4x16xf32>
    %49 = vector.shape_cast %48 : vector<1x4x16xf32> to vector<4x16xf32>
    %cst_29 = arith.constant dense<0.000000e+00> : vector<4x256xf32>
    %50 = tpu.matmul %49, %47, %cst_29 {dimension_numbers = #tpu.dot_dimension_numbers<[1], [0], [0], [1], [0, 0, 1, 1], [], []>} : vector<4x16xf32>, vector<16x256xf32>, vector<4x256xf32> -> vector<4x256xf32>
    %51 = arith.addf %43, %50 : vector<4x256xf32>
    %c1_i32_30 = arith.constant 1 : i32
    %52 = tpu.dynamic_rotate %9 by %c1_i32_30 dim 1 : vector<16x256xf32>, i32 -> vector<16x256xf32>
    %53 = vector.extract_strided_slice %0 {offsets = [5, 0], sizes = [1, 256], strides = [1, 1]} : vector<8x256xf32> to vector<1x256xf32>
    %54 = vector.broadcast %53 : vector<1x256xf32> to vector<16x256xf32>
    %55 = arith.mulf %52, %54 : vector<16x256xf32>
    %c12 = arith.constant 12 : index
    %c0_31 = arith.constant 0 : index
    %c0_32 = arith.constant 0 : index
    %56 = vector.load %arg9[%c12, %c0_31, %c0_32] : memref<18x4x16xf32, #tpu.memory_space<vmem>>, vector<1x4x16xf32>
    %57 = vector.shape_cast %56 : vector<1x4x16xf32> to vector<4x16xf32>
    %cst_33 = arith.constant dense<0.000000e+00> : vector<4x256xf32>
    %58 = tpu.matmul %57, %55, %cst_33 {dimension_numbers = #tpu.dot_dimension_numbers<[1], [0], [0], [1], [0, 0, 1, 1], [], []>} : vector<4x16xf32>, vector<16x256xf32>, vector<4x256xf32> -> vector<4x256xf32>
    %59 = arith.addf %51, %58 : vector<4x256xf32>
    %60 = vector.extract_strided_slice %0 {offsets = [6, 0], sizes = [1, 256], strides = [1, 1]} : vector<8x256xf32> to vector<1x256xf32>
    %61 = vector.broadcast %60 : vector<1x256xf32> to vector<16x256xf32>
    %62 = arith.mulf %9, %61 : vector<16x256xf32>
    %c14 = arith.constant 14 : index
    %c0_34 = arith.constant 0 : index
    %c0_35 = arith.constant 0 : index
    %63 = vector.load %arg9[%c14, %c0_34, %c0_35] : memref<18x4x16xf32, #tpu.memory_space<vmem>>, vector<1x4x16xf32>
    %64 = vector.shape_cast %63 : vector<1x4x16xf32> to vector<4x16xf32>
    %cst_36 = arith.constant dense<0.000000e+00> : vector<4x256xf32>
    %65 = tpu.matmul %64, %62, %cst_36 {dimension_numbers = #tpu.dot_dimension_numbers<[1], [0], [0], [1], [0, 0, 1, 1], [], []>} : vector<4x16xf32>, vector<16x256xf32>, vector<4x256xf32> -> vector<4x256xf32>
    %66 = arith.addf %59, %65 : vector<4x256xf32>
    %c255_i32_37 = arith.constant 255 : i32
    %67 = tpu.dynamic_rotate %9 by %c255_i32_37 dim 1 : vector<16x256xf32>, i32 -> vector<16x256xf32>
    %68 = vector.extract_strided_slice %0 {offsets = [7, 0], sizes = [1, 256], strides = [1, 1]} : vector<8x256xf32> to vector<1x256xf32>
    %69 = vector.broadcast %68 : vector<1x256xf32> to vector<16x256xf32>
    %70 = arith.mulf %67, %69 : vector<16x256xf32>
    %c16 = arith.constant 16 : index
    %c0_38 = arith.constant 0 : index
    %c0_39 = arith.constant 0 : index
    %71 = vector.load %arg9[%c16, %c0_38, %c0_39] : memref<18x4x16xf32, #tpu.memory_space<vmem>>, vector<1x4x16xf32>
    %72 = vector.shape_cast %71 : vector<1x4x16xf32> to vector<4x16xf32>
    %cst_40 = arith.constant dense<0.000000e+00> : vector<4x256xf32>
    %73 = tpu.matmul %72, %70, %cst_40 {dimension_numbers = #tpu.dot_dimension_numbers<[1], [0], [0], [1], [0, 0, 1, 1], [], []>} : vector<4x16xf32>, vector<16x256xf32>, vector<4x256xf32> -> vector<4x256xf32>
    %74 = arith.addf %66, %73 : vector<4x256xf32>
    %c0_41 = arith.constant 0 : index
    %c0_42 = arith.constant 0 : index
    %c0_43 = arith.constant 0 : index
    %75 = vector.load %arg5[%c0_41, %c0_42, %c0_43] : memref<1x16x256xf32, #tpu.memory_space<vmem>>, vector<1x16x256xf32>
    %76 = vector.shape_cast %75 : vector<1x16x256xf32> to vector<16x256xf32>
    %c0_44 = arith.constant 0 : index
    %c0_45 = arith.constant 0 : index
    %c0_46 = arith.constant 0 : index
    %77 = vector.load %arg6[%c0_44, %c0_45, %c0_46] : memref<1x16x128xf32, #tpu.memory_space<vmem>>, vector<1x16x128xf32>
    %78 = vector.shape_cast %77 : vector<1x16x128xf32> to vector<16x128xf32>
    %c0_47 = arith.constant 0 : index
    %c0_48 = arith.constant 0 : index
    %c0_49 = arith.constant 0 : index
    %79 = vector.load %arg7[%c0_47, %c0_48, %c0_49] : memref<1x16x128xf32, #tpu.memory_space<vmem>>, vector<1x16x128xf32>
    %80 = vector.shape_cast %79 : vector<1x16x128xf32> to vector<16x128xf32>
    %81 = tpu.concatenate %78, %76, %80 in 1 : vector<16x128xf32>, vector<16x256xf32>, vector<16x128xf32> -> vector<16x512xf32>
    %82 = vector.extract_strided_slice %81 {offsets = [0, 112], sizes = [16, 256], strides = [1, 1]} : vector<16x512xf32> to vector<16x256xf32>
    %83 = vector.extract_strided_slice %81 {offsets = [0, 144], sizes = [16, 256], strides = [1, 1]} : vector<16x512xf32> to vector<16x256xf32>
    %c1_i32_50 = arith.constant 1 : i32
    %84 = tpu.dynamic_rotate %82 by %c1_i32_50 dim 1 : vector<16x256xf32>, i32 -> vector<16x256xf32>
    %85 = vector.extract_strided_slice %0 {offsets = [0, 0], sizes = [1, 256], strides = [1, 1]} : vector<8x256xf32> to vector<1x256xf32>
    %86 = vector.broadcast %85 : vector<1x256xf32> to vector<16x256xf32>
    %87 = arith.mulf %84, %86 : vector<16x256xf32>
    %c1 = arith.constant 1 : index
    %c0_51 = arith.constant 0 : index
    %c0_52 = arith.constant 0 : index
    %88 = vector.load %arg9[%c1, %c0_51, %c0_52] : memref<18x4x16xf32, #tpu.memory_space<vmem>>, vector<1x4x16xf32>
    %89 = vector.shape_cast %88 : vector<1x4x16xf32> to vector<4x16xf32>
    %cst_53 = arith.constant dense<0.000000e+00> : vector<4x256xf32>
    %90 = tpu.matmul %89, %87, %cst_53 {dimension_numbers = #tpu.dot_dimension_numbers<[1], [0], [0], [1], [0, 0, 1, 1], [], []>} : vector<4x16xf32>, vector<16x256xf32>, vector<4x256xf32> -> vector<4x256xf32>
    %91 = arith.addf %74, %90 : vector<4x256xf32>
    %92 = vector.extract_strided_slice %0 {offsets = [1, 0], sizes = [1, 256], strides = [1, 1]} : vector<8x256xf32> to vector<1x256xf32>
    %93 = vector.broadcast %92 : vector<1x256xf32> to vector<16x256xf32>
    %94 = arith.mulf %82, %93 : vector<16x256xf32>
    %c3 = arith.constant 3 : index
    %c0_54 = arith.constant 0 : index
    %c0_55 = arith.constant 0 : index
    %95 = vector.load %arg9[%c3, %c0_54, %c0_55] : memref<18x4x16xf32, #tpu.memory_space<vmem>>, vector<1x4x16xf32>
    %96 = vector.shape_cast %95 : vector<1x4x16xf32> to vector<4x16xf32>
    %cst_56 = arith.constant dense<0.000000e+00> : vector<4x256xf32>
    %97 = tpu.matmul %96, %94, %cst_56 {dimension_numbers = #tpu.dot_dimension_numbers<[1], [0], [0], [1], [0, 0, 1, 1], [], []>} : vector<4x16xf32>, vector<16x256xf32>, vector<4x256xf32> -> vector<4x256xf32>
    %98 = arith.addf %91, %97 : vector<4x256xf32>
    %c255_i32_57 = arith.constant 255 : i32
    %99 = tpu.dynamic_rotate %82 by %c255_i32_57 dim 1 : vector<16x256xf32>, i32 -> vector<16x256xf32>
    %100 = vector.extract_strided_slice %0 {offsets = [2, 0], sizes = [1, 256], strides = [1, 1]} : vector<8x256xf32> to vector<1x256xf32>
    %101 = vector.broadcast %100 : vector<1x256xf32> to vector<16x256xf32>
    %102 = arith.mulf %99, %101 : vector<16x256xf32>
    %c5 = arith.constant 5 : index
    %c0_58 = arith.constant 0 : index
    %c0_59 = arith.constant 0 : index
    %103 = vector.load %arg9[%c5, %c0_58, %c0_59] : memref<18x4x16xf32, #tpu.memory_space<vmem>>, vector<1x4x16xf32>
    %104 = vector.shape_cast %103 : vector<1x4x16xf32> to vector<4x16xf32>
    %cst_60 = arith.constant dense<0.000000e+00> : vector<4x256xf32>
    %105 = tpu.matmul %104, %102, %cst_60 {dimension_numbers = #tpu.dot_dimension_numbers<[1], [0], [0], [1], [0, 0, 1, 1], [], []>} : vector<4x16xf32>, vector<16x256xf32>, vector<4x256xf32> -> vector<4x256xf32>
    %106 = arith.addf %98, %105 : vector<4x256xf32>
    %c1_i32_61 = arith.constant 1 : i32
    %107 = tpu.dynamic_rotate %76 by %c1_i32_61 dim 1 : vector<16x256xf32>, i32 -> vector<16x256xf32>
    %108 = vector.extract_strided_slice %0 {offsets = [3, 0], sizes = [1, 256], strides = [1, 1]} : vector<8x256xf32> to vector<1x256xf32>
    %109 = vector.broadcast %108 : vector<1x256xf32> to vector<16x256xf32>
    %110 = arith.mulf %107, %109 : vector<16x256xf32>
    %c7 = arith.constant 7 : index
    %c0_62 = arith.constant 0 : index
    %c0_63 = arith.constant 0 : index
    %111 = vector.load %arg9[%c7, %c0_62, %c0_63] : memref<18x4x16xf32, #tpu.memory_space<vmem>>, vector<1x4x16xf32>
    %112 = vector.shape_cast %111 : vector<1x4x16xf32> to vector<4x16xf32>
    %cst_64 = arith.constant dense<0.000000e+00> : vector<4x256xf32>
    %113 = tpu.matmul %112, %110, %cst_64 {dimension_numbers = #tpu.dot_dimension_numbers<[1], [0], [0], [1], [0, 0, 1, 1], [], []>} : vector<4x16xf32>, vector<16x256xf32>, vector<4x256xf32> -> vector<4x256xf32>
    %114 = arith.addf %106, %113 : vector<4x256xf32>
    %c9 = arith.constant 9 : index
    %c0_65 = arith.constant 0 : index
    %c0_66 = arith.constant 0 : index
    %115 = vector.load %arg9[%c9, %c0_65, %c0_66] : memref<18x4x16xf32, #tpu.memory_space<vmem>>, vector<1x4x16xf32>
    %116 = vector.shape_cast %115 : vector<1x4x16xf32> to vector<4x16xf32>
    %cst_67 = arith.constant dense<0.000000e+00> : vector<4x256xf32>
    %117 = tpu.matmul %116, %76, %cst_67 {dimension_numbers = #tpu.dot_dimension_numbers<[1], [0], [0], [1], [0, 0, 1, 1], [], []>} : vector<4x16xf32>, vector<16x256xf32>, vector<4x256xf32> -> vector<4x256xf32>
    %118 = arith.addf %114, %117 : vector<4x256xf32>
    %c255_i32_68 = arith.constant 255 : i32
    %119 = tpu.dynamic_rotate %76 by %c255_i32_68 dim 1 : vector<16x256xf32>, i32 -> vector<16x256xf32>
    %120 = vector.extract_strided_slice %0 {offsets = [4, 0], sizes = [1, 256], strides = [1, 1]} : vector<8x256xf32> to vector<1x256xf32>
    %121 = vector.broadcast %120 : vector<1x256xf32> to vector<16x256xf32>
    %122 = arith.mulf %119, %121 : vector<16x256xf32>
    %c11 = arith.constant 11 : index
    %c0_69 = arith.constant 0 : index
    %c0_70 = arith.constant 0 : index
    %123 = vector.load %arg9[%c11, %c0_69, %c0_70] : memref<18x4x16xf32, #tpu.memory_space<vmem>>, vector<1x4x16xf32>
    %124 = vector.shape_cast %123 : vector<1x4x16xf32> to vector<4x16xf32>
    %cst_71 = arith.constant dense<0.000000e+00> : vector<4x256xf32>
    %125 = tpu.matmul %124, %122, %cst_71 {dimension_numbers = #tpu.dot_dimension_numbers<[1], [0], [0], [1], [0, 0, 1, 1], [], []>} : vector<4x16xf32>, vector<16x256xf32>, vector<4x256xf32> -> vector<4x256xf32>
    %126 = arith.addf %118, %125 : vector<4x256xf32>
    %c1_i32_72 = arith.constant 1 : i32
    %127 = tpu.dynamic_rotate %83 by %c1_i32_72 dim 1 : vector<16x256xf32>, i32 -> vector<16x256xf32>
    %128 = vector.extract_strided_slice %0 {offsets = [5, 0], sizes = [1, 256], strides = [1, 1]} : vector<8x256xf32> to vector<1x256xf32>
    %129 = vector.broadcast %128 : vector<1x256xf32> to vector<16x256xf32>
    %130 = arith.mulf %127, %129 : vector<16x256xf32>
    %c13 = arith.constant 13 : index
    %c0_73 = arith.constant 0 : index
    %c0_74 = arith.constant 0 : index
    %131 = vector.load %arg9[%c13, %c0_73, %c0_74] : memref<18x4x16xf32, #tpu.memory_space<vmem>>, vector<1x4x16xf32>
    %132 = vector.shape_cast %131 : vector<1x4x16xf32> to vector<4x16xf32>
    %cst_75 = arith.constant dense<0.000000e+00> : vector<4x256xf32>
    %133 = tpu.matmul %132, %130, %cst_75 {dimension_numbers = #tpu.dot_dimension_numbers<[1], [0], [0], [1], [0, 0, 1, 1], [], []>} : vector<4x16xf32>, vector<16x256xf32>, vector<4x256xf32> -> vector<4x256xf32>
    %134 = arith.addf %126, %133 : vector<4x256xf32>
    %135 = vector.extract_strided_slice %0 {offsets = [6, 0], sizes = [1, 256], strides = [1, 1]} : vector<8x256xf32> to vector<1x256xf32>
    %136 = vector.broadcast %135 : vector<1x256xf32> to vector<16x256xf32>
    %137 = arith.mulf %83, %136 : vector<16x256xf32>
    %c15 = arith.constant 15 : index
    %c0_76 = arith.constant 0 : index
    %c0_77 = arith.constant 0 : index
    %138 = vector.load %arg9[%c15, %c0_76, %c0_77] : memref<18x4x16xf32, #tpu.memory_space<vmem>>, vector<1x4x16xf32>
    %139 = vector.shape_cast %138 : vector<1x4x16xf32> to vector<4x16xf32>
    %cst_78 = arith.constant dense<0.000000e+00> : vector<4x256xf32>
    %140 = tpu.matmul %139, %137, %cst_78 {dimension_numbers = #tpu.dot_dimension_numbers<[1], [0], [0], [1], [0, 0, 1, 1], [], []>} : vector<4x16xf32>, vector<16x256xf32>, vector<4x256xf32> -> vector<4x256xf32>
    %141 = arith.addf %134, %140 : vector<4x256xf32>
    %c255_i32_79 = arith.constant 255 : i32
    %142 = tpu.dynamic_rotate %83 by %c255_i32_79 dim 1 : vector<16x256xf32>, i32 -> vector<16x256xf32>
    %143 = vector.extract_strided_slice %0 {offsets = [7, 0], sizes = [1, 256], strides = [1, 1]} : vector<8x256xf32> to vector<1x256xf32>
    %144 = vector.broadcast %143 : vector<1x256xf32> to vector<16x256xf32>
    %145 = arith.mulf %142, %144 : vector<16x256xf32>
    %c17 = arith.constant 17 : index
    %c0_80 = arith.constant 0 : index
    %c0_81 = arith.constant 0 : index
    %146 = vector.load %arg9[%c17, %c0_80, %c0_81] : memref<18x4x16xf32, #tpu.memory_space<vmem>>, vector<1x4x16xf32>
    %147 = vector.shape_cast %146 : vector<1x4x16xf32> to vector<4x16xf32>
    %cst_82 = arith.constant dense<0.000000e+00> : vector<4x256xf32>
    %148 = tpu.matmul %147, %145, %cst_82 {dimension_numbers = #tpu.dot_dimension_numbers<[1], [0], [0], [1], [0, 0, 1, 1], [], []>} : vector<4x16xf32>, vector<16x256xf32>, vector<4x256xf32> -> vector<4x256xf32>
    %149 = arith.addf %141, %148 : vector<4x256xf32>
    %c0_83 = arith.constant 0 : index
    %c0_84 = arith.constant 0 : index
    %150 = vector.load %arg10[%c0_83, %c0_84] : memref<4x1xf32, #tpu.memory_space<vmem>>, vector<4x1xf32>
    %151 = vector.broadcast %150 : vector<4x1xf32> to vector<4x256xf32>
    %152 = arith.addf %149, %151 : vector<4x256xf32>
    %cst_85 = arith.constant 0.000000e+00 : f32
    %153 = vector.broadcast %cst_85 : f32 to vector<4x256xf32>
    %154 = arith.maximumf %152, %153 : vector<4x256xf32>
    %c0_86 = arith.constant 0 : index
    %c0_87 = arith.constant 0 : index
    %155 = vector.load %arg11[%c0_86, %c0_87] : memref<2x4xf32, #tpu.memory_space<vmem>>, vector<2x4xf32>
    %cst_88 = arith.constant dense<0.000000e+00> : vector<2x256xf32>
    %156 = tpu.matmul %155, %154, %cst_88 {dimension_numbers = #tpu.dot_dimension_numbers<[1], [0], [0], [1], [0, 0, 1, 1], [], []>} : vector<2x4xf32>, vector<4x256xf32>, vector<2x256xf32> -> vector<2x256xf32>
    %c0_89 = arith.constant 0 : index
    %c0_90 = arith.constant 0 : index
    %157 = vector.load %arg12[%c0_89, %c0_90] : memref<2x1xf32, #tpu.memory_space<vmem>>, vector<2x1xf32>
    %158 = vector.broadcast %157 : vector<2x1xf32> to vector<2x256xf32>
    %159 = arith.addf %156, %158 : vector<2x256xf32>
    %160 = vector.extract_strided_slice %159 {offsets = [1, 0], sizes = [1, 256], strides = [1, 1]} : vector<2x256xf32> to vector<1x256xf32>
    %161 = vector.extract_strided_slice %159 {offsets = [0, 0], sizes = [1, 256], strides = [1, 1]} : vector<2x256xf32> to vector<1x256xf32>
    %162 = arith.subf %160, %161 : vector<1x256xf32>
    %163 = math.exp %162 : vector<1x256xf32>
    %cst_91 = arith.constant 1.000000e+00 : f32
    %164 = vector.broadcast %cst_91 : f32 to vector<1x256xf32>
    %165 = arith.addf %164, %163 : vector<1x256xf32>
    %cst_92 = arith.constant 1.000000e+00 : f32
    %166 = vector.broadcast %cst_92 : f32 to vector<1x256xf32>
    %167 = arith.divf %166, %165 : vector<1x256xf32>
    %cst_93 = arith.constant 1.000000e+00 : f32
    %168 = vector.broadcast %cst_93 : f32 to vector<1x256xf32>
    %169 = arith.subf %168, %167 : vector<1x256xf32>
    %c0_94 = arith.constant 0 : index
    %c0_95 = arith.constant 0 : index
    %c0_96 = arith.constant 0 : index
    %170 = vector.load %arg2[%c0_94, %c0_95, %c0_96] : memref<1x16x256xf32, #tpu.memory_space<vmem>>, vector<1x16x256xf32>
    %171 = vector.shape_cast %170 : vector<1x16x256xf32> to vector<16x256xf32>
    %172 = vector.broadcast %167 : vector<1x256xf32> to vector<16x256xf32>
    %173 = arith.mulf %171, %172 : vector<16x256xf32>
    %c0_97 = arith.constant 0 : index
    %c0_98 = arith.constant 0 : index
    %c0_99 = arith.constant 0 : index
    %174 = vector.load %arg5[%c0_97, %c0_98, %c0_99] : memref<1x16x256xf32, #tpu.memory_space<vmem>>, vector<1x16x256xf32>
    %175 = vector.shape_cast %174 : vector<1x16x256xf32> to vector<16x256xf32>
    %176 = vector.broadcast %169 : vector<1x256xf32> to vector<16x256xf32>
    %177 = arith.mulf %175, %176 : vector<16x256xf32>
    %178 = arith.addf %173, %177 : vector<16x256xf32>
    %c0_100 = arith.constant 0 : index
    %c0_101 = arith.constant 0 : index
    %179 = vector.load %arg13[%c0_100, %c0_101] : memref<16x1xf32, #tpu.memory_space<vmem>>, vector<16x1xf32>
    %180 = vector.broadcast %179 : vector<16x1xf32> to vector<16x256xf32>
    %181 = arith.mulf %178, %180 : vector<16x256xf32>
    %c0_102 = arith.constant 0 : index
    %c0_103 = arith.constant 0 : index
    %182 = vector.load %arg14[%c0_102, %c0_103] : memref<16x1xf32, #tpu.memory_space<vmem>>, vector<16x1xf32>
    %183 = vector.broadcast %182 : vector<16x1xf32> to vector<16x256xf32>
    %184 = arith.addf %181, %183 : vector<16x256xf32>
    %c0_104 = arith.constant 0 : index
    %c0_105 = arith.constant 0 : index
    %c0_106 = arith.constant 0 : index
    %185 = vector.load %arg15[%c0_104, %c0_105, %c0_106] : memref<1x16x256xf32, #tpu.memory_space<vmem>>, vector<1x16x256xf32>
    %186 = vector.shape_cast %185 : vector<1x16x256xf32> to vector<16x256xf32>
    %187 = vector.shape_cast %184 : vector<16x256xf32> to vector<1x16x256xf32>
    tpu.vector_store %arg15[%c0_104, %c0_105, %c0_106], %187 {strides = array<i32>} : memref<1x16x256xf32, #tpu.memory_space<vmem>>, vector<1x16x256xf32>,
    return
  }
  func.func @transform_0(%arg0: i32, %arg1: i32) -> (i32, i32, i32) {
    %c0_i32 = arith.constant 0 : i32
    %c0_i32_0 = arith.constant 0 : i32
    return %arg0, %c0_i32, %arg1 : i32, i32, i32
  }
  func.func @transform_1(%arg0: i32, %arg1: i32) -> (i32, i32, i32) {
    %c2_i32 = arith.constant 2 : i32
    %0 = arith.muli %arg1, %c2_i32 : i32
    %c1_i32 = arith.constant 1 : i32
    %1 = arith.subi %0, %c1_i32 : i32
    %c0_i32 = arith.constant 0 : i32
    %2 = arith.maxsi %1, %c0_i32 : i32
    %c0_i32_0 = arith.constant 0 : i32
    %c0_i32_1 = arith.constant 0 : i32
    return %arg0, %c0_i32_0, %2 : i32, i32, i32
  }
  func.func @transform_2(%arg0: i32, %arg1: i32) -> (i32, i32, i32) {
    %c1_i32 = arith.constant 1 : i32
    %0 = arith.addi %arg1, %c1_i32 : i32
    %c2_i32 = arith.constant 2 : i32
    %1 = arith.muli %0, %c2_i32 : i32
    %c1_i32_0 = arith.constant 1 : i32
    %2 = arith.minsi %1, %c1_i32_0 : i32
    %c0_i32 = arith.constant 0 : i32
    %c0_i32_1 = arith.constant 0 : i32
    return %arg0, %c0_i32, %2 : i32, i32, i32
  }
  func.func @transform_3(%arg0: i32, %arg1: i32) -> (i32, i32, i32) {
    %c0_i32 = arith.constant 0 : i32
    %c0_i32_0 = arith.constant 0 : i32
    return %arg0, %c0_i32, %arg1 : i32, i32, i32
  }
  func.func @transform_4(%arg0: i32, %arg1: i32) -> (i32, i32, i32) {
    %c2_i32 = arith.constant 2 : i32
    %0 = arith.muli %arg1, %c2_i32 : i32
    %c1_i32 = arith.constant 1 : i32
    %1 = arith.subi %0, %c1_i32 : i32
    %c0_i32 = arith.constant 0 : i32
    %2 = arith.maxsi %1, %c0_i32 : i32
    %c0_i32_0 = arith.constant 0 : i32
    %c0_i32_1 = arith.constant 0 : i32
    return %arg0, %c0_i32_0, %2 : i32, i32, i32
  }
  func.func @transform_5(%arg0: i32, %arg1: i32) -> (i32, i32, i32) {
    %c1_i32 = arith.constant 1 : i32
    %0 = arith.addi %arg1, %c1_i32 : i32
    %c2_i32 = arith.constant 2 : i32
    %1 = arith.muli %0, %c2_i32 : i32
    %c1_i32_0 = arith.constant 1 : i32
    %2 = arith.minsi %1, %c1_i32_0 : i32
    %c0_i32 = arith.constant 0 : i32
    %c0_i32_1 = arith.constant 0 : i32
    return %arg0, %c0_i32, %2 : i32, i32, i32
  }
  func.func @transform_6(%arg0: i32, %arg1: i32) -> (i32, i32) {
    %c0_i32 = arith.constant 0 : i32
    %c0_i32_0 = arith.constant 0 : i32
    return %c0_i32, %arg1 : i32, i32
  }
  func.func @transform_7(%arg0: i32, %arg1: i32) -> (i32, i32, i32) {
    %c0_i32 = arith.constant 0 : i32
    %c0_i32_0 = arith.constant 0 : i32
    %c0_i32_1 = arith.constant 0 : i32
    %c0_i32_2 = arith.constant 0 : i32
    return %c0_i32, %c0_i32_0, %c0_i32_1 : i32, i32, i32
  }
  func.func @transform_8(%arg0: i32, %arg1: i32) -> (i32, i32) {
    %c0_i32 = arith.constant 0 : i32
    %c0_i32_0 = arith.constant 0 : i32
    %c0_i32_1 = arith.constant 0 : i32
    return %c0_i32, %c0_i32_0 : i32, i32
  }
  func.func @transform_9(%arg0: i32, %arg1: i32) -> (i32, i32) {
    %c0_i32 = arith.constant 0 : i32
    %c0_i32_0 = arith.constant 0 : i32
    %c0_i32_1 = arith.constant 0 : i32
    return %c0_i32, %c0_i32_0 : i32, i32
  }
  func.func @transform_10(%arg0: i32, %arg1: i32) -> (i32, i32) {
    %c0_i32 = arith.constant 0 : i32
    %c0_i32_0 = arith.constant 0 : i32
    %c0_i32_1 = arith.constant 0 : i32
    return %c0_i32, %c0_i32_0 : i32, i32
  }
  func.func @transform_11(%arg0: i32, %arg1: i32) -> (i32, i32) {
    %c0_i32 = arith.constant 0 : i32
    %c0_i32_0 = arith.constant 0 : i32
    %c0_i32_1 = arith.constant 0 : i32
    return %c0_i32, %c0_i32_0 : i32, i32
  }
  func.func @transform_12(%arg0: i32, %arg1: i32) -> (i32, i32) {
    %c0_i32 = arith.constant 0 : i32
    %c0_i32_0 = arith.constant 0 : i32
    %c0_i32_1 = arith.constant 0 : i32
    return %c0_i32, %c0_i32_0 : i32, i32
  }
  func.func @transform_13(%arg0: i32, %arg1: i32) -> (i32, i32, i32) {
    %c0_i32 = arith.constant 0 : i32
    %c0_i32_0 = arith.constant 0 : i32
    return %arg0, %c0_i32, %arg1 : i32, i32, i32
  }
}

</mosaic_0001>

<llo_original>
// kernel: tpu_custom_call.1
$region0: #{tpu_custom_call.1}
  #allocation0 [shape = 'u32[]', space=smem, size = 0x4, offset = 0x4, fixed_abs, tag = 'smem constant byte address 0x4 - core index']
  #allocation1 [shape = 'u32[144,128]{1,0:T(1,128)}', space=vmem, size = 0x12000, scoped, tag = 'internal scratch']
  %s0 = inlined_call_operand.vmem [shape: f32[2,16,256], index: 0, kind: input, shape index: {}]
  %s1 = inlined_call_operand.vmem [shape: f32[2,16,256], index: 1, kind: input, shape index: {}]
  %s2 = inlined_call_operand.hbm [shape: f32[2,16,256], index: 2, kind: input, shape index: {}]
  %s3 = inlined_call_operand.hbm [shape: f32[2,16,256], index: 3, kind: input, shape index: {}]
  %s4 = inlined_call_operand.vmem [shape: f32[2,16,256], index: 4, kind: input, shape index: {}]
  %s5 = inlined_call_operand.hbm [shape: f32[2,16,256], index: 5, kind: input, shape index: {}]
  %s6 = inlined_call_operand.hbm [shape: f32[8,256], index: 6, kind: input, shape index: {}]
  %s7 = inlined_call_operand.vmem [shape: f32[18,4,16], index: 7, kind: input, shape index: {}]
  %s8 = inlined_call_operand.vmem [shape: f32[4,1], index: 8, kind: input, shape index: {}]
  %s9 = inlined_call_operand.vmem [shape: f32[2,4], index: 9, kind: input, shape index: {}]
  %s10 = inlined_call_operand.vmem [shape: f32[2,1], index: 10, kind: input, shape index: {}]
  %s11 = inlined_call_operand.vmem [shape: f32[16,1], index: 11, kind: input, shape index: {}]
  %s12 = inlined_call_operand.vmem [shape: f32[16,1], index: 12, kind: input, shape index: {}]
  %s13 = inlined_call_operand.hbm [shape: f32[2,16,256], index: 13, kind: output, shape index: {}]
  %s14 = sld [smem:[#allocation0]]
  $region177: #{tpu_custom_call.1} parent=0
    _
  %s16 = ssub.s32 1, %s14
  %s17 = scalar_select 0, %s16, %s14
  $region1: #{tpu_custom_call.1} parent=0
    #allocation2 [shape = 'u8[16384]{0}', space=vmem, size = 0x4000, scoped, tag = 'input window, operand 1']
    #allocation3 [shape = 'u8[16384]{0}', space=vmem, size = 0x4000, scoped, tag = 'input window, operand 2']
    #allocation4 [shape = 's32[2]{0}', space=sflag, size = 0x8, scoped, tag = 'scoped memory for tpu_custom_call.1']
    #allocation5 [shape = 's32[2]{0}', space=sflag, size = 0x8, scoped, tag = 'scoped memory for tpu_custom_call.1']
    #allocation6 [shape = 'u8[32768]{0}', space=vmem, size = 0x8000, scoped, tag = 'input window, operand 3']
    #allocation7 [shape = 's32[2]{0}', space=sflag, size = 0x8, scoped, tag = 'scoped memory for tpu_custom_call.1']
    #allocation8 [shape = 'u8[16384]{0}', space=vmem, size = 0x4000, scoped, tag = 'input window, operand 4']
    #allocation9 [shape = 'u8[16384]{0}', space=vmem, size = 0x4000, scoped, tag = 'input window, operand 5']
    #allocation10 [shape = 'u8[8192]{0}', space=vmem, size = 0x2000, scoped, tag = 'input window, operand 6, single buffered']
    #allocation11 [shape = 's32[1]{0}', space=sflag, size = 0x4, scoped, tag = 'scoped memory for tpu_custom_call.1']
    #allocation12 [shape = 'u8[32768]{0}', space=vmem, size = 0x8000, scoped, tag = 'output window, operand 0']
    %18 = vsyncpa [#allocation4], 0
    %s19 = scalar_lea.sflag [#allocation4], 1
    %20 = vsyncpa %s19, 0
    %21 = vsyncpa [#allocation7], 0
    %s22 = scalar_lea.sflag [#allocation7], 1
    %23 = vsyncpa %s22, 0
    %24 = vsyncpa [#allocation11], 0
    %25 = vsyncpa [#allocation5], 0
    %s26 = scalar_lea.sflag [#allocation5], 1
    %27 = vsyncpa %s26, 0
    loop: start=0, step=1, limit=4
    $region2: #{tpu_custom_call.1} parent=1 // loop_pre_header
      _
    $region3: #{tpu_custom_call.1} parent=1 // loop_header
      %s29 = sphi 0, %s33
      %p30 = scmp.ge.s32.totalorder %s29, 4
      %s36 = sphi 0, %s48
      %s37 = sphi 0, %s44
      %s38 = sphi 0, %s36
      %s39 = sphi 0, %s37
      %s40 = sphi 0, %s38
      %s41 = sphi 0, %s39
      %s53 = sphi 0, %s55
      %s56 = sphi 0, %s53
      %s57 = sphi 0, %s56
      %s73 = sphi 0, %s57
      %s89 = sphi 0, %s91
      %s92 = sphi 0, %s89
      %s93 = sphi 0, %s92
      %s109 = sphi 0, %s93
      %s125 = sphi 0, %s127
      %s128 = sphi 0, %s125
      %s129 = sphi 0, %s128
      %s145 = sphi 0, %s129
      %s153 = sphi 0, %s155
      %s156 = sphi 0, %s153
      %s157 = sphi 0, %s156
      %s173 = sphi 0, %s157
      %s189 = sphi 0, %s191
      %s192 = sphi 0, %s189
      %s193 = sphi 0, %s192
      %s209 = sphi 0, %s193
      %s225 = sphi 0, %s227
      %s228 = sphi 0, %s225
      %s229 = sphi 0, %s228
      %s245 = sphi 0, %s229
      %s251 = sphi 0, %s253
      %s254 = sphi 0, %s251
      %s255 = sphi 0, %s254
      %s271 = sphi 0, %s255
      %s275 = sphi 0, %s275
      %s277 = sphi 0, %s275
      %s278 = sphi 0, %s277
      %s292 = sphi 0, %s278
      %s296 = sphi 0, %s296
      %s298 = sphi 0, %s296
      %s299 = sphi 0, %s298
      %s313 = sphi 0, %s299
      %s317 = sphi 0, %s317
      %s319 = sphi 0, %s317
      %s320 = sphi 0, %s319
      %s334 = sphi 0, %s320
      %s338 = sphi 0, %s338
      %s340 = sphi 0, %s338
      %s341 = sphi 0, %s340
      %s355 = sphi 0, %s341
      %s359 = sphi 0, %s359
      %s361 = sphi 0, %s359
      %s362 = sphi 0, %s361
      %s376 = sphi 0, %s362
      %s380 = sphi 0, %s380
      %s382 = sphi 0, %s380
      %s383 = sphi 0, %s382
      %s397 = sphi 0, %s383
      %s405 = sphi 0, %s407
      %s408 = sphi 0, %s405
      %s409 = sphi 0, %s408
      %s425 = sphi 0, %s409
    $region4: #{tpu_custom_call.1} parent=1 // loop_header_branch
      %32 = sbr.rel (%p30) target = $region8
    $region5: #{tpu_custom_call.1} parent=1 // loop_body
      %s34 = ssub.s32 %s29, 1
      %s35 = ssub.s32 %s29, 2
      %s42 = sadd.s32 1, %s37
      %p43 = scmp.ge.s32.totalorder %s42, 1
      %s44 = scalar_select %p43, 0, %s42
      %s45 = sadd.s32 1, %s36
      %s46 = scalar_select %p43, %s45, %s36
      %p47 = scmp.ge.s32.totalorder %s46, 2
      %s48 = scalar_select %p47, 0, %s46
      %s49 = ssub.s32 %s36, %s48
      %s50 = ssub.s32 %s37, %s44
      %s51 = sor.u32 %s49, %s50
      %p52 = scmp.eq.s32.totalorder %s51, 0
      %s54 = sadd.s32 %s53, 1
      %s55 = scalar_select %p52, %s53, %s54
      %p58 = pneg %p52
      %p59 = scmp.eq.s32.totalorder %s29, 1
      %p60 = por %p58, %p59
      %p61 = scmp.ne.s32.totalorder %s53, %s56
      %p62 = scmp.eq.s32.totalorder %s29, 0
      %p63 = por %p61, %p62
      %p64 = scmp.ne.s32.totalorder %s53, %s56
      %p65 = scmp.eq.s32.totalorder %s34, 1
      %p66 = por %p64, %p65
      %p67 = scmp.ne.s32.totalorder %s56, %s57
      %p68 = scmp.eq.s32.totalorder %s34, 0
      %p69 = por %p67, %p68
      %p70 = scmp.ne.s32.totalorder %s56, %s57
      %p71 = scmp.eq.s32.totalorder %s35, 1
      %p72 = por %p70, %p71
      %p74 = scmp.ne.s32.totalorder %s57, %s73
      %p75 = scmp.eq.s32.totalorder %s35, 0
      %p76 = por %p74, %p75
      %s77 = smul.u32 %s37, 2
      %s78 = ssub.s32 %s77, 1
      %p79 = scmp.gt.s32.totalorder %s78, 0
      %s80 = scalar_select %p79, %s78, 0
      %s81 = smul.u32 %s44, 2
      %s82 = ssub.s32 %s81, 1
      %p83 = scmp.gt.s32.totalorder %s82, 0
      %s84 = scalar_select %p83, %s82, 0
      %s85 = ssub.s32 %s36, %s48
      %s86 = ssub.s32 %s80, %s84
      %s87 = sor.u32 %s85, %s86
      %p88 = scmp.eq.s32.totalorder %s87, 0
      %s90 = sadd.s32 %s89, 1
      %s91 = scalar_select %p88, %s89, %s90
      %p94 = pneg %p88
      %p95 = scmp.eq.s32.totalorder %s29, 1
      %p96 = por %p94, %p95
      %p97 = scmp.ne.s32.totalorder %s89, %s92
      %p98 = scmp.eq.s32.totalorder %s29, 0
      %p99 = por %p97, %p98
      %p100 = scmp.ne.s32.totalorder %s89, %s92
      %p101 = scmp.eq.s32.totalorder %s34, 1
      %p102 = por %p100, %p101
      %p103 = scmp.ne.s32.totalorder %s92, %s93
      %p104 = scmp.eq.s32.totalorder %s34, 0
      %p105 = por %p103, %p104
      %p106 = scmp.ne.s32.totalorder %s92, %s93
      %p107 = scmp.eq.s32.totalorder %s35, 1
      %p108 = por %p106, %p107
      %p110 = scmp.ne.s32.totalorder %s93, %s109
      %p111 = scmp.eq.s32.totalorder %s35, 0
      %p112 = por %p110, %p111
      %s113 = sadd.s32 %s37, 1
      %s114 = smul.u32 %s113, 2
      %p115 = scmp.lt.s32.totalorder %s114, 1
      %s116 = scalar_select %p115, %s114, 1
      %s117 = sadd.s32 %s44, 1
      %s118 = smul.u32 %s117, 2
      %p119 = scmp.lt.s32.totalorder %s118, 1
      %s120 = scalar_select %p119, %s118, 1
      %s121 = ssub.s32 %s36, %s48
      %s122 = ssub.s32 %s116, %s120
      %s123 = sor.u32 %s121, %s122
      %p124 = scmp.eq.s32.totalorder %s123, 0
      %s126 = sadd.s32 %s125, 1
      %s127 = scalar_select %p124, %s125, %s126
      %p130 = pneg %p124
      %p131 = scmp.eq.s32.totalorder %s29, 1
      %p132 = por %p130, %p131
      %p133 = scmp.ne.s32.totalorder %s125, %s128
      %p134 = scmp.eq.s32.totalorder %s29, 0
      %p135 = por %p133, %p134
      %p136 = scmp.ne.s32.totalorder %s125, %s128
      %p137 = scmp.eq.s32.totalorder %s34, 1
      %p138 = por %p136, %p137
      %p139 = scmp.ne.s32.totalorder %s128, %s129
      %p140 = scmp.eq.s32.totalorder %s34, 0
      %p141 = por %p139, %p140
      %p142 = scmp.ne.s32.totalorder %s128, %s129
      %p143 = scmp.eq.s32.totalorder %s35, 1
      %p144 = por %p142, %p143
      %p146 = scmp.ne.s32.totalorder %s129, %s145
      %p147 = scmp.eq.s32.totalorder %s35, 0
      %p148 = por %p146, %p147
      %s149 = ssub.s32 %s36, %s48
      %s150 = ssub.s32 %s37, %s44
      %s151 = sor.u32 %s149, %s150
      %p152 = scmp.eq.s32.totalorder %s151, 0
      %s154 = sadd.s32 %s153, 1
      %s155 = scalar_select %p152, %s153, %s154
      %p158 = pneg %p152
      %p159 = scmp.eq.s32.totalorder %s29, 1
      %p160 = por %p158, %p159
      %p161 = scmp.ne.s32.totalorder %s153, %s156
      %p162 = scmp.eq.s32.totalorder %s29, 0
      %p163 = por %p161, %p162
      %p164 = scmp.ne.s32.totalorder %s153, %s156
      %p165 = scmp.eq.s32.totalorder %s34, 1
      %p166 = por %p164, %p165
      %p167 = scmp.ne.s32.totalorder %s156, %s157
      %p168 = scmp.eq.s32.totalorder %s34, 0
      %p169 = por %p167, %p168
      %p170 = scmp.ne.s32.totalorder %s156, %s157
      %p171 = scmp.eq.s32.totalorder %s35, 1
      %p172 = por %p170, %p171
      %p174 = scmp.ne.s32.totalorder %s157, %s173
      %p175 = scmp.eq.s32.totalorder %s35, 0
      %p176 = por %p174, %p175
      %s177 = smul.u32 %s37, 2
      %s178 = ssub.s32 %s177, 1
      %p179 = scmp.gt.s32.totalorder %s178, 0
      %s180 = scalar_select %p179, %s178, 0
      %s181 = smul.u32 %s44, 2
      %s182 = ssub.s32 %s181, 1
      %p183 = scmp.gt.s32.totalorder %s182, 0
      %s184 = scalar_select %p183, %s182, 0
      %s185 = ssub.s32 %s36, %s48
      %s186 = ssub.s32 %s180, %s184
      %s187 = sor.u32 %s185, %s186
      %p188 = scmp.eq.s32.totalorder %s187, 0
      %s190 = sadd.s32 %s189, 1
      %s191 = scalar_select %p188, %s189, %s190
      %p194 = pneg %p188
      %p195 = scmp.eq.s32.totalorder %s29, 1
      %p196 = por %p194, %p195
      %p197 = scmp.ne.s32.totalorder %s189, %s192
      %p198 = scmp.eq.s32.totalorder %s29, 0
      %p199 = por %p197, %p198
      %p200 = scmp.ne.s32.totalorder %s189, %s192
      %p201 = scmp.eq.s32.totalorder %s34, 1
      %p202 = por %p200, %p201
      %p203 = scmp.ne.s32.totalorder %s192, %s193
      %p204 = scmp.eq.s32.totalorder %s34, 0
      %p205 = por %p203, %p204
      %p206 = scmp.ne.s32.totalorder %s192, %s193
      %p207 = scmp.eq.s32.totalorder %s35, 1
      %p208 = por %p206, %p207
      %p210 = scmp.ne.s32.totalorder %s193, %s209
      %p211 = scmp.eq.s32.totalorder %s35, 0
      %p212 = por %p210, %p211
      %s213 = sadd.s32 %s37, 1
      %s214 = smul.u32 %s213, 2
      %p215 = scmp.lt.s32.totalorder %s214, 1
      %s216 = scalar_select %p215, %s214, 1
      %s217 = sadd.s32 %s44, 1
      %s218 = smul.u32 %s217, 2
      %p219 = scmp.lt.s32.totalorder %s218, 1
      %s220 = scalar_select %p219, %s218, 1
      %s221 = ssub.s32 %s36, %s48
      %s222 = ssub.s32 %s216, %s220
      %s223 = sor.u32 %s221, %s222
      %p224 = scmp.eq.s32.totalorder %s223, 0
      %s226 = sadd.s32 %s225, 1
      %s227 = scalar_select %p224, %s225, %s226
      %p230 = pneg %p224
      %p231 = scmp.eq.s32.totalorder %s29, 1
      %p232 = por %p230, %p231
      %p233 = scmp.ne.s32.totalorder %s225, %s228
      %p234 = scmp.eq.s32.totalorder %s29, 0
      %p235 = por %p233, %p234
      %p236 = scmp.ne.s32.totalorder %s225, %s228
      %p237 = scmp.eq.s32.totalorder %s34, 1
      %p238 = por %p236, %p237
      %p239 = scmp.ne.s32.totalorder %s228, %s229
      %p240 = scmp.eq.s32.totalorder %s34, 0
      %p241 = por %p239, %p240
      %p242 = scmp.ne.s32.totalorder %s228, %s229
      %p243 = scmp.eq.s32.totalorder %s35, 1
      %p244 = por %p242, %p243
      %p246 = scmp.ne.s32.totalorder %s229, %s245
      %p247 = scmp.eq.s32.totalorder %s35, 0
      %p248 = por %p246, %p247
      %s249 = ssub.s32 %s37, %s44
      %p250 = scmp.eq.s32.totalorder %s249, 0
      %s252 = sadd.s32 %s251, 1
      %s253 = scalar_select %p250, %s251, %s252
      %p256 = pneg %p250
      %p257 = scmp.eq.s32.totalorder %s29, 1
      %p258 = por %p256, %p257
      %p259 = scmp.ne.s32.totalorder %s251, %s254
      %p260 = scmp.eq.s32.totalorder %s29, 0
      %p261 = por %p259, %p260
      %p262 = scmp.ne.s32.totalorder %s251, %s254
      %p263 = scmp.eq.s32.totalorder %s34, 1
      %p264 = por %p262, %p263
      %p265 = scmp.ne.s32.totalorder %s254, %s255
      %p266 = scmp.eq.s32.totalorder %s34, 0
      %p267 = por %p265, %p266
      %p268 = scmp.ne.s32.totalorder %s254, %s255
      %p269 = scmp.eq.s32.totalorder %s35, 1
      %p270 = por %p268, %p269
      %p272 = scmp.ne.s32.totalorder %s255, %s271
      %p273 = scmp.eq.s32.totalorder %s35, 0
      %p274 = por %p272, %p273
      %s276 = sadd.s32 %s275, 1
      %p279 = scmp.eq.s32.totalorder %s29, 1
      %p280 = scmp.ne.s32.totalorder %s275, %s277
      %p281 = scmp.eq.s32.totalorder %s29, 0
      %p282 = por %p280, %p281
      %p283 = scmp.ne.s32.totalorder %s275, %s277
      %p284 = scmp.eq.s32.totalorder %s34, 1
      %p285 = por %p283, %p284
      %p286 = scmp.ne.s32.totalorder %s277, %s278
      %p287 = scmp.eq.s32.totalorder %s34, 0
      %p288 = por %p286, %p287
      %p289 = scmp.ne.s32.totalorder %s277, %s278
      %p290 = scmp.eq.s32.totalorder %s35, 1
      %p291 = por %p289, %p290
      %p293 = scmp.ne.s32.totalorder %s278, %s292
      %p294 = scmp.eq.s32.totalorder %s35, 0
      %p295 = por %p293, %p294
      %s297 = sadd.s32 %s296, 1
      %p300 = scmp.eq.s32.totalorder %s29, 1
      %p301 = scmp.ne.s32.totalorder %s296, %s298
      %p302 = scmp.eq.s32.totalorder %s29, 0
      %p303 = por %p301, %p302
      %p304 = scmp.ne.s32.totalorder %s296, %s298
      %p305 = scmp.eq.s32.totalorder %s34, 1
      %p306 = por %p304, %p305
      %p307 = scmp.ne.s32.totalorder %s298, %s299
      %p308 = scmp.eq.s32.totalorder %s34, 0
      %p309 = por %p307, %p308
      %p310 = scmp.ne.s32.totalorder %s298, %s299
      %p311 = scmp.eq.s32.totalorder %s35, 1
      %p312 = por %p310, %p311
      %p314 = scmp.ne.s32.totalorder %s299, %s313
      %p315 = scmp.eq.s32.totalorder %s35, 0
      %p316 = por %p314, %p315
      %s318 = sadd.s32 %s317, 1
      %p321 = scmp.eq.s32.totalorder %s29, 1
      %p322 = scmp.ne.s32.totalorder %s317, %s319
      %p323 = scmp.eq.s32.totalorder %s29, 0
      %p324 = por %p322, %p323
      %p325 = scmp.ne.s32.totalorder %s317, %s319
      %p326 = scmp.eq.s32.totalorder %s34, 1
      %p327 = por %p325, %p326
      %p328 = scmp.ne.s32.totalorder %s319, %s320
      %p329 = scmp.eq.s32.totalorder %s34, 0
      %p330 = por %p328, %p329
      %p331 = scmp.ne.s32.totalorder %s319, %s320
      %p332 = scmp.eq.s32.totalorder %s35, 1
      %p333 = por %p331, %p332
      %p335 = scmp.ne.s32.totalorder %s320, %s334
      %p336 = scmp.eq.s32.totalorder %s35, 0
      %p337 = por %p335, %p336
      %s339 = sadd.s32 %s338, 1
      %p342 = scmp.eq.s32.totalorder %s29, 1
      %p343 = scmp.ne.s32.totalorder %s338, %s340
      %p344 = scmp.eq.s32.totalorder %s29, 0
      %p345 = por %p343, %p344
      %p346 = scmp.ne.s32.totalorder %s338, %s340
      %p347 = scmp.eq.s32.totalorder %s34, 1
      %p348 = por %p346, %p347
      %p349 = scmp.ne.s32.totalorder %s340, %s341
      %p350 = scmp.eq.s32.totalorder %s34, 0
      %p351 = por %p349, %p350
      %p352 = scmp.ne.s32.totalorder %s340, %s341
      %p353 = scmp.eq.s32.totalorder %s35, 1
      %p354 = por %p352, %p353
      %p356 = scmp.ne.s32.totalorder %s341, %s355
      %p357 = scmp.eq.s32.totalorder %s35, 0
      %p358 = por %p356, %p357
      %s360 = sadd.s32 %s359, 1
      %p363 = scmp.eq.s32.totalorder %s29, 1
      %p364 = scmp.ne.s32.totalorder %s359, %s361
      %p365 = scmp.eq.s32.totalorder %s29, 0
      %p366 = por %p364, %p365
      %p367 = scmp.ne.s32.totalorder %s359, %s361
      %p368 = scmp.eq.s32.totalorder %s34, 1
      %p369 = por %p367, %p368
      %p370 = scmp.ne.s32.totalorder %s361, %s362
      %p371 = scmp.eq.s32.totalorder %s34, 0
      %p372 = por %p370, %p371
      %p373 = scmp.ne.s32.totalorder %s361, %s362
      %p374 = scmp.eq.s32.totalorder %s35, 1
      %p375 = por %p373, %p374
      %p377 = scmp.ne.s32.totalorder %s362, %s376
      %p378 = scmp.eq.s32.totalorder %s35, 0
      %p379 = por %p377, %p378
      %s381 = sadd.s32 %s380, 1
      %p384 = scmp.eq.s32.totalorder %s29, 1
      %p385 = scmp.ne.s32.totalorder %s380, %s382
      %p386 = scmp.eq.s32.totalorder %s29, 0
      %p387 = por %p385, %p386
      %p388 = scmp.ne.s32.totalorder %s380, %s382
      %p389 = scmp.eq.s32.totalorder %s34, 1
      %p390 = por %p388, %p389
      %p391 = scmp.ne.s32.totalorder %s382, %s383
      %p392 = scmp.eq.s32.totalorder %s34, 0
      %p393 = por %p391, %p392
      %p394 = scmp.ne.s32.totalorder %s382, %s383
      %p395 = scmp.eq.s32.totalorder %s35, 1
      %p396 = por %p394, %p395
      %p398 = scmp.ne.s32.totalorder %s383, %s397
      %p399 = scmp.eq.s32.totalorder %s35, 0
      %p400 = por %p398, %p399
      %s401 = ssub.s32 %s36, %s48
      %s402 = ssub.s32 %s37, %s44
      %s403 = sor.u32 %s401, %s402
      %p404 = scmp.eq.s32.totalorder %s403, 0
      %s406 = sadd.s32 %s405, 1
      %s407 = scalar_select %p404, %s405, %s406
      %p410 = pneg %p404
      %p411 = scmp.eq.s32.totalorder %s29, 1
      %p412 = por %p410, %p411
      %p413 = scmp.ne.s32.totalorder %s405, %s408
      %p414 = scmp.eq.s32.totalorder %s29, 0
      %p415 = por %p413, %p414
      %p416 = scmp.ne.s32.totalorder %s405, %s408
      %p417 = scmp.eq.s32.totalorder %s34, 1
      %p418 = por %p416, %p417
      %p419 = scmp.ne.s32.totalorder %s408, %s409
      %p420 = scmp.eq.s32.totalorder %s34, 0
      %p421 = por %p419, %p420
      %p422 = scmp.ne.s32.totalorder %s408, %s409
      %p423 = scmp.eq.s32.totalorder %s35, 1
      %p424 = por %p422, %p423
      %p426 = scmp.ne.s32.totalorder %s409, %s425
      %p427 = scmp.eq.s32.totalorder %s35, 0
      %p428 = por %p426, %p427
      %p429 = scmp.le.s32.totalorder 1, %s29
      %p430 = scmp.lt.s32.totalorder %s29, 3
      %p431 = pnand %p429, %p430
      %p432 = pneg %p431
      // Predicated region
      $region9: #{tpu_custom_call.1} parent=5 // pred_check
        _
      $region10: #{tpu_custom_call.1} parent=5 // pred_check_branch
        %434 = sbr.rel (%p431) target = $region12
      $region11: #{tpu_custom_call.1} parent=5 // pred_region
        %s435 = ssub.s32 %s29, 1
        // Predicated region
        $region13: #{tpu_custom_call.1} parent=11 // pred_check
          %p436 = pneg %p267
        $region14: #{tpu_custom_call.1} parent=11 // pred_check_branch
          %438 = sbr.rel (%p436) target = $region16
        $region15: #{tpu_custom_call.1} parent=11 // pred_region
          %s439 = smul.u32 2, %s39
          %s441 = ssub.s32 256, 256
          %442 = vsyncadd [#allocation11], %s441
          %s443 = smul.addr %s439, 128
          %s444 = scalar_lea.hbm %s6, %s443
          %s446 = sshll.u32 [#allocation10], 4
          %s447 = int_to_ptr.vmem [resolvable:$true] %s446
          %449 = dma.hbm_to_vmem [thread:$0]  %s444, 256, %s447, [#allocation11]
        $region16: #{tpu_custom_call.1} parent=11 // pred_fallthru
          _
        // Predicated region
        $region17: #{tpu_custom_call.1} parent=11 // pred_check
          %p450 = pneg %p288
        $region18: #{tpu_custom_call.1} parent=11 // pred_check_branch
          %452 = sbr.rel (%p450) target = $region20
        $region19: #{tpu_custom_call.1} parent=11 // pred_region
          _
        $region20: #{tpu_custom_call.1} parent=11 // pred_fallthru
          _
        // Predicated region
        $region21: #{tpu_custom_call.1} parent=11 // pred_check
          %p453 = pneg %p309
        $region22: #{tpu_custom_call.1} parent=11 // pred_check_branch
          %455 = sbr.rel (%p453) target = $region24
        $region23: #{tpu_custom_call.1} parent=11 // pred_region
          _
        $region24: #{tpu_custom_call.1} parent=11 // pred_fallthru
          _
        // Predicated region
        $region25: #{tpu_custom_call.1} parent=11 // pred_check
          %p456 = pneg %p330
        $region26: #{tpu_custom_call.1} parent=11 // pred_check_branch
          %458 = sbr.rel (%p456) target = $region28
        $region27: #{tpu_custom_call.1} parent=11 // pred_region
          _
        $region28: #{tpu_custom_call.1} parent=11 // pred_fallthru
          _
        // Predicated region
        $region29: #{tpu_custom_call.1} parent=11 // pred_check
          %p459 = pneg %p351
        $region30: #{tpu_custom_call.1} parent=11 // pred_check_branch
          %461 = sbr.rel (%p459) target = $region32
        $region31: #{tpu_custom_call.1} parent=11 // pred_region
          _
        $region32: #{tpu_custom_call.1} parent=11 // pred_fallthru
          _
        // Predicated region
        $region33: #{tpu_custom_call.1} parent=11 // pred_check
          %p462 = pneg %p372
        $region34: #{tpu_custom_call.1} parent=11 // pred_check_branch
          %464 = sbr.rel (%p462) target = $region36
        $region35: #{tpu_custom_call.1} parent=11 // pred_region
          _
        $region36: #{tpu_custom_call.1} parent=11 // pred_fallthru
          _
        // Predicated region
        $region37: #{tpu_custom_call.1} parent=11 // pred_check
          %p465 = pneg %p393
        $region38: #{tpu_custom_call.1} parent=11 // pred_check_branch
          %467 = sbr.rel (%p465) target = $region40
        $region39: #{tpu_custom_call.1} parent=11 // pred_region
          _
        $region40: #{tpu_custom_call.1} parent=11 // pred_fallthru
          _
      $region12: #{tpu_custom_call.1} parent=5 // pred_fallthru
        _
      %p468 = scmp.lt.s32.totalorder %s29, 2
      // Predicated region
      $region41: #{tpu_custom_call.1} parent=5 // pred_check
        %p469 = pneg %p468
      $region42: #{tpu_custom_call.1} parent=5 // pred_check_branch
        %471 = sbr.rel (%p469) target = $region44
      $region43: #{tpu_custom_call.1} parent=5 // pred_region
        // Predicated region
        $region45: #{tpu_custom_call.1} parent=43 // pred_check
          %p472 = pneg %p63
        $region46: #{tpu_custom_call.1} parent=43 // pred_check_branch
          %474 = sbr.rel (%p472) target = $region48
        $region47: #{tpu_custom_call.1} parent=43 // pred_region
          %s475 = smul.u32 2, %s37
          %p476 = scmp.lt.s32.totalorder %s36, 1
          %s477 = scalar_select %p476, %s36, 1
          %p478 = scmp.lt.s32.totalorder %s475, 1
          %s479 = scalar_select %p478, %s475, 1
          %s480 = smul.addr %s477, 4
          %s481 = sadd.s32 %s479, %s480
          %s482 = smul.addr %s481, 8
          %s483 = scalar_lea.vmem %s0, %s482
          %s484 = smul.u32 2, %s37
        $region48: #{tpu_custom_call.1} parent=43 // pred_fallthru
          _
        // Predicated region
        $region49: #{tpu_custom_call.1} parent=43 // pred_check
          %p485 = pneg %p99
        $region50: #{tpu_custom_call.1} parent=43 // pred_check_branch
          %487 = sbr.rel (%p485) target = $region52
        $region51: #{tpu_custom_call.1} parent=43 // pred_region
          %s488 = sand.u32 %s89, 1
          %s489 = sand.u32 %s89, 1
          %s490 = smul.addr %s489, 16
          %s491 = scalar_lea.vmem [#allocation2], %s490
          %s492 = smul.u32 %s37, 2
          %s493 = ssub.s32 %s492, 1
          %p494 = scmp.gt.s32.totalorder %s493, 0
          %s495 = scalar_select %p494, %s493, 0
          %s496 = smul.addr %s36, 4
          %s497 = sadd.s32 %s495, %s496
          %s498 = smul.addr %s497, 8
          %s499 = scalar_lea.vmem %s1, %s498
          // Predicated region
          $region53: #{tpu_custom_call.1} parent=51 // pred_check
            _
          $region54: #{tpu_custom_call.1} parent=51 // pred_check_branch
            %501 = sbr.rel (0) target = $region56
          $region55: #{tpu_custom_call.1} parent=51 // pred_region
            // Predicated region
            $region57: #{tpu_custom_call.1} parent=55 // pred_check
              _
            $region58: #{tpu_custom_call.1} parent=55 // pred_check_branch
              %503 = sbr.rel (0) target = $region60
            $region59: #{tpu_custom_call.1} parent=55 // pred_region
              // Predicated region
              $region72: #{tpu_custom_call.1} parent=59 // pred_check
                _
              $region73: #{tpu_custom_call.1} parent=59 // pred_check_branch
                %520 = sbr.rel (0) target = $region75
              $region74: #{tpu_custom_call.1} parent=59 // pred_region
                loop: start=0, step=1, limit=1
                $region76: #{tpu_custom_call.1} parent=74 // loop_pre_header
                  _
                $region77: #{tpu_custom_call.1} parent=74 // loop_header
                  %s522 = sphi 0, %s526
                  %p523 = scmp.ge.s32.totalorder %s522, 1
                  %s527 = sphi %s499, %s499
                  %s528 = sphi %s491, %s491
                $region78: #{tpu_custom_call.1} parent=74 // loop_header_branch
                  %525 = sbr.rel (%p523) target = $region82
                $region79: #{tpu_custom_call.1} parent=74 // loop_body
                  %v529 = vld [vmem:[%s527] sm:$0xff]
                  %530 = vst [vmem:[%s528] sm:$0xff] %v529
                  %v531 = vld [vmem:[%s527 + $0x10] sm:$0xff]
                  %532 = vst [vmem:[%s528 + $0x8] sm:$0xff] %v531
                $region80: #{tpu_custom_call.1} parent=74 // loop_footer
                  %s526 = sadd.s32 1, %s522
                $region81: #{tpu_custom_call.1} parent=74 // loop_footer_branch
                  %521 = sbr.rel target = $region77
                $region82: #{tpu_custom_call.1} parent=74 // loop_exit
                  _
              $region75: #{tpu_custom_call.1} parent=59 // pred_fallthru
                _
              // Predicated region
              $region83: #{tpu_custom_call.1} parent=59 // pred_check
                _
              $region84: #{tpu_custom_call.1} parent=59 // pred_check_branch
                %534 = sbr.rel target = $region86
              $region85: #{tpu_custom_call.1} parent=59 // pred_region
                _
              $region86: #{tpu_custom_call.1} parent=59 // pred_fallthru
                _
            $region60: #{tpu_custom_call.1} parent=55 // pred_fallthru
              _
            // Predicated region
            $region61: #{tpu_custom_call.1} parent=55 // pred_check
              _
            $region62: #{tpu_custom_call.1} parent=55 // pred_check_branch
              %505 = sbr.rel target = $region64
            $region63: #{tpu_custom_call.1} parent=55 // pred_region
              loop: start=0, step=1, limit=1
              $region65: #{tpu_custom_call.1} parent=63 // loop_pre_header
                _
              $region66: #{tpu_custom_call.1} parent=63 // loop_header
                %s508 = sphi 0, %s512
                %p509 = scmp.ge.s32.totalorder %s508, 1
                %s513 = sphi %s499, %s499
                %s514 = sphi %s491, %s491
              $region67: #{tpu_custom_call.1} parent=63 // loop_header_branch
                %511 = sbr.rel (%p509) target = $region71
              $region68: #{tpu_custom_call.1} parent=63 // loop_body
                %v515 = vld [vmem:[%s513] sm:$0xff]
                %516 = vst [vmem:[%s514] sm:$0xff] %v515
                %v517 = vld [vmem:[%s513 + $0x10] sm:$0xff]
                %518 = vst [vmem:[%s514 + $0x8] sm:$0xff] %v517
              $region69: #{tpu_custom_call.1} parent=63 // loop_footer
                %s512 = sadd.s32 1, %s508
              $region70: #{tpu_custom_call.1} parent=63 // loop_footer_branch
                %507 = sbr.rel target = $region66
              $region71: #{tpu_custom_call.1} parent=63 // loop_exit
                _
            $region64: #{tpu_custom_call.1} parent=55 // pred_fallthru
              _
          $region56: #{tpu_custom_call.1} parent=51 // pred_fallthru
            _
          %535 = vnop
        $region52: #{tpu_custom_call.1} parent=43 // pred_fallthru
          _
        // Predicated region
        $region87: #{tpu_custom_call.1} parent=43 // pred_check
          %p536 = pneg %p135
        $region88: #{tpu_custom_call.1} parent=43 // pred_check_branch
          %538 = sbr.rel (%p536) target = $region90
        $region89: #{tpu_custom_call.1} parent=43 // pred_region
          %s539 = sand.u32 %s125, 1
          %s540 = scalar_lea.sflag [#allocation4], %s539
          %s541 = sand.u32 %s125, 1
          %s542 = smul.addr %s541, 16
          %s543 = scalar_lea.vmem [#allocation3], %s542
          %s544 = sadd.s32 %s37, 1
          %s545 = smul.u32 %s544, 2
          %p546 = scmp.lt.s32.totalorder %s545, 1
          %s547 = scalar_select %p546, %s545, 1
          %s549 = ssub.s32 256, 256
          %550 = vsyncadd %s540, %s549
          %s551 = smul.addr %s36, 4
          %s552 = sadd.s32 %s547, %s551
          %s553 = smul.addr %s552, 128
          %s554 = scalar_lea.hbm %s2, %s553
          %s555 = sshll.u32 %s543, 4
          %s556 = int_to_ptr.vmem [resolvable:$true] %s555
          %561 = dma.hbm_to_vmem [thread:$0]  %s554, 256, %s556, %s540, 256, 128, 8
        $region90: #{tpu_custom_call.1} parent=43 // pred_fallthru
          _
        // Predicated region
        $region91: #{tpu_custom_call.1} parent=43 // pred_check
          %p562 = pneg %p163
        $region92: #{tpu_custom_call.1} parent=43 // pred_check_branch
          %564 = sbr.rel (%p562) target = $region94
        $region93: #{tpu_custom_call.1} parent=43 // pred_region
          %s565 = sand.u32 %s29, 1
          %s566 = scalar_lea.sflag [#allocation7], %s565
          %s567 = sand.u32 %s153, 1
          %s568 = smul.addr %s567, 32
          %s569 = scalar_lea.vmem [#allocation6], %s568
          %s570 = smul.u32 2, %s37
          %s572 = ssub.s32 512, 512
          %573 = vsyncadd %s566, %s572
          %s574 = smul.addr %s36, 4
          %s575 = sadd.s32 %s570, %s574
          %s576 = smul.addr %s575, 128
          %s577 = scalar_lea.hbm %s3, %s576
          %s578 = sshll.u32 %s569, 4
          %s579 = int_to_ptr.vmem [resolvable:$true] %s578
          %584 = dma.hbm_to_vmem [thread:$0]  %s577, 512, %s579, %s566, 256, 256, 16
        $region94: #{tpu_custom_call.1} parent=43 // pred_fallthru
          _
        // Predicated region
        $region95: #{tpu_custom_call.1} parent=43 // pred_check
          %p585 = pneg %p199
        $region96: #{tpu_custom_call.1} parent=43 // pred_check_branch
          %587 = sbr.rel (%p585) target = $region98
        $region97: #{tpu_custom_call.1} parent=43 // pred_region
          %s588 = sand.u32 %s189, 1
          %s589 = sand.u32 %s189, 1
          %s590 = smul.addr %s589, 16
          %s591 = scalar_lea.vmem [#allocation8], %s590
          %s592 = smul.u32 %s37, 2
          %s593 = ssub.s32 %s592, 1
          %p594 = scmp.gt.s32.totalorder %s593, 0
          %s595 = scalar_select %p594, %s593, 0
          %s596 = smul.addr %s36, 4
          %s597 = sadd.s32 %s595, %s596
          %s598 = smul.addr %s597, 8
          %s599 = scalar_lea.vmem %s4, %s598
          // Predicated region
          $region99: #{tpu_custom_call.1} parent=97 // pred_check
            _
          $region100: #{tpu_custom_call.1} parent=97 // pred_check_branch
            %601 = sbr.rel (0) target = $region102
          $region101: #{tpu_custom_call.1} parent=97 // pred_region
            // Predicated region
            $region103: #{tpu_custom_call.1} parent=101 // pred_check
              _
            $region104: #{tpu_custom_call.1} parent=101 // pred_check_branch
              %603 = sbr.rel (0) target = $region106
            $region105: #{tpu_custom_call.1} parent=101 // pred_region
              // Predicated region
              $region118: #{tpu_custom_call.1} parent=105 // pred_check
                _
              $region119: #{tpu_custom_call.1} parent=105 // pred_check_branch
                %620 = sbr.rel (0) target = $region121
              $region120: #{tpu_custom_call.1} parent=105 // pred_region
                loop: start=0, step=1, limit=1
                $region122: #{tpu_custom_call.1} parent=120 // loop_pre_header
                  _
                $region123: #{tpu_custom_call.1} parent=120 // loop_header
                  %s622 = sphi 0, %s626
                  %p623 = scmp.ge.s32.totalorder %s622, 1
                  %s627 = sphi %s599, %s599
                  %s628 = sphi %s591, %s591
                $region124: #{tpu_custom_call.1} parent=120 // loop_header_branch
                  %625 = sbr.rel (%p623) target = $region128
                $region125: #{tpu_custom_call.1} parent=120 // loop_body
                  %v629 = vld [vmem:[%s627] sm:$0xff]
                  %630 = vst [vmem:[%s628] sm:$0xff] %v629
                  %v631 = vld [vmem:[%s627 + $0x10] sm:$0xff]
                  %632 = vst [vmem:[%s628 + $0x8] sm:$0xff] %v631
                $region126: #{tpu_custom_call.1} parent=120 // loop_footer
                  %s626 = sadd.s32 1, %s622
                $region127: #{tpu_custom_call.1} parent=120 // loop_footer_branch
                  %621 = sbr.rel target = $region123
                $region128: #{tpu_custom_call.1} parent=120 // loop_exit
                  _
              $region121: #{tpu_custom_call.1} parent=105 // pred_fallthru
                _
              // Predicated region
              $region129: #{tpu_custom_call.1} parent=105 // pred_check
                _
              $region130: #{tpu_custom_call.1} parent=105 // pred_check_branch
                %634 = sbr.rel target = $region132
              $region131: #{tpu_custom_call.1} parent=105 // pred_region
                _
              $region132: #{tpu_custom_call.1} parent=105 // pred_fallthru
                _
            $region106: #{tpu_custom_call.1} parent=101 // pred_fallthru
              _
            // Predicated region
            $region107: #{tpu_custom_call.1} parent=101 // pred_check
              _
            $region108: #{tpu_custom_call.1} parent=101 // pred_check_branch
              %605 = sbr.rel target = $region110
            $region109: #{tpu_custom_call.1} parent=101 // pred_region
              loop: start=0, step=1, limit=1
              $region111: #{tpu_custom_call.1} parent=109 // loop_pre_header
                _
              $region112: #{tpu_custom_call.1} parent=109 // loop_header
                %s608 = sphi 0, %s612
                %p609 = scmp.ge.s32.totalorder %s608, 1
                %s613 = sphi %s599, %s599
                %s614 = sphi %s591, %s591
              $region113: #{tpu_custom_call.1} parent=109 // loop_header_branch
                %611 = sbr.rel (%p609) target = $region117
              $region114: #{tpu_custom_call.1} parent=109 // loop_body
                %v615 = vld [vmem:[%s613] sm:$0xff]
                %616 = vst [vmem:[%s614] sm:$0xff] %v615
                %v617 = vld [vmem:[%s613 + $0x10] sm:$0xff]
                %618 = vst [vmem:[%s614 + $0x8] sm:$0xff] %v617
              $region115: #{tpu_custom_call.1} parent=109 // loop_footer
                %s612 = sadd.s32 1, %s608
              $region116: #{tpu_custom_call.1} parent=109 // loop_footer_branch
                %607 = sbr.rel target = $region112
              $region117: #{tpu_custom_call.1} parent=109 // loop_exit
                _
            $region110: #{tpu_custom_call.1} parent=101 // pred_fallthru
              _
          $region102: #{tpu_custom_call.1} parent=97 // pred_fallthru
            _
          %635 = vnop
        $region98: #{tpu_custom_call.1} parent=43 // pred_fallthru
          _
        // Predicated region
        $region133: #{tpu_custom_call.1} parent=43 // pred_check
          %p636 = pneg %p235
        $region134: #{tpu_custom_call.1} parent=43 // pred_check_branch
          %638 = sbr.rel (%p636) target = $region136
        $region135: #{tpu_custom_call.1} parent=43 // pred_region
          %s639 = sand.u32 %s29, 1
          %s640 = scalar_lea.sflag [#allocation7], %s639
          %s641 = sand.u32 %s225, 1
          %s642 = smul.addr %s641, 16
          %s643 = scalar_lea.vmem [#allocation9], %s642
          %s644 = sadd.s32 %s37, 1
          %s645 = smul.u32 %s644, 2
          %p646 = scmp.lt.s32.totalorder %s645, 1
          %s647 = scalar_select %p646, %s645, 1
          %s649 = ssub.s32 256, 256
          %650 = vsyncadd %s640, %s649
          %s651 = smul.addr %s36, 4
          %s652 = sadd.s32 %s647, %s651
          %s653 = smul.addr %s652, 128
          %s654 = scalar_lea.hbm %s5, %s653
          %s655 = sshll.u32 %s643, 4
          %s656 = int_to_ptr.vmem [resolvable:$true] %s655
          %661 = dma.hbm_to_vmem [thread:$0]  %s654, 256, %s656, %s640, 256, 128, 8
        $region136: #{tpu_custom_call.1} parent=43 // pred_fallthru
          _
      $region44: #{tpu_custom_call.1} parent=5 // pred_fallthru
        _
      %p662 = scmp.le.s32.totalorder 1, %s29
      %p663 = scmp.lt.s32.totalorder %s29, 3
      %p664 = pnand %p662, %p663
      %p665 = pneg %p664
      // Predicated region
      $region137: #{tpu_custom_call.1} parent=5 // pred_check
        _
      $region138: #{tpu_custom_call.1} parent=5 // pred_check_branch
        %667 = sbr.rel (%p664) target = $region140
      $region139: #{tpu_custom_call.1} parent=5 // pred_region
        %s668 = ssub.s32 %s29, 1
        %s669 = sand.u32 %s92, 1
        %s670 = sand.u32 %s92, 1
        %s671 = smul.addr %s670, 16
        %s672 = scalar_lea.vmem [#allocation2], %s671
        // Predicated region
        $region141: #{tpu_custom_call.1} parent=139 // pred_check
          %p673 = pneg %p105
        $region142: #{tpu_custom_call.1} parent=139 // pred_check_branch
          %675 = sbr.rel (%p673) target = $region144
        $region143: #{tpu_custom_call.1} parent=139 // pred_region
          _
        $region144: #{tpu_custom_call.1} parent=139 // pred_fallthru
          _
        %s676 = sand.u32 %s128, 1
        %s677 = scalar_lea.sflag [#allocation4], %s676
        %s678 = sand.u32 %s128, 1
        %s679 = smul.addr %s678, 16
        %s680 = scalar_lea.vmem [#allocation3], %s679
        // Predicated region
        $region145: #{tpu_custom_call.1} parent=139 // pred_check
          %p681 = pneg %p141
        $region146: #{tpu_custom_call.1} parent=139 // pred_check_branch
          %683 = sbr.rel (%p681) target = $region148
        $region147: #{tpu_custom_call.1} parent=139 // pred_region
          %684 = dma.done %s677, 256
        $region148: #{tpu_custom_call.1} parent=139 // pred_fallthru
          _
        %s685 = sand.u32 %s34, 1
        %s686 = scalar_lea.sflag [#allocation7], %s685
        %s687 = sand.u32 %s156, 1
        %s688 = smul.addr %s687, 32
        %s689 = scalar_lea.vmem [#allocation6], %s688
        // Predicated region
        $region149: #{tpu_custom_call.1} parent=139 // pred_check
          %p690 = pneg %p169
        $region150: #{tpu_custom_call.1} parent=139 // pred_check_branch
          %692 = sbr.rel (%p690) target = $region152
        $region151: #{tpu_custom_call.1} parent=139 // pred_region
          %693 = dma.done %s686, 512
        $region152: #{tpu_custom_call.1} parent=139 // pred_fallthru
          _
        %s694 = sand.u32 %s192, 1
        %s695 = sand.u32 %s192, 1
        %s696 = smul.addr %s695, 16
        %s697 = scalar_lea.vmem [#allocation8], %s696
        // Predicated region
        $region153: #{tpu_custom_call.1} parent=139 // pred_check
          %p698 = pneg %p205
        $region154: #{tpu_custom_call.1} parent=139 // pred_check_branch
          %700 = sbr.rel (%p698) target = $region156
        $region155: #{tpu_custom_call.1} parent=139 // pred_region
          _
        $region156: #{tpu_custom_call.1} parent=139 // pred_fallthru
          _
        %s701 = sand.u32 %s34, 1
        %s702 = scalar_lea.sflag [#allocation7], %s701
        %s703 = sand.u32 %s228, 1
        %s704 = smul.addr %s703, 16
        %s705 = scalar_lea.vmem [#allocation9], %s704
        // Predicated region
        $region157: #{tpu_custom_call.1} parent=139 // pred_check
          %p706 = pneg %p241
        $region158: #{tpu_custom_call.1} parent=139 // pred_check_branch
          %708 = sbr.rel (%p706) target = $region160
        $region159: #{tpu_custom_call.1} parent=139 // pred_region
          %709 = dma.done %s702, 256
        $region160: #{tpu_custom_call.1} parent=139 // pred_fallthru
          _
        // Predicated region
        $region161: #{tpu_custom_call.1} parent=139 // pred_check
          %p710 = pneg %p267
        $region162: #{tpu_custom_call.1} parent=139 // pred_check_branch
          %712 = sbr.rel (%p710) target = $region164
        $region163: #{tpu_custom_call.1} parent=139 // pred_region
          %713 = dma.done [#allocation11], 256
        $region164: #{tpu_custom_call.1} parent=139 // pred_fallthru
          _
        %s714 = smul.u32 2, %s39
        %p715 = scmp.lt.s32.totalorder %s38, 1
        %s716 = scalar_select %p715, %s38, 1
        %p717 = scmp.lt.s32.totalorder %s714, 1
        %s718 = scalar_select %p717, %s714, 1
        %s719 = smul.addr %s716, 4
        %s720 = sadd.s32 %s718, %s719
        %s721 = smul.addr %s720, 8
        %s722 = scalar_lea.vmem %s0, %s721
        %p723 = pneg %p69
        %p724 = pneg %p66
        %s725 = sand.u32 %s92, 1
        %s726 = sand.u32 %s92, 1
        %s727 = smul.addr %s726, 16
        %s728 = scalar_lea.vmem [#allocation2], %s727
        %p729 = pneg %p105
        %p730 = pneg %p102
        %s731 = sand.u32 %s128, 1
        %s732 = scalar_lea.sflag [#allocation4], %s731
        %s733 = sand.u32 %s128, 1
        %s734 = smul.addr %s733, 16
        %s735 = scalar_lea.vmem [#allocation3], %s734
        %p736 = pneg %p141
        %p737 = pneg %p138
        %s738 = sand.u32 %s34, 1
        %s739 = scalar_lea.sflag [#allocation7], %s738
        %s740 = sand.u32 %s156, 1
        %s741 = smul.addr %s740, 32
        %s742 = scalar_lea.vmem [#allocation6], %s741
        %p743 = pneg %p169
        %p744 = pneg %p166
        %s745 = sand.u32 %s192, 1
        %s746 = sand.u32 %s192, 1
        %s747 = smul.addr %s746, 16
        %s748 = scalar_lea.vmem [#allocation8], %s747
        %p749 = pneg %p205
        %p750 = pneg %p202
        %s751 = sand.u32 %s34, 1
        %s752 = scalar_lea.sflag [#allocation7], %s751
        %s753 = sand.u32 %s228, 1
        %s754 = smul.addr %s753, 16
        %s755 = scalar_lea.vmem [#allocation9], %s754
        %p756 = pneg %p241
        %p757 = pneg %p238
        %p758 = pneg %p267
        %p759 = pneg %p264
        %p760 = pneg %p288
        %p761 = pneg %p285
        %p762 = pneg %p309
        %p763 = pneg %p306
        %p764 = pneg %p330
        %p765 = pneg %p327
        %p766 = pneg %p351
        %p767 = pneg %p348
        %p768 = pneg %p372
        %p769 = pneg %p369
        %p770 = pneg %p393
        %p771 = pneg %p390
        %p772 = pneg %p421
        %p773 = pneg %p418
        %s774 = sand.u32 %s408, 1
        %s775 = scalar_lea.sflag [#allocation5], %s774
        %s776 = sand.u32 %s408, 1
        %s777 = smul.addr %s776, 32
        %s778 = scalar_lea.vmem [#allocation12], %s777
        %s779 = smul.u32 2, %s39
        %p780 = scmp.lt.s32.totalorder %s38, 1
        %s781 = scalar_select %p780, %s38, 1
        %p782 = scmp.lt.s32.totalorder %s779, 1
        %s783 = scalar_select %p782, %s779, 1
        %s784 = smul.addr %s781, 4
        %s785 = sadd.s32 %s783, %s784
        %s786 = smul.addr %s785, 8
        %s787 = scalar_lea.vmem %s0, %s786
        %s788 = smul.u32 2, %s39
        %s789 = smul.u32 %s39, 2
        %s790 = ssub.s32 %s789, 1
        %p791 = scmp.gt.s32.totalorder %s790, 0
        %s792 = scalar_select %p791, %s790, 0
        %s793 = sadd.s32 %s39, 1
        %s794 = smul.u32 %s793, 2
        %p795 = scmp.lt.s32.totalorder %s794, 1
        %s796 = scalar_select %p795, %s794, 1
        %s797 = smul.u32 2, %s39
        %s798 = smul.u32 %s39, 2
        %s799 = ssub.s32 %s798, 1
        %p800 = scmp.gt.s32.totalorder %s799, 0
        %s801 = scalar_select %p800, %s799, 0
        %s802 = sadd.s32 %s39, 1
        %s803 = smul.u32 %s802, 2
        %p804 = scmp.lt.s32.totalorder %s803, 1
        %s805 = scalar_select %p804, %s803, 1
        %s806 = smul.u32 2, %s39
        %s807 = smul.u32 2, %s39
        %v808 = vld [vmem:[#allocation10] sm:$0xff]
        %v809 = vld [vmem:[#allocation10 + $0x8] sm:$0xff]
        %v810 = vld [vmem:[%s787] sm:$0xff]
        %v811 = vld [vmem:[%s787 + $0x8] sm:$0xff]
        %v812 = vld [vmem:[%s787 + $0x10] sm:$0xff]
        %v813 = vld [vmem:[%s787 + $0x18] sm:$0xff]
        %v814 = vld [vmem:[%s672] sm:$0xff]
        %v815 = vld [vmem:[%s672 + $0x8] sm:$0xff]
        %v816 = vld [vmem:[%s680] sm:$0xff]
        %v817 = vld [vmem:[%s680 + $0x8] sm:$0xff]
        %824 = vrot.lane.b32.xlu0 %v814, 16
        %v825 = vpop.permute.xlu0 %824
        %826 = vrot.lane.b32.xlu0 %v810, 16
        %v827 = vpop.permute.xlu0 %826
        %828 = vrot.lane.b32.xlu0 %v811, 16
        %v829 = vpop.permute.xlu0 %828
        %830 = vrot.lane.b32.xlu0 %v815, 16
        %v831 = vpop.permute.xlu0 %830
        %832 = vrot.lane.b32.xlu0 %v812, 16
        %v833 = vpop.permute.xlu0 %832
        %834 = vrot.lane.b32.xlu0 %v813, 16
        %v835 = vpop.permute.xlu0 %834
        %vm836 = vcmask 130048
        %v837 = vsel %vm836, %v825, %v827
        %v838 = vsel %vm836, %v827, %v829
        %v839 = vsel %vm836, %v831, %v833
        %v840 = vsel %vm836, %v833, %v835
        %845 = vrot.lane.b32.xlu0 %v837, 1
        %v846 = vpop.permute.xlu0 %845
        %847 = vrot.lane.b32.xlu0 %v839, 1
        %v848 = vpop.permute.xlu0 %847
        %849 = vrot.lane.b32.xlu0 %v838, 1
        %v850 = vpop.permute.xlu0 %849
        %851 = vrot.lane.b32.xlu0 %v840, 1
        %v852 = vpop.permute.xlu0 %851
        %v853 = vlaneseq
        %v854 = vand.u32 %v853, 127
        %vm855 = vcmp.lt.s32.totalorder %v854, 1
        %v856 = vsel %vm855, %v846, %v850
        %v857 = vsel %vm855, %v848, %v852
        %v858 = vsel %vm855, %v850, %v846
        %v859 = vsel %vm855, %v852, %v848
        %v860 = vlaneseq
        %v861 = vshrl.u32 %v860, 7
        %v862 = vsub.s32 0, %v861
        %v863 = vrot.slane %v808, %v862
        %v864 = vlaneseq
        %v865 = vshrl.u32 %v864, 7
        %v866 = vsub.s32 0, %v865
        %v867 = vrot.slane %v809, %v866
        %v868 = vmul.f32 %v858, %v863
        %v869 = vmul.f32 %v856, %v867
        %v870 = vmul.f32 %v859, %v863
        %v871 = vmul.f32 %v857, %v867
        %v872 = vld [vmem:[%s7] sm:$0xf]
        %v873 = vlaneseq
        %v874 = vshrl.u32 %v873, 7
        %v875 = vsub.s32 1, %v874
        %v876 = vrot.slane %v808, %v875
        %v877 = vlaneseq
        %v878 = vshrl.u32 %v877, 7
        %v879 = vsub.s32 1, %v878
        %v880 = vrot.slane %v809, %v879
        %883 = vrot.lane.b32.xlu0 %v876, 112
        %v884 = vpop.permute.xlu0 %883
        %885 = vrot.lane.b32.xlu0 %v880, 112
        %v886 = vpop.permute.xlu0 %885
        %vm887 = vcmask 916480
        %v888 = vsel %vm887, %v884, %v886
        %v892 = vmul.f32 %v814, %v884
        %v893 = vmul.f32 %v810, %v888
        %v894 = vmul.f32 %v811, %v886
        %v895 = vmul.f32 %v815, %v884
        %v896 = vmul.f32 %v812, %v888
        %v897 = vmul.f32 %v813, %v886
        %s898 = scalar_lea.vmem %s7, 8
        %v899 = vld [vmem:[%s898] sm:$0xf]
        %906 = vrot.lane.b32.xlu0 %v892, 16
        %v907 = vpop.permute.xlu0 %906
        %908 = vrot.lane.b32.xlu0 %v893, 16
        %v909 = vpop.permute.xlu0 %908
        %910 = vrot.lane.b32.xlu0 %v894, 16
        %v911 = vpop.permute.xlu0 %910
        %912 = vrot.lane.b32.xlu0 %v895, 16
        %v913 = vpop.permute.xlu0 %912
        %914 = vrot.lane.b32.xlu0 %v896, 16
        %v915 = vpop.permute.xlu0 %914
        %916 = vrot.lane.b32.xlu0 %v897, 16
        %v917 = vpop.permute.xlu0 %916
        %v918 = vsel %vm836, %v907, %v909
        %v919 = vsel %vm836, %v909, %v911
        %v920 = vsel %vm836, %v913, %v915
        %v921 = vsel %vm836, %v915, %v917
        %v927 = vsel %vm836, %v899, 0
        %929 = vmatprep.subr.mxu0 %v919
        %930 = vmatpush1.msra.mxu0 %v918
        %931 = vmatprep.subr.mxu0 %v921
        %932 = vmatpush1.msra.mxu0 %v920
        %933 = vmatprep.subr.mxu0 0.0
        %934 = vmatpush1.msra.mxu0 0.0
        %935 = vmatprep.subr.mxu0 0.0
        %936 = vmatpush1.msra.mxu0 0.0
        %937 = vmatprep.subr.mxu0 0.0
        %938 = vmatpush1.msra.mxu0 0.0
        %939 = vmatprep.subr.mxu0 0.0
        %940 = vmatpush1.msra.mxu0 0.0
        %941 = vmatprep.subr.mxu0 0.0
        %942 = vmatpush1.msra.mxu0 0.0
        %943 = vmatprep.subr.mxu0 0.0
        %944 = vmatpush1.msra.mxu0 0.0
        %945 = vmatprep.subr.mxu0 0.0
        %946 = vmatpush1.msra.mxu0 0.0
        %947 = vmatprep.subr.mxu0 0.0
        %948 = vmatpush1.msra.mxu0 0.0
        %949 = vmatprep.subr.mxu0 0.0
        %950 = vmatpush1.msra.mxu0 0.0
        %951 = vmatprep.subr.mxu0 0.0
        %952 = vmatpush1.msra.mxu0 0.0
        %953 = vmatprep.subr.mxu0 0.0
        %954 = vmatpush1.msra.mxu0 0.0
        %955 = vmatprep.subr.mxu0 0.0
        %956 = vmatpush1.msra.mxu0 0.0
        %957 = vmatprep.subr.mxu0 0.0
        %958 = vmatpush1.msra.mxu0 0.0
        %959 = vmatprep.subr.mxu0 0.0
        %960 = vmatpush1.msra.mxu0 0.0
        %961 = vmatprep.subr.mxu0 0.0
        %962 = vmatpush1.msra.mxu0 0.0
        %963 = vmatprep.subr.mxu0 0.0
        %964 = vmatpush1.msra.mxu0 0.0
        %965 = vmatprep.subr.mxu0 0.0
        %966 = vmatpush1.msra.mxu0 0.0
        %967 = vmatprep.subr.mxu0 0.0
        %968 = vmatpush1.msra.mxu0 0.0
        %969 = vmatprep.subr.mxu0 0.0
        %970 = vmatpush1.msra.mxu0 0.0
        %971 = vmatprep.subr.mxu0 0.0
        %972 = vmatpush1.msra.mxu0 0.0
        %973 = vmatprep.subr.mxu0 0.0
        %974 = vmatpush1.msra.mxu0 0.0
        %975 = vmatprep.subr.mxu0 0.0
        %976 = vmatpush1.msra.mxu0 0.0
        %977 = vmatprep.subr.mxu0 0.0
        %978 = vmatpush1.msra.mxu0 0.0
        %979 = vmatprep.subr.mxu0 0.0
        %980 = vmatpush1.msra.mxu0 0.0
        %981 = vmatprep.subr.mxu0 0.0
        %982 = vmatpush1.msra.mxu0 0.0
        %983 = vmatprep.subr.mxu0 0.0
        %984 = vmatpush1.msra.mxu0 0.0
        %985 = vmatprep.subr.mxu0 0.0
        %986 = vmatpush1.msra.mxu0 0.0
        %987 = vmatprep.subr.mxu0 0.0
        %988 = vmatpush1.msra.mxu0 0.0
        %989 = vmatprep.subr.mxu0 0.0
        %990 = vmatpush1.msra.mxu0 0.0
        %991 = vmatprep.subr.mxu0 0.0
        %992 = vmatpush1.msra.mxu0 0.0
        %993 = vmatprep.mubr.f32.mxu0 0.0
        %994 = vmatmul.mubr.f32.gmra.mrb[0].mxu0 %v927
        %v995 = vpop.f32.mrb[0].mxu0
        %v996 = vadd.f32 0.0, %v995
        %v997 = vpop.f32.mrb[0].mxu0
        %v998 = vadd.f32 0.0, %v997
        %999 = vdwg.mxu0
        %v1001 = vsel %vm836, %v872, 0
        %1003 = vmatprep.subr.mxu0 %v869
        %1004 = vmatpush1.msra.mxu0 %v868
        %1005 = vmatprep.subr.mxu0 %v871
        %1006 = vmatpush1.msra.mxu0 %v870
        %1007 = vmatprep.subr.mxu0 0.0
        %1008 = vmatpush1.msra.mxu0 0.0
        %1009 = vmatprep.subr.mxu0 0.0
        %1010 = vmatpush1.msra.mxu0 0.0
        %1011 = vmatprep.subr.mxu0 0.0
        %1012 = vmatpush1.msra.mxu0 0.0
        %1013 = vmatprep.subr.mxu0 0.0
        %1014 = vmatpush1.msra.mxu0 0.0
        %1015 = vmatprep.subr.mxu0 0.0
        %1016 = vmatpush1.msra.mxu0 0.0
        %1017 = vmatprep.subr.mxu0 0.0
        %1018 = vmatpush1.msra.mxu0 0.0
        %1019 = vmatprep.subr.mxu0 0.0
        %1020 = vmatpush1.msra.mxu0 0.0
        %1021 = vmatprep.subr.mxu0 0.0
        %1022 = vmatpush1.msra.mxu0 0.0
        %1023 = vmatprep.subr.mxu0 0.0
        %1024 = vmatpush1.msra.mxu0 0.0
        %1025 = vmatprep.subr.mxu0 0.0
        %1026 = vmatpush1.msra.mxu0 0.0
        %1027 = vmatprep.subr.mxu0 0.0
        %1028 = vmatpush1.msra.mxu0 0.0
        %1029 = vmatprep.subr.mxu0 0.0
        %1030 = vmatpush1.msra.mxu0 0.0
        %1031 = vmatprep.subr.mxu0 0.0
        %1032 = vmatpush1.msra.mxu0 0.0
        %1033 = vmatprep.subr.mxu0 0.0
        %1034 = vmatpush1.msra.mxu0 0.0
        %1035 = vmatprep.subr.mxu0 0.0
        %1036 = vmatpush1.msra.mxu0 0.0
        %1037 = vmatprep.subr.mxu0 0.0
        %1038 = vmatpush1.msra.mxu0 0.0
        %1039 = vmatprep.subr.mxu0 0.0
        %1040 = vmatpush1.msra.mxu0 0.0
        %1041 = vmatprep.subr.mxu0 0.0
        %1042 = vmatpush1.msra.mxu0 0.0
        %1043 = vmatprep.subr.mxu0 0.0
        %1044 = vmatpush1.msra.mxu0 0.0
        %1045 = vmatprep.subr.mxu0 0.0
        %1046 = vmatpush1.msra.mxu0 0.0
        %1047 = vmatprep.subr.mxu0 0.0
        %1048 = vmatpush1.msra.mxu0 0.0
        %1049 = vmatprep.subr.mxu0 0.0
        %1050 = vmatpush1.msra.mxu0 0.0
        %1051 = vmatprep.subr.mxu0 0.0
        %1052 = vmatpush1.msra.mxu0 0.0
        %1053 = vmatprep.subr.mxu0 0.0
        %1054 = vmatpush1.msra.mxu0 0.0
        %1055 = vmatprep.subr.mxu0 0.0
        %1056 = vmatpush1.msra.mxu0 0.0
        %1057 = vmatprep.subr.mxu0 0.0
        %1058 = vmatpush1.msra.mxu0 0.0
        %1059 = vmatprep.subr.mxu0 0.0
        %1060 = vmatpush1.msra.mxu0 0.0
        %1061 = vmatprep.subr.mxu0 0.0
        %1062 = vmatpush1.msra.mxu0 0.0
        %1063 = vmatprep.subr.mxu0 0.0
        %1064 = vmatpush1.msra.mxu0 0.0
        %1065 = vmatprep.subr.mxu0 0.0
        %1066 = vmatpush1.msra.mxu0 0.0
        %1067 = vmatprep.mubr.f32.mxu0 0.0
        %1068 = vmatmul.mubr.f32.gmra.mrb[0].mxu0 %v1001
        %v1069 = vpop.f32.mrb[0].mxu0
        %v1070 = vadd.f32 %v996, %v1069
        %v1071 = vpop.f32.mrb[0].mxu0
        %v1072 = vadd.f32 %v998, %v1071
        %1073 = vdwg.mxu0
        %1074 = vrot.lane.b32.xlu0 %v837, 127
        %v1075 = vpop.permute.xlu0 %1074
        %1076 = vrot.lane.b32.xlu0 %v839, 127
        %v1077 = vpop.permute.xlu0 %1076
        %1078 = vrot.lane.b32.xlu0 %v838, 127
        %v1079 = vpop.permute.xlu0 %1078
        %1080 = vrot.lane.b32.xlu0 %v840, 127
        %v1081 = vpop.permute.xlu0 %1080
        %vm1082 = vcmp.lt.s32.totalorder %v854, 127
        %v1083 = vsel %vm1082, %v1075, %v1079
        %v1084 = vsel %vm1082, %v1077, %v1081
        %v1085 = vsel %vm1082, %v1079, %v1075
        %v1086 = vsel %vm1082, %v1081, %v1077
        %v1087 = vlaneseq
        %v1088 = vshrl.u32 %v1087, 7
        %v1089 = vsub.s32 2, %v1088
        %v1090 = vrot.slane %v808, %v1089
        %v1091 = vlaneseq
        %v1092 = vshrl.u32 %v1091, 7
        %v1093 = vsub.s32 2, %v1092
        %v1094 = vrot.slane %v809, %v1093
        %v1095 = vmul.f32 %v1083, %v1090
        %v1096 = vmul.f32 %v1085, %v1094
        %v1097 = vmul.f32 %v1084, %v1090
        %v1098 = vmul.f32 %v1086, %v1094
        %s1099 = scalar_lea.vmem %s7, 16
        %v1100 = vld [vmem:[%s1099] sm:$0xf]
        %v1102 = vsel %vm836, %v1100, 0
        %1104 = vmatprep.subr.mxu0 %v1096
        %1105 = vmatpush1.msra.mxu0 %v1095
        %1106 = vmatprep.subr.mxu0 %v1098
        %1107 = vmatpush1.msra.mxu0 %v1097
        %1108 = vmatprep.subr.mxu0 0.0
        %1109 = vmatpush1.msra.mxu0 0.0
        %1110 = vmatprep.subr.mxu0 0.0
        %1111 = vmatpush1.msra.mxu0 0.0
        %1112 = vmatprep.subr.mxu0 0.0
        %1113 = vmatpush1.msra.mxu0 0.0
        %1114 = vmatprep.subr.mxu0 0.0
        %1115 = vmatpush1.msra.mxu0 0.0
        %1116 = vmatprep.subr.mxu0 0.0
        %1117 = vmatpush1.msra.mxu0 0.0
        %1118 = vmatprep.subr.mxu0 0.0
        %1119 = vmatpush1.msra.mxu0 0.0
        %1120 = vmatprep.subr.mxu0 0.0
        %1121 = vmatpush1.msra.mxu0 0.0
        %1122 = vmatprep.subr.mxu0 0.0
        %1123 = vmatpush1.msra.mxu0 0.0
        %1124 = vmatprep.subr.mxu0 0.0
        %1125 = vmatpush1.msra.mxu0 0.0
        %1126 = vmatprep.subr.mxu0 0.0
        %1127 = vmatpush1.msra.mxu0 0.0
        %1128 = vmatprep.subr.mxu0 0.0
        %1129 = vmatpush1.msra.mxu0 0.0
        %1130 = vmatprep.subr.mxu0 0.0
        %1131 = vmatpush1.msra.mxu0 0.0
        %1132 = vmatprep.subr.mxu0 0.0
        %1133 = vmatpush1.msra.mxu0 0.0
        %1134 = vmatprep.subr.mxu0 0.0
        %1135 = vmatpush1.msra.mxu0 0.0
        %1136 = vmatprep.subr.mxu0 0.0
        %1137 = vmatpush1.msra.mxu0 0.0
        %1138 = vmatprep.subr.mxu0 0.0
        %1139 = vmatpush1.msra.mxu0 0.0
        %1140 = vmatprep.subr.mxu0 0.0
        %1141 = vmatpush1.msra.mxu0 0.0
        %1142 = vmatprep.subr.mxu0 0.0
        %1143 = vmatpush1.msra.mxu0 0.0
        %1144 = vmatprep.subr.mxu0 0.0
        %1145 = vmatpush1.msra.mxu0 0.0
        %1146 = vmatprep.subr.mxu0 0.0
        %1147 = vmatpush1.msra.mxu0 0.0
        %1148 = vmatprep.subr.mxu0 0.0
        %1149 = vmatpush1.msra.mxu0 0.0
        %1150 = vmatprep.subr.mxu0 0.0
        %1151 = vmatpush1.msra.mxu0 0.0
        %1152 = vmatprep.subr.mxu0 0.0
        %1153 = vmatpush1.msra.mxu0 0.0
        %1154 = vmatprep.subr.mxu0 0.0
        %1155 = vmatpush1.msra.mxu0 0.0
        %1156 = vmatprep.subr.mxu0 0.0
        %1157 = vmatpush1.msra.mxu0 0.0
        %1158 = vmatprep.subr.mxu0 0.0
        %1159 = vmatpush1.msra.mxu0 0.0
        %1160 = vmatprep.subr.mxu0 0.0
        %1161 = vmatpush1.msra.mxu0 0.0
        %1162 = vmatprep.subr.mxu0 0.0
        %1163 = vmatpush1.msra.mxu0 0.0
        %1164 = vmatprep.subr.mxu0 0.0
        %1165 = vmatpush1.msra.mxu0 0.0
        %1166 = vmatprep.subr.mxu0 0.0
        %1167 = vmatpush1.msra.mxu0 0.0
        %1168 = vmatprep.mubr.f32.mxu0 0.0
        %1169 = vmatmul.mubr.f32.gmra.mrb[0].mxu0 %v1102
        %v1170 = vpop.f32.mrb[0].mxu0
        %v1171 = vadd.f32 0.0, %v1170
        %v1172 = vpop.f32.mrb[0].mxu0
        %v1173 = vadd.f32 0.0, %v1172
        %1174 = vdwg.mxu0
        %v1175 = vadd.f32 %v1070, %v1171
        %v1176 = vadd.f32 %v1072, %v1173
        %1177 = vrot.lane.b32.xlu0 %v810, 1
        %v1178 = vpop.permute.xlu0 %1177
        %1179 = vrot.lane.b32.xlu0 %v812, 1
        %v1180 = vpop.permute.xlu0 %1179
        %1181 = vrot.lane.b32.xlu0 %v811, 1
        %v1182 = vpop.permute.xlu0 %1181
        %1183 = vrot.lane.b32.xlu0 %v813, 1
        %v1184 = vpop.permute.xlu0 %1183
        %v1185 = vsel %vm855, %v1178, %v1182
        %v1186 = vsel %vm855, %v1180, %v1184
        %v1187 = vsel %vm855, %v1182, %v1178
        %v1188 = vsel %vm855, %v1184, %v1180
        %v1189 = vlaneseq
        %v1190 = vshrl.u32 %v1189, 7
        %v1191 = vsub.s32 3, %v1190
        %v1192 = vrot.slane %v808, %v1191
        %v1193 = vlaneseq
        %v1194 = vshrl.u32 %v1193, 7
        %v1195 = vsub.s32 3, %v1194
        %v1196 = vrot.slane %v809, %v1195
        %v1197 = vmul.f32 %v1187, %v1192
        %v1198 = vmul.f32 %v1185, %v1196
        %v1199 = vmul.f32 %v1188, %v1192
        %v1200 = vmul.f32 %v1186, %v1196
        %s1201 = scalar_lea.vmem %s7, 24
        %v1202 = vld [vmem:[%s1201] sm:$0xf]
        %v1204 = vsel %vm836, %v1202, 0
        %1206 = vmatprep.subr.mxu0 %v1198
        %1207 = vmatpush1.msra.mxu0 %v1197
        %1208 = vmatprep.subr.mxu0 %v1200
        %1209 = vmatpush1.msra.mxu0 %v1199
        %1210 = vmatprep.subr.mxu0 0.0
        %1211 = vmatpush1.msra.mxu0 0.0
        %1212 = vmatprep.subr.mxu0 0.0
        %1213 = vmatpush1.msra.mxu0 0.0
        %1214 = vmatprep.subr.mxu0 0.0
        %1215 = vmatpush1.msra.mxu0 0.0
        %1216 = vmatprep.subr.mxu0 0.0
        %1217 = vmatpush1.msra.mxu0 0.0
        %1218 = vmatprep.subr.mxu0 0.0
        %1219 = vmatpush1.msra.mxu0 0.0
        %1220 = vmatprep.subr.mxu0 0.0
        %1221 = vmatpush1.msra.mxu0 0.0
        %1222 = vmatprep.subr.mxu0 0.0
        %1223 = vmatpush1.msra.mxu0 0.0
        %1224 = vmatprep.subr.mxu0 0.0
        %1225 = vmatpush1.msra.mxu0 0.0
        %1226 = vmatprep.subr.mxu0 0.0
        %1227 = vmatpush1.msra.mxu0 0.0
        %1228 = vmatprep.subr.mxu0 0.0
        %1229 = vmatpush1.msra.mxu0 0.0
        %1230 = vmatprep.subr.mxu0 0.0
        %1231 = vmatpush1.msra.mxu0 0.0
        %1232 = vmatprep.subr.mxu0 0.0
        %1233 = vmatpush1.msra.mxu0 0.0
        %1234 = vmatprep.subr.mxu0 0.0
        %1235 = vmatpush1.msra.mxu0 0.0
        %1236 = vmatprep.subr.mxu0 0.0
        %1237 = vmatpush1.msra.mxu0 0.0
        %1238 = vmatprep.subr.mxu0 0.0
        %1239 = vmatpush1.msra.mxu0 0.0
        %1240 = vmatprep.subr.mxu0 0.0
        %1241 = vmatpush1.msra.mxu0 0.0
        %1242 = vmatprep.subr.mxu0 0.0
        %1243 = vmatpush1.msra.mxu0 0.0
        %1244 = vmatprep.subr.mxu0 0.0
        %1245 = vmatpush1.msra.mxu0 0.0
        %1246 = vmatprep.subr.mxu0 0.0
        %1247 = vmatpush1.msra.mxu0 0.0
        %1248 = vmatprep.subr.mxu0 0.0
        %1249 = vmatpush1.msra.mxu0 0.0
        %1250 = vmatprep.subr.mxu0 0.0
        %1251 = vmatpush1.msra.mxu0 0.0
        %1252 = vmatprep.subr.mxu0 0.0
        %1253 = vmatpush1.msra.mxu0 0.0
        %1254 = vmatprep.subr.mxu0 0.0
        %1255 = vmatpush1.msra.mxu0 0.0
        %1256 = vmatprep.subr.mxu0 0.0
        %1257 = vmatpush1.msra.mxu0 0.0
        %1258 = vmatprep.subr.mxu0 0.0
        %1259 = vmatpush1.msra.mxu0 0.0
        %1260 = vmatprep.subr.mxu0 0.0
        %1261 = vmatpush1.msra.mxu0 0.0
        %1262 = vmatprep.subr.mxu0 0.0
        %1263 = vmatpush1.msra.mxu0 0.0
        %1264 = vmatprep.subr.mxu0 0.0
        %1265 = vmatpush1.msra.mxu0 0.0
        %1266 = vmatprep.subr.mxu0 0.0
        %1267 = vmatpush1.msra.mxu0 0.0
        %1268 = vmatprep.subr.mxu0 0.0
        %1269 = vmatpush1.msra.mxu0 0.0
        %1270 = vmatprep.mubr.f32.mxu0 0.0
        %1271 = vmatmul.mubr.f32.gmra.mrb[0].mxu0 %v1204
        %v1272 = vpop.f32.mrb[0].mxu0
        %v1273 = vadd.f32 0.0, %v1272
        %v1274 = vpop.f32.mrb[0].mxu0
        %v1275 = vadd.f32 0.0, %v1274
        %1276 = vdwg.mxu0
        %v1277 = vadd.f32 %v1175, %v1273
        %v1278 = vadd.f32 %v1176, %v1275
        %s1279 = scalar_lea.vmem %s7, 32
        %v1280 = vld [vmem:[%s1279] sm:$0xf]
        %v1282 = vsel %vm836, %v1280, 0
        %1284 = vmatprep.subr.mxu0 %v811
        %1285 = vmatpush1.msra.mxu0 %v810
        %1286 = vmatprep.subr.mxu0 %v813
        %1287 = vmatpush1.msra.mxu0 %v812
        %1288 = vmatprep.subr.mxu0 0.0
        %1289 = vmatpush1.msra.mxu0 0.0
        %1290 = vmatprep.subr.mxu0 0.0
        %1291 = vmatpush1.msra.mxu0 0.0
        %1292 = vmatprep.subr.mxu0 0.0
        %1293 = vmatpush1.msra.mxu0 0.0
        %1294 = vmatprep.subr.mxu0 0.0
        %1295 = vmatpush1.msra.mxu0 0.0
        %1296 = vmatprep.subr.mxu0 0.0
        %1297 = vmatpush1.msra.mxu0 0.0
        %1298 = vmatprep.subr.mxu0 0.0
        %1299 = vmatpush1.msra.mxu0 0.0
        %1300 = vmatprep.subr.mxu0 0.0
        %1301 = vmatpush1.msra.mxu0 0.0
        %1302 = vmatprep.subr.mxu0 0.0
        %1303 = vmatpush1.msra.mxu0 0.0
        %1304 = vmatprep.subr.mxu0 0.0
        %1305 = vmatpush1.msra.mxu0 0.0
        %1306 = vmatprep.subr.mxu0 0.0
        %1307 = vmatpush1.msra.mxu0 0.0
        %1308 = vmatprep.subr.mxu0 0.0
        %1309 = vmatpush1.msra.mxu0 0.0
        %1310 = vmatprep.subr.mxu0 0.0
        %1311 = vmatpush1.msra.mxu0 0.0
        %1312 = vmatprep.subr.mxu0 0.0
        %1313 = vmatpush1.msra.mxu0 0.0
        %1314 = vmatprep.subr.mxu0 0.0
        %1315 = vmatpush1.msra.mxu0 0.0
        %1316 = vmatprep.subr.mxu0 0.0
        %1317 = vmatpush1.msra.mxu0 0.0
        %1318 = vmatprep.subr.mxu0 0.0
        %1319 = vmatpush1.msra.mxu0 0.0
        %1320 = vmatprep.subr.mxu0 0.0
        %1321 = vmatpush1.msra.mxu0 0.0
        %1322 = vmatprep.subr.mxu0 0.0
        %1323 = vmatpush1.msra.mxu0 0.0
        %1324 = vmatprep.subr.mxu0 0.0
        %1325 = vmatpush1.msra.mxu0 0.0
        %1326 = vmatprep.subr.mxu0 0.0
        %1327 = vmatpush1.msra.mxu0 0.0
        %1328 = vmatprep.subr.mxu0 0.0
        %1329 = vmatpush1.msra.mxu0 0.0
        %1330 = vmatprep.subr.mxu0 0.0
        %1331 = vmatpush1.msra.mxu0 0.0
        %1332 = vmatprep.subr.mxu0 0.0
        %1333 = vmatpush1.msra.mxu0 0.0
        %1334 = vmatprep.subr.mxu0 0.0
        %1335 = vmatpush1.msra.mxu0 0.0
        %1336 = vmatprep.subr.mxu0 0.0
        %1337 = vmatpush1.msra.mxu0 0.0
        %1338 = vmatprep.subr.mxu0 0.0
        %1339 = vmatpush1.msra.mxu0 0.0
        %1340 = vmatprep.subr.mxu0 0.0
        %1341 = vmatpush1.msra.mxu0 0.0
        %1342 = vmatprep.subr.mxu0 0.0
        %1343 = vmatpush1.msra.mxu0 0.0
        %1344 = vmatprep.subr.mxu0 0.0
        %1345 = vmatpush1.msra.mxu0 0.0
        %1346 = vmatprep.subr.mxu0 0.0
        %1347 = vmatpush1.msra.mxu0 0.0
        %1348 = vmatprep.mubr.f32.mxu0 0.0
        %1349 = vmatmul.mubr.f32.gmra.mrb[0].mxu0 %v1282
        %v1350 = vpop.f32.mrb[0].mxu0
        %v1351 = vadd.f32 0.0, %v1350
        %v1352 = vpop.f32.mrb[0].mxu0
        %v1353 = vadd.f32 0.0, %v1352
        %1354 = vdwg.mxu0
        %v1355 = vadd.f32 %v1277, %v1351
        %v1356 = vadd.f32 %v1278, %v1353
        %1357 = vrot.lane.b32.xlu0 %v810, 127
        %v1358 = vpop.permute.xlu0 %1357
        %1359 = vrot.lane.b32.xlu0 %v812, 127
        %v1360 = vpop.permute.xlu0 %1359
        %1361 = vrot.lane.b32.xlu0 %v811, 127
        %v1362 = vpop.permute.xlu0 %1361
        %1363 = vrot.lane.b32.xlu0 %v813, 127
        %v1364 = vpop.permute.xlu0 %1363
        %v1365 = vsel %vm1082, %v1358, %v1362
        %v1366 = vsel %vm1082, %v1360, %v1364
        %v1367 = vsel %vm1082, %v1362, %v1358
        %v1368 = vsel %vm1082, %v1364, %v1360
        %v1369 = vlaneseq
        %v1370 = vshrl.u32 %v1369, 7
        %v1371 = vsub.s32 4, %v1370
        %v1372 = vrot.slane %v808, %v1371
        %v1373 = vlaneseq
        %v1374 = vshrl.u32 %v1373, 7
        %v1375 = vsub.s32 4, %v1374
        %v1376 = vrot.slane %v809, %v1375
        %v1377 = vmul.f32 %v1365, %v1372
        %v1378 = vmul.f32 %v1367, %v1376
        %v1379 = vmul.f32 %v1366, %v1372
        %v1380 = vmul.f32 %v1368, %v1376
        %s1381 = scalar_lea.vmem %s7, 40
        %v1382 = vld [vmem:[%s1381] sm:$0xf]
        %v1384 = vsel %vm836, %v1382, 0
        %1386 = vmatprep.subr.mxu0 %v1378
        %1387 = vmatpush1.msra.mxu0 %v1377
        %1388 = vmatprep.subr.mxu0 %v1380
        %1389 = vmatpush1.msra.mxu0 %v1379
        %1390 = vmatprep.subr.mxu0 0.0
        %1391 = vmatpush1.msra.mxu0 0.0
        %1392 = vmatprep.subr.mxu0 0.0
        %1393 = vmatpush1.msra.mxu0 0.0
        %1394 = vmatprep.subr.mxu0 0.0
        %1395 = vmatpush1.msra.mxu0 0.0
        %1396 = vmatprep.subr.mxu0 0.0
        %1397 = vmatpush1.msra.mxu0 0.0
        %1398 = vmatprep.subr.mxu0 0.0
        %1399 = vmatpush1.msra.mxu0 0.0
        %1400 = vmatprep.subr.mxu0 0.0
        %1401 = vmatpush1.msra.mxu0 0.0
        %1402 = vmatprep.subr.mxu0 0.0
        %1403 = vmatpush1.msra.mxu0 0.0
        %1404 = vmatprep.subr.mxu0 0.0
        %1405 = vmatpush1.msra.mxu0 0.0
        %1406 = vmatprep.subr.mxu0 0.0
        %1407 = vmatpush1.msra.mxu0 0.0
        %1408 = vmatprep.subr.mxu0 0.0
        %1409 = vmatpush1.msra.mxu0 0.0
        %1410 = vmatprep.subr.mxu0 0.0
        %1411 = vmatpush1.msra.mxu0 0.0
        %1412 = vmatprep.subr.mxu0 0.0
        %1413 = vmatpush1.msra.mxu0 0.0
        %1414 = vmatprep.subr.mxu0 0.0
        %1415 = vmatpush1.msra.mxu0 0.0
        %1416 = vmatprep.subr.mxu0 0.0
        %1417 = vmatpush1.msra.mxu0 0.0
        %1418 = vmatprep.subr.mxu0 0.0
        %1419 = vmatpush1.msra.mxu0 0.0
        %1420 = vmatprep.subr.mxu0 0.0
        %1421 = vmatpush1.msra.mxu0 0.0
        %1422 = vmatprep.subr.mxu0 0.0
        %1423 = vmatpush1.msra.mxu0 0.0
        %1424 = vmatprep.subr.mxu0 0.0
        %1425 = vmatpush1.msra.mxu0 0.0
        %1426 = vmatprep.subr.mxu0 0.0
        %1427 = vmatpush1.msra.mxu0 0.0
        %1428 = vmatprep.subr.mxu0 0.0
        %1429 = vmatpush1.msra.mxu0 0.0
        %1430 = vmatprep.subr.mxu0 0.0
        %1431 = vmatpush1.msra.mxu0 0.0
        %1432 = vmatprep.subr.mxu0 0.0
        %1433 = vmatpush1.msra.mxu0 0.0
        %1434 = vmatprep.subr.mxu0 0.0
        %1435 = vmatpush1.msra.mxu0 0.0
        %1436 = vmatprep.subr.mxu0 0.0
        %1437 = vmatpush1.msra.mxu0 0.0
        %1438 = vmatprep.subr.mxu0 0.0
        %1439 = vmatpush1.msra.mxu0 0.0
        %1440 = vmatprep.subr.mxu0 0.0
        %1441 = vmatpush1.msra.mxu0 0.0
        %1442 = vmatprep.subr.mxu0 0.0
        %1443 = vmatpush1.msra.mxu0 0.0
        %1444 = vmatprep.subr.mxu0 0.0
        %1445 = vmatpush1.msra.mxu0 0.0
        %1446 = vmatprep.subr.mxu0 0.0
        %1447 = vmatpush1.msra.mxu0 0.0
        %1448 = vmatprep.subr.mxu0 0.0
        %1449 = vmatpush1.msra.mxu0 0.0
        %1450 = vmatprep.mubr.f32.mxu0 0.0
        %1451 = vmatmul.mubr.f32.gmra.mrb[0].mxu0 %v1384
        %v1452 = vpop.f32.mrb[0].mxu0
        %v1453 = vadd.f32 0.0, %v1452
        %v1454 = vpop.f32.mrb[0].mxu0
        %v1455 = vadd.f32 0.0, %v1454
        %1456 = vdwg.mxu0
        %v1457 = vadd.f32 %v1355, %v1453
        %v1458 = vadd.f32 %v1356, %v1455
        %1461 = vrot.lane.b32.xlu0 %v810, 112
        %v1462 = vpop.permute.xlu0 %1461
        %1463 = vrot.lane.b32.xlu0 %v811, 112
        %v1464 = vpop.permute.xlu0 %1463
        %1465 = vrot.lane.b32.xlu0 %v816, 112
        %v1466 = vpop.permute.xlu0 %1465
        %1467 = vrot.lane.b32.xlu0 %v812, 112
        %v1468 = vpop.permute.xlu0 %1467
        %1469 = vrot.lane.b32.xlu0 %v813, 112
        %v1470 = vpop.permute.xlu0 %1469
        %1471 = vrot.lane.b32.xlu0 %v817, 112
        %v1472 = vpop.permute.xlu0 %1471
        %v1473 = vsel %vm887, %v1462, %v1464
        %v1474 = vsel %vm887, %v1464, %v1466
        %v1475 = vsel %vm887, %v1468, %v1470
        %v1476 = vsel %vm887, %v1470, %v1472
        %1481 = vrot.lane.b32.xlu0 %v1473, 1
        %v1482 = vpop.permute.xlu0 %1481
        %1483 = vrot.lane.b32.xlu0 %v1475, 1
        %v1484 = vpop.permute.xlu0 %1483
        %1485 = vrot.lane.b32.xlu0 %v1474, 1
        %v1486 = vpop.permute.xlu0 %1485
        %1487 = vrot.lane.b32.xlu0 %v1476, 1
        %v1488 = vpop.permute.xlu0 %1487
        %v1489 = vsel %vm855, %v1482, %v1486
        %v1490 = vsel %vm855, %v1484, %v1488
        %v1491 = vsel %vm855, %v1486, %v1482
        %v1492 = vsel %vm855, %v1488, %v1484
        %v1493 = vlaneseq
        %v1494 = vshrl.u32 %v1493, 7
        %v1495 = vsub.s32 5, %v1494
        %v1496 = vrot.slane %v808, %v1495
        %v1497 = vlaneseq
        %v1498 = vshrl.u32 %v1497, 7
        %v1499 = vsub.s32 5, %v1498
        %v1500 = vrot.slane %v809, %v1499
        %v1501 = vmul.f32 %v1491, %v1496
        %v1502 = vmul.f32 %v1489, %v1500
        %v1503 = vmul.f32 %v1492, %v1496
        %v1504 = vmul.f32 %v1490, %v1500
        %s1505 = scalar_lea.vmem %s7, 48
        %v1506 = vld [vmem:[%s1505] sm:$0xf]
        %v1508 = vsel %vm836, %v1506, 0
        %1510 = vmatprep.subr.mxu0 %v1502
        %1511 = vmatpush1.msra.mxu0 %v1501
        %1512 = vmatprep.subr.mxu0 %v1504
        %1513 = vmatpush1.msra.mxu0 %v1503
        %1514 = vmatprep.subr.mxu0 0.0
        %1515 = vmatpush1.msra.mxu0 0.0
        %1516 = vmatprep.subr.mxu0 0.0
        %1517 = vmatpush1.msra.mxu0 0.0
        %1518 = vmatprep.subr.mxu0 0.0
        %1519 = vmatpush1.msra.mxu0 0.0
        %1520 = vmatprep.subr.mxu0 0.0
        %1521 = vmatpush1.msra.mxu0 0.0
        %1522 = vmatprep.subr.mxu0 0.0
        %1523 = vmatpush1.msra.mxu0 0.0
        %1524 = vmatprep.subr.mxu0 0.0
        %1525 = vmatpush1.msra.mxu0 0.0
        %1526 = vmatprep.subr.mxu0 0.0
        %1527 = vmatpush1.msra.mxu0 0.0
        %1528 = vmatprep.subr.mxu0 0.0
        %1529 = vmatpush1.msra.mxu0 0.0
        %1530 = vmatprep.subr.mxu0 0.0
        %1531 = vmatpush1.msra.mxu0 0.0
        %1532 = vmatprep.subr.mxu0 0.0
        %1533 = vmatpush1.msra.mxu0 0.0
        %1534 = vmatprep.subr.mxu0 0.0
        %1535 = vmatpush1.msra.mxu0 0.0
        %1536 = vmatprep.subr.mxu0 0.0
        %1537 = vmatpush1.msra.mxu0 0.0
        %1538 = vmatprep.subr.mxu0 0.0
        %1539 = vmatpush1.msra.mxu0 0.0
        %1540 = vmatprep.subr.mxu0 0.0
        %1541 = vmatpush1.msra.mxu0 0.0
        %1542 = vmatprep.subr.mxu0 0.0
        %1543 = vmatpush1.msra.mxu0 0.0
        %1544 = vmatprep.subr.mxu0 0.0
        %1545 = vmatpush1.msra.mxu0 0.0
        %1546 = vmatprep.subr.mxu0 0.0
        %1547 = vmatpush1.msra.mxu0 0.0
        %1548 = vmatprep.subr.mxu0 0.0
        %1549 = vmatpush1.msra.mxu0 0.0
        %1550 = vmatprep.subr.mxu0 0.0
        %1551 = vmatpush1.msra.mxu0 0.0
        %1552 = vmatprep.subr.mxu0 0.0
        %1553 = vmatpush1.msra.mxu0 0.0
        %1554 = vmatprep.subr.mxu0 0.0
        %1555 = vmatpush1.msra.mxu0 0.0
        %1556 = vmatprep.subr.mxu0 0.0
        %1557 = vmatpush1.msra.mxu0 0.0
        %1558 = vmatprep.subr.mxu0 0.0
        %1559 = vmatpush1.msra.mxu0 0.0
        %1560 = vmatprep.subr.mxu0 0.0
        %1561 = vmatpush1.msra.mxu0 0.0
        %1562 = vmatprep.subr.mxu0 0.0
        %1563 = vmatpush1.msra.mxu0 0.0
        %1564 = vmatprep.subr.mxu0 0.0
        %1565 = vmatpush1.msra.mxu0 0.0
        %1566 = vmatprep.subr.mxu0 0.0
        %1567 = vmatpush1.msra.mxu0 0.0
        %1568 = vmatprep.subr.mxu0 0.0
        %1569 = vmatpush1.msra.mxu0 0.0
        %1570 = vmatprep.subr.mxu0 0.0
        %1571 = vmatpush1.msra.mxu0 0.0
        %1572 = vmatprep.subr.mxu0 0.0
        %1573 = vmatpush1.msra.mxu0 0.0
        %1574 = vmatprep.mubr.f32.mxu0 0.0
        %1575 = vmatmul.mubr.f32.gmra.mrb[0].mxu0 %v1508
        %v1576 = vpop.f32.mrb[0].mxu0
        %v1577 = vadd.f32 0.0, %v1576
        %v1578 = vpop.f32.mrb[0].mxu0
        %v1579 = vadd.f32 0.0, %v1578
        %1580 = vdwg.mxu0
        %v1581 = vadd.f32 %v1457, %v1577
        %v1582 = vadd.f32 %v1458, %v1579
        %v1583 = vlaneseq
        %v1584 = vshrl.u32 %v1583, 7
        %v1585 = vsub.s32 6, %v1584
        %v1586 = vrot.slane %v808, %v1585
        %v1587 = vlaneseq
        %v1588 = vshrl.u32 %v1587, 7
        %v1589 = vsub.s32 6, %v1588
        %v1590 = vrot.slane %v809, %v1589
        %1593 = vrot.lane.b32.xlu0 %v1586, 16
        %v1594 = vpop.permute.xlu0 %1593
        %1595 = vrot.lane.b32.xlu0 %v1590, 16
        %v1596 = vpop.permute.xlu0 %1595
        %v1597 = vsel %vm836, %v1594, %v1596
        %v1601 = vmul.f32 %v810, %v1594
        %v1602 = vmul.f32 %v811, %v1597
        %v1603 = vmul.f32 %v816, %v1596
        %v1604 = vmul.f32 %v812, %v1594
        %v1605 = vmul.f32 %v813, %v1597
        %v1606 = vmul.f32 %v817, %v1596
        %s1607 = scalar_lea.vmem %s7, 56
        %v1608 = vld [vmem:[%s1607] sm:$0xf]
        %1615 = vrot.lane.b32.xlu0 %v1601, 112
        %v1616 = vpop.permute.xlu0 %1615
        %1617 = vrot.lane.b32.xlu0 %v1602, 112
        %v1618 = vpop.permute.xlu0 %1617
        %1619 = vrot.lane.b32.xlu0 %v1603, 112
        %v1620 = vpop.permute.xlu0 %1619
        %1621 = vrot.lane.b32.xlu0 %v1604, 112
        %v1622 = vpop.permute.xlu0 %1621
        %1623 = vrot.lane.b32.xlu0 %v1605, 112
        %v1624 = vpop.permute.xlu0 %1623
        %1625 = vrot.lane.b32.xlu0 %v1606, 112
        %v1626 = vpop.permute.xlu0 %1625
        %v1627 = vsel %vm887, %v1616, %v1618
        %v1628 = vsel %vm887, %v1618, %v1620
        %v1629 = vsel %vm887, %v1622, %v1624
        %v1630 = vsel %vm887, %v1624, %v1626
        %v1636 = vsel %vm836, %v1608, 0
        %1638 = vmatprep.subr.mxu0 %v1628
        %1639 = vmatpush1.msra.mxu0 %v1627
        %1640 = vmatprep.subr.mxu0 %v1630
        %1641 = vmatpush1.msra.mxu0 %v1629
        %1642 = vmatprep.subr.mxu0 0.0
        %1643 = vmatpush1.msra.mxu0 0.0
        %1644 = vmatprep.subr.mxu0 0.0
        %1645 = vmatpush1.msra.mxu0 0.0
        %1646 = vmatprep.subr.mxu0 0.0
        %1647 = vmatpush1.msra.mxu0 0.0
        %1648 = vmatprep.subr.mxu0 0.0
        %1649 = vmatpush1.msra.mxu0 0.0
        %1650 = vmatprep.subr.mxu0 0.0
        %1651 = vmatpush1.msra.mxu0 0.0
        %1652 = vmatprep.subr.mxu0 0.0
        %1653 = vmatpush1.msra.mxu0 0.0
        %1654 = vmatprep.subr.mxu0 0.0
        %1655 = vmatpush1.msra.mxu0 0.0
        %1656 = vmatprep.subr.mxu0 0.0
        %1657 = vmatpush1.msra.mxu0 0.0
        %1658 = vmatprep.subr.mxu0 0.0
        %1659 = vmatpush1.msra.mxu0 0.0
        %1660 = vmatprep.subr.mxu0 0.0
        %1661 = vmatpush1.msra.mxu0 0.0
        %1662 = vmatprep.subr.mxu0 0.0
        %1663 = vmatpush1.msra.mxu0 0.0
        %1664 = vmatprep.subr.mxu0 0.0
        %1665 = vmatpush1.msra.mxu0 0.0
        %1666 = vmatprep.subr.mxu0 0.0
        %1667 = vmatpush1.msra.mxu0 0.0
        %1668 = vmatprep.subr.mxu0 0.0
        %1669 = vmatpush1.msra.mxu0 0.0
        %1670 = vmatprep.subr.mxu0 0.0
        %1671 = vmatpush1.msra.mxu0 0.0
        %1672 = vmatprep.subr.mxu0 0.0
        %1673 = vmatpush1.msra.mxu0 0.0
        %1674 = vmatprep.subr.mxu0 0.0
        %1675 = vmatpush1.msra.mxu0 0.0
        %1676 = vmatprep.subr.mxu0 0.0
        %1677 = vmatpush1.msra.mxu0 0.0
        %1678 = vmatprep.subr.mxu0 0.0
        %1679 = vmatpush1.msra.mxu0 0.0
        %1680 = vmatprep.subr.mxu0 0.0
        %1681 = vmatpush1.msra.mxu0 0.0
        %1682 = vmatprep.subr.mxu0 0.0
        %1683 = vmatpush1.msra.mxu0 0.0
        %1684 = vmatprep.subr.mxu0 0.0
        %1685 = vmatpush1.msra.mxu0 0.0
        %1686 = vmatprep.subr.mxu0 0.0
        %1687 = vmatpush1.msra.mxu0 0.0
        %1688 = vmatprep.subr.mxu0 0.0
        %1689 = vmatpush1.msra.mxu0 0.0
        %1690 = vmatprep.subr.mxu0 0.0
        %1691 = vmatpush1.msra.mxu0 0.0
        %1692 = vmatprep.subr.mxu0 0.0
        %1693 = vmatpush1.msra.mxu0 0.0
        %1694 = vmatprep.subr.mxu0 0.0
        %1695 = vmatpush1.msra.mxu0 0.0
        %1696 = vmatprep.subr.mxu0 0.0
        %1697 = vmatpush1.msra.mxu0 0.0
        %1698 = vmatprep.subr.mxu0 0.0
        %1699 = vmatpush1.msra.mxu0 0.0
        %1700 = vmatprep.subr.mxu0 0.0
        %1701 = vmatpush1.msra.mxu0 0.0
        %1702 = vmatprep.mubr.f32.mxu0 0.0
        %1703 = vmatmul.mubr.f32.gmra.mrb[0].mxu0 %v1636
        %v1704 = vpop.f32.mrb[0].mxu0
        %v1705 = vadd.f32 0.0, %v1704
        %v1706 = vpop.f32.mrb[0].mxu0
        %v1707 = vadd.f32 0.0, %v1706
        %1708 = vdwg.mxu0
        %v1709 = vadd.f32 %v1581, %v1705
        %v1710 = vadd.f32 %v1582, %v1707
        %1711 = vrot.lane.b32.xlu0 %v1473, 127
        %v1712 = vpop.permute.xlu0 %1711
        %1713 = vrot.lane.b32.xlu0 %v1475, 127
        %v1714 = vpop.permute.xlu0 %1713
        %1715 = vrot.lane.b32.xlu0 %v1474, 127
        %v1716 = vpop.permute.xlu0 %1715
        %1717 = vrot.lane.b32.xlu0 %v1476, 127
        %v1718 = vpop.permute.xlu0 %1717
        %v1719 = vsel %vm1082, %v1712, %v1716
        %v1720 = vsel %vm1082, %v1714, %v1718
        %v1721 = vsel %vm1082, %v1716, %v1712
        %v1722 = vsel %vm1082, %v1718, %v1714
        %v1723 = vlaneseq
        %v1724 = vshrl.u32 %v1723, 7
        %v1725 = vsub.s32 7, %v1724
        %v1726 = vrot.slane %v808, %v1725
        %v1727 = vlaneseq
        %v1728 = vshrl.u32 %v1727, 7
        %v1729 = vsub.s32 7, %v1728
        %v1730 = vrot.slane %v809, %v1729
        %v1731 = vmul.f32 %v1719, %v1726
        %v1732 = vmul.f32 %v1721, %v1730
        %v1733 = vmul.f32 %v1720, %v1726
        %v1734 = vmul.f32 %v1722, %v1730
        %s1735 = scalar_lea.vmem %s7, 64
        %v1736 = vld [vmem:[%s1735] sm:$0xf]
        %v1738 = vsel %vm836, %v1736, 0
        %1740 = vmatprep.subr.mxu0 %v1732
        %1741 = vmatpush1.msra.mxu0 %v1731
        %1742 = vmatprep.subr.mxu0 %v1734
        %1743 = vmatpush1.msra.mxu0 %v1733
        %1744 = vmatprep.subr.mxu0 0.0
        %1745 = vmatpush1.msra.mxu0 0.0
        %1746 = vmatprep.subr.mxu0 0.0
        %1747 = vmatpush1.msra.mxu0 0.0
        %1748 = vmatprep.subr.mxu0 0.0
        %1749 = vmatpush1.msra.mxu0 0.0
        %1750 = vmatprep.subr.mxu0 0.0
        %1751 = vmatpush1.msra.mxu0 0.0
        %1752 = vmatprep.subr.mxu0 0.0
        %1753 = vmatpush1.msra.mxu0 0.0
        %1754 = vmatprep.subr.mxu0 0.0
        %1755 = vmatpush1.msra.mxu0 0.0
        %1756 = vmatprep.subr.mxu0 0.0
        %1757 = vmatpush1.msra.mxu0 0.0
        %1758 = vmatprep.subr.mxu0 0.0
        %1759 = vmatpush1.msra.mxu0 0.0
        %1760 = vmatprep.subr.mxu0 0.0
        %1761 = vmatpush1.msra.mxu0 0.0
        %1762 = vmatprep.subr.mxu0 0.0
        %1763 = vmatpush1.msra.mxu0 0.0
        %1764 = vmatprep.subr.mxu0 0.0
        %1765 = vmatpush1.msra.mxu0 0.0
        %1766 = vmatprep.subr.mxu0 0.0
        %1767 = vmatpush1.msra.mxu0 0.0
        %1768 = vmatprep.subr.mxu0 0.0
        %1769 = vmatpush1.msra.mxu0 0.0
        %1770 = vmatprep.subr.mxu0 0.0
        %1771 = vmatpush1.msra.mxu0 0.0
        %1772 = vmatprep.subr.mxu0 0.0
        %1773 = vmatpush1.msra.mxu0 0.0
        %1774 = vmatprep.subr.mxu0 0.0
        %1775 = vmatpush1.msra.mxu0 0.0
        %1776 = vmatprep.subr.mxu0 0.0
        %1777 = vmatpush1.msra.mxu0 0.0
        %1778 = vmatprep.subr.mxu0 0.0
        %1779 = vmatpush1.msra.mxu0 0.0
        %1780 = vmatprep.subr.mxu0 0.0
        %1781 = vmatpush1.msra.mxu0 0.0
        %1782 = vmatprep.subr.mxu0 0.0
        %1783 = vmatpush1.msra.mxu0 0.0
        %1784 = vmatprep.subr.mxu0 0.0
        %1785 = vmatpush1.msra.mxu0 0.0
        %1786 = vmatprep.subr.mxu0 0.0
        %1787 = vmatpush1.msra.mxu0 0.0
        %1788 = vmatprep.subr.mxu0 0.0
        %1789 = vmatpush1.msra.mxu0 0.0
        %1790 = vmatprep.subr.mxu0 0.0
        %1791 = vmatpush1.msra.mxu0 0.0
        %1792 = vmatprep.subr.mxu0 0.0
        %1793 = vmatpush1.msra.mxu0 0.0
        %1794 = vmatprep.subr.mxu0 0.0
        %1795 = vmatpush1.msra.mxu0 0.0
        %1796 = vmatprep.subr.mxu0 0.0
        %1797 = vmatpush1.msra.mxu0 0.0
        %1798 = vmatprep.subr.mxu0 0.0
        %1799 = vmatpush1.msra.mxu0 0.0
        %1800 = vmatprep.subr.mxu0 0.0
        %1801 = vmatpush1.msra.mxu0 0.0
        %1802 = vmatprep.subr.mxu0 0.0
        %1803 = vmatpush1.msra.mxu0 0.0
        %1804 = vmatprep.mubr.f32.mxu0 0.0
        %1805 = vmatmul.mubr.f32.gmra.mrb[0].mxu0 %v1738
        %v1806 = vpop.f32.mrb[0].mxu0
        %v1807 = vadd.f32 0.0, %v1806
        %v1808 = vpop.f32.mrb[0].mxu0
        %v1809 = vadd.f32 0.0, %v1808
        %1810 = vdwg.mxu0
        %v1811 = vadd.f32 %v1709, %v1807
        %v1812 = vadd.f32 %v1710, %v1809
        %v1813 = vld [vmem:[%s689] sm:$0xff]
        %v1814 = vld [vmem:[%s689 + $0x8] sm:$0xff]
        %v1815 = vld [vmem:[%s689 + $0x10] sm:$0xff]
        %v1816 = vld [vmem:[%s689 + $0x18] sm:$0xff]
        %v1817 = vld [vmem:[%s697] sm:$0xff]
        %v1818 = vld [vmem:[%s697 + $0x8] sm:$0xff]
        %v1819 = vld [vmem:[%s705] sm:$0xff]
        %v1820 = vld [vmem:[%s705 + $0x8] sm:$0xff]
        %1827 = vrot.lane.b32.xlu0 %v1817, 16
        %v1828 = vpop.permute.xlu0 %1827
        %1829 = vrot.lane.b32.xlu0 %v1813, 16
        %v1830 = vpop.permute.xlu0 %1829
        %1831 = vrot.lane.b32.xlu0 %v1814, 16
        %v1832 = vpop.permute.xlu0 %1831
        %1833 = vrot.lane.b32.xlu0 %v1818, 16
        %v1834 = vpop.permute.xlu0 %1833
        %1835 = vrot.lane.b32.xlu0 %v1815, 16
        %v1836 = vpop.permute.xlu0 %1835
        %1837 = vrot.lane.b32.xlu0 %v1816, 16
        %v1838 = vpop.permute.xlu0 %1837
        %v1839 = vsel %vm836, %v1828, %v1830
        %v1840 = vsel %vm836, %v1830, %v1832
        %v1841 = vsel %vm836, %v1834, %v1836
        %v1842 = vsel %vm836, %v1836, %v1838
        %1847 = vrot.lane.b32.xlu0 %v1839, 1
        %v1848 = vpop.permute.xlu0 %1847
        %1849 = vrot.lane.b32.xlu0 %v1841, 1
        %v1850 = vpop.permute.xlu0 %1849
        %1851 = vrot.lane.b32.xlu0 %v1840, 1
        %v1852 = vpop.permute.xlu0 %1851
        %1853 = vrot.lane.b32.xlu0 %v1842, 1
        %v1854 = vpop.permute.xlu0 %1853
        %v1855 = vsel %vm855, %v1848, %v1852
        %v1856 = vsel %vm855, %v1850, %v1854
        %v1857 = vsel %vm855, %v1852, %v1848
        %v1858 = vsel %vm855, %v1854, %v1850
        %v1859 = vmul.f32 %v1857, %v863
        %v1860 = vmul.f32 %v1855, %v867
        %v1861 = vmul.f32 %v1858, %v863
        %v1862 = vmul.f32 %v1856, %v867
        %s1863 = scalar_lea.vmem %s7, 4
        %v1864 = vld [vmem:[%s1863] sm:$0xf]
        %v1866 = vsel %vm836, %v1864, 0
        %1868 = vmatprep.subr.mxu0 %v1860
        %1869 = vmatpush1.msra.mxu0 %v1859
        %1870 = vmatprep.subr.mxu0 %v1862
        %1871 = vmatpush1.msra.mxu0 %v1861
        %1872 = vmatprep.subr.mxu0 0.0
        %1873 = vmatpush1.msra.mxu0 0.0
        %1874 = vmatprep.subr.mxu0 0.0
        %1875 = vmatpush1.msra.mxu0 0.0
        %1876 = vmatprep.subr.mxu0 0.0
        %1877 = vmatpush1.msra.mxu0 0.0
        %1878 = vmatprep.subr.mxu0 0.0
        %1879 = vmatpush1.msra.mxu0 0.0
        %1880 = vmatprep.subr.mxu0 0.0
        %1881 = vmatpush1.msra.mxu0 0.0
        %1882 = vmatprep.subr.mxu0 0.0
        %1883 = vmatpush1.msra.mxu0 0.0
        %1884 = vmatprep.subr.mxu0 0.0
        %1885 = vmatpush1.msra.mxu0 0.0
        %1886 = vmatprep.subr.mxu0 0.0
        %1887 = vmatpush1.msra.mxu0 0.0
        %1888 = vmatprep.subr.mxu0 0.0
        %1889 = vmatpush1.msra.mxu0 0.0
        %1890 = vmatprep.subr.mxu0 0.0
        %1891 = vmatpush1.msra.mxu0 0.0
        %1892 = vmatprep.subr.mxu0 0.0
        %1893 = vmatpush1.msra.mxu0 0.0
        %1894 = vmatprep.subr.mxu0 0.0
        %1895 = vmatpush1.msra.mxu0 0.0
        %1896 = vmatprep.subr.mxu0 0.0
        %1897 = vmatpush1.msra.mxu0 0.0
        %1898 = vmatprep.subr.mxu0 0.0
        %1899 = vmatpush1.msra.mxu0 0.0
        %1900 = vmatprep.subr.mxu0 0.0
        %1901 = vmatpush1.msra.mxu0 0.0
        %1902 = vmatprep.subr.mxu0 0.0
        %1903 = vmatpush1.msra.mxu0 0.0
        %1904 = vmatprep.subr.mxu0 0.0
        %1905 = vmatpush1.msra.mxu0 0.0
        %1906 = vmatprep.subr.mxu0 0.0
        %1907 = vmatpush1.msra.mxu0 0.0
        %1908 = vmatprep.subr.mxu0 0.0
        %1909 = vmatpush1.msra.mxu0 0.0
        %1910 = vmatprep.subr.mxu0 0.0
        %1911 = vmatpush1.msra.mxu0 0.0
        %1912 = vmatprep.subr.mxu0 0.0
        %1913 = vmatpush1.msra.mxu0 0.0
        %1914 = vmatprep.subr.mxu0 0.0
        %1915 = vmatpush1.msra.mxu0 0.0
        %1916 = vmatprep.subr.mxu0 0.0
        %1917 = vmatpush1.msra.mxu0 0.0
        %1918 = vmatprep.subr.mxu0 0.0
        %1919 = vmatpush1.msra.mxu0 0.0
        %1920 = vmatprep.subr.mxu0 0.0
        %1921 = vmatpush1.msra.mxu0 0.0
        %1922 = vmatprep.subr.mxu0 0.0
        %1923 = vmatpush1.msra.mxu0 0.0
        %1924 = vmatprep.subr.mxu0 0.0
        %1925 = vmatpush1.msra.mxu0 0.0
        %1926 = vmatprep.subr.mxu0 0.0
        %1927 = vmatpush1.msra.mxu0 0.0
        %1928 = vmatprep.subr.mxu0 0.0
        %1929 = vmatpush1.msra.mxu0 0.0
        %1930 = vmatprep.subr.mxu0 0.0
        %1931 = vmatpush1.msra.mxu0 0.0
        %1932 = vmatprep.mubr.f32.mxu0 0.0
        %1933 = vmatmul.mubr.f32.gmra.mrb[0].mxu0 %v1866
        %v1934 = vpop.f32.mrb[0].mxu0
        %v1935 = vadd.f32 0.0, %v1934
        %v1936 = vpop.f32.mrb[0].mxu0
        %v1937 = vadd.f32 0.0, %v1936
        %1938 = vdwg.mxu0
        %v1939 = vadd.f32 %v1811, %v1935
        %v1940 = vadd.f32 %v1812, %v1937
        %v1941 = vmul.f32 %v1817, %v884
        %v1942 = vmul.f32 %v1813, %v888
        %v1943 = vmul.f32 %v1814, %v886
        %v1944 = vmul.f32 %v1818, %v884
        %v1945 = vmul.f32 %v1815, %v888
        %v1946 = vmul.f32 %v1816, %v886
        %s1947 = scalar_lea.vmem %s7, 12
        %v1948 = vld [vmem:[%s1947] sm:$0xf]
        %1955 = vrot.lane.b32.xlu0 %v1941, 16
        %v1956 = vpop.permute.xlu0 %1955
        %1957 = vrot.lane.b32.xlu0 %v1942, 16
        %v1958 = vpop.permute.xlu0 %1957
        %1959 = vrot.lane.b32.xlu0 %v1943, 16
        %v1960 = vpop.permute.xlu0 %1959
        %1961 = vrot.lane.b32.xlu0 %v1944, 16
        %v1962 = vpop.permute.xlu0 %1961
        %1963 = vrot.lane.b32.xlu0 %v1945, 16
        %v1964 = vpop.permute.xlu0 %1963
        %1965 = vrot.lane.b32.xlu0 %v1946, 16
        %v1966 = vpop.permute.xlu0 %1965
        %v1967 = vsel %vm836, %v1956, %v1958
        %v1968 = vsel %vm836, %v1958, %v1960
        %v1969 = vsel %vm836, %v1962, %v1964
        %v1970 = vsel %vm836, %v1964, %v1966
        %v1976 = vsel %vm836, %v1948, 0
        %1978 = vmatprep.subr.mxu0 %v1968
        %1979 = vmatpush1.msra.mxu0 %v1967
        %1980 = vmatprep.subr.mxu0 %v1970
        %1981 = vmatpush1.msra.mxu0 %v1969
        %1982 = vmatprep.subr.mxu0 0.0
        %1983 = vmatpush1.msra.mxu0 0.0
        %1984 = vmatprep.subr.mxu0 0.0
        %1985 = vmatpush1.msra.mxu0 0.0
        %1986 = vmatprep.subr.mxu0 0.0
        %1987 = vmatpush1.msra.mxu0 0.0
        %1988 = vmatprep.subr.mxu0 0.0
        %1989 = vmatpush1.msra.mxu0 0.0
        %1990 = vmatprep.subr.mxu0 0.0
        %1991 = vmatpush1.msra.mxu0 0.0
        %1992 = vmatprep.subr.mxu0 0.0
        %1993 = vmatpush1.msra.mxu0 0.0
        %1994 = vmatprep.subr.mxu0 0.0
        %1995 = vmatpush1.msra.mxu0 0.0
        %1996 = vmatprep.subr.mxu0 0.0
        %1997 = vmatpush1.msra.mxu0 0.0
        %1998 = vmatprep.subr.mxu0 0.0
        %1999 = vmatpush1.msra.mxu0 0.0
        %2000 = vmatprep.subr.mxu0 0.0
        %2001 = vmatpush1.msra.mxu0 0.0
        %2002 = vmatprep.subr.mxu0 0.0
        %2003 = vmatpush1.msra.mxu0 0.0
        %2004 = vmatprep.subr.mxu0 0.0
        %2005 = vmatpush1.msra.mxu0 0.0
        %2006 = vmatprep.subr.mxu0 0.0
        %2007 = vmatpush1.msra.mxu0 0.0
        %2008 = vmatprep.subr.mxu0 0.0
        %2009 = vmatpush1.msra.mxu0 0.0
        %2010 = vmatprep.subr.mxu0 0.0
        %2011 = vmatpush1.msra.mxu0 0.0
        %2012 = vmatprep.subr.mxu0 0.0
        %2013 = vmatpush1.msra.mxu0 0.0
        %2014 = vmatprep.subr.mxu0 0.0
        %2015 = vmatpush1.msra.mxu0 0.0
        %2016 = vmatprep.subr.mxu0 0.0
        %2017 = vmatpush1.msra.mxu0 0.0
        %2018 = vmatprep.subr.mxu0 0.0
        %2019 = vmatpush1.msra.mxu0 0.0
        %2020 = vmatprep.subr.mxu0 0.0
        %2021 = vmatpush1.msra.mxu0 0.0
        %2022 = vmatprep.subr.mxu0 0.0
        %2023 = vmatpush1.msra.mxu0 0.0
        %2024 = vmatprep.subr.mxu0 0.0
        %2025 = vmatpush1.msra.mxu0 0.0
        %2026 = vmatprep.subr.mxu0 0.0
        %2027 = vmatpush1.msra.mxu0 0.0
        %2028 = vmatprep.subr.mxu0 0.0
        %2029 = vmatpush1.msra.mxu0 0.0
        %2030 = vmatprep.subr.mxu0 0.0
        %2031 = vmatpush1.msra.mxu0 0.0
        %2032 = vmatprep.subr.mxu0 0.0
        %2033 = vmatpush1.msra.mxu0 0.0
        %2034 = vmatprep.subr.mxu0 0.0
        %2035 = vmatpush1.msra.mxu0 0.0
        %2036 = vmatprep.subr.mxu0 0.0
        %2037 = vmatpush1.msra.mxu0 0.0
        %2038 = vmatprep.subr.mxu0 0.0
        %2039 = vmatpush1.msra.mxu0 0.0
        %2040 = vmatprep.subr.mxu0 0.0
        %2041 = vmatpush1.msra.mxu0 0.0
        %2042 = vmatprep.mubr.f32.mxu0 0.0
        %2043 = vmatmul.mubr.f32.gmra.mrb[0].mxu0 %v1976
        %v2044 = vpop.f32.mrb[0].mxu0
        %v2045 = vadd.f32 0.0, %v2044
        %v2046 = vpop.f32.mrb[0].mxu0
        %v2047 = vadd.f32 0.0, %v2046
        %2048 = vdwg.mxu0
        %v2049 = vadd.f32 %v1939, %v2045
        %v2050 = vadd.f32 %v1940, %v2047
        %2051 = vrot.lane.b32.xlu0 %v1839, 127
        %v2052 = vpop.permute.xlu0 %2051
        %2053 = vrot.lane.b32.xlu0 %v1841, 127
        %v2054 = vpop.permute.xlu0 %2053
        %2055 = vrot.lane.b32.xlu0 %v1840, 127
        %v2056 = vpop.permute.xlu0 %2055
        %2057 = vrot.lane.b32.xlu0 %v1842, 127
        %v2058 = vpop.permute.xlu0 %2057
        %v2059 = vsel %vm1082, %v2052, %v2056
        %v2060 = vsel %vm1082, %v2054, %v2058
        %v2061 = vsel %vm1082, %v2056, %v2052
        %v2062 = vsel %vm1082, %v2058, %v2054
        %v2063 = vmul.f32 %v2059, %v1090
        %v2064 = vmul.f32 %v2061, %v1094
        %v2065 = vmul.f32 %v2060, %v1090
        %v2066 = vmul.f32 %v2062, %v1094
        %s2067 = scalar_lea.vmem %s7, 20
        %v2068 = vld [vmem:[%s2067] sm:$0xf]
        %v2070 = vsel %vm836, %v2068, 0
        %2072 = vmatprep.subr.mxu0 %v2064
        %2073 = vmatpush1.msra.mxu0 %v2063
        %2074 = vmatprep.subr.mxu0 %v2066
        %2075 = vmatpush1.msra.mxu0 %v2065
        %2076 = vmatprep.subr.mxu0 0.0
        %2077 = vmatpush1.msra.mxu0 0.0
        %2078 = vmatprep.subr.mxu0 0.0
        %2079 = vmatpush1.msra.mxu0 0.0
        %2080 = vmatprep.subr.mxu0 0.0
        %2081 = vmatpush1.msra.mxu0 0.0
        %2082 = vmatprep.subr.mxu0 0.0
        %2083 = vmatpush1.msra.mxu0 0.0
        %2084 = vmatprep.subr.mxu0 0.0
        %2085 = vmatpush1.msra.mxu0 0.0
        %2086 = vmatprep.subr.mxu0 0.0
        %2087 = vmatpush1.msra.mxu0 0.0
        %2088 = vmatprep.subr.mxu0 0.0
        %2089 = vmatpush1.msra.mxu0 0.0
        %2090 = vmatprep.subr.mxu0 0.0
        %2091 = vmatpush1.msra.mxu0 0.0
        %2092 = vmatprep.subr.mxu0 0.0
        %2093 = vmatpush1.msra.mxu0 0.0
        %2094 = vmatprep.subr.mxu0 0.0
        %2095 = vmatpush1.msra.mxu0 0.0
        %2096 = vmatprep.subr.mxu0 0.0
        %2097 = vmatpush1.msra.mxu0 0.0
        %2098 = vmatprep.subr.mxu0 0.0
        %2099 = vmatpush1.msra.mxu0 0.0
        %2100 = vmatprep.subr.mxu0 0.0
        %2101 = vmatpush1.msra.mxu0 0.0
        %2102 = vmatprep.subr.mxu0 0.0
        %2103 = vmatpush1.msra.mxu0 0.0
        %2104 = vmatprep.subr.mxu0 0.0
        %2105 = vmatpush1.msra.mxu0 0.0
        %2106 = vmatprep.subr.mxu0 0.0
        %2107 = vmatpush1.msra.mxu0 0.0
        %2108 = vmatprep.subr.mxu0 0.0
        %2109 = vmatpush1.msra.mxu0 0.0
        %2110 = vmatprep.subr.mxu0 0.0
        %2111 = vmatpush1.msra.mxu0 0.0
        %2112 = vmatprep.subr.mxu0 0.0
        %2113 = vmatpush1.msra.mxu0 0.0
        %2114 = vmatprep.subr.mxu0 0.0
        %2115 = vmatpush1.msra.mxu0 0.0
        %2116 = vmatprep.subr.mxu0 0.0
        %2117 = vmatpush1.msra.mxu0 0.0
        %2118 = vmatprep.subr.mxu0 0.0
        %2119 = vmatpush1.msra.mxu0 0.0
        %2120 = vmatprep.subr.mxu0 0.0
        %2121 = vmatpush1.msra.mxu0 0.0
        %2122 = vmatprep.subr.mxu0 0.0
        %2123 = vmatpush1.msra.mxu0 0.0
        %2124 = vmatprep.subr.mxu0 0.0
        %2125 = vmatpush1.msra.mxu0 0.0
        %2126 = vmatprep.subr.mxu0 0.0
        %2127 = vmatpush1.msra.mxu0 0.0
        %2128 = vmatprep.subr.mxu0 0.0
        %2129 = vmatpush1.msra.mxu0 0.0
        %2130 = vmatprep.subr.mxu0 0.0
        %2131 = vmatpush1.msra.mxu0 0.0
        %2132 = vmatprep.subr.mxu0 0.0
        %2133 = vmatpush1.msra.mxu0 0.0
        %2134 = vmatprep.subr.mxu0 0.0
        %2135 = vmatpush1.msra.mxu0 0.0
        %2136 = vmatprep.mubr.f32.mxu0 0.0
        %2137 = vmatmul.mubr.f32.gmra.mrb[0].mxu0 %v2070
        %v2138 = vpop.f32.mrb[0].mxu0
        %v2139 = vadd.f32 0.0, %v2138
        %v2140 = vpop.f32.mrb[0].mxu0
        %v2141 = vadd.f32 0.0, %v2140
        %2142 = vdwg.mxu0
        %v2143 = vadd.f32 %v2049, %v2139
        %v2144 = vadd.f32 %v2050, %v2141
        %2145 = vrot.lane.b32.xlu0 %v1813, 1
        %v2146 = vpop.permute.xlu0 %2145
        %2147 = vrot.lane.b32.xlu0 %v1815, 1
        %v2148 = vpop.permute.xlu0 %2147
        %2149 = vrot.lane.b32.xlu0 %v1814, 1
        %v2150 = vpop.permute.xlu0 %2149
        %2151 = vrot.lane.b32.xlu0 %v1816, 1
        %v2152 = vpop.permute.xlu0 %2151
        %v2153 = vsel %vm855, %v2146, %v2150
        %v2154 = vsel %vm855, %v2148, %v2152
        %v2155 = vsel %vm855, %v2150, %v2146
        %v2156 = vsel %vm855, %v2152, %v2148
        %v2157 = vmul.f32 %v2155, %v1192
        %v2158 = vmul.f32 %v2153, %v1196
        %v2159 = vmul.f32 %v2156, %v1192
        %v2160 = vmul.f32 %v2154, %v1196
        %s2161 = scalar_lea.vmem %s7, 28
        %v2162 = vld [vmem:[%s2161] sm:$0xf]
        %v2164 = vsel %vm836, %v2162, 0
        %2166 = vmatprep.subr.mxu0 %v2158
        %2167 = vmatpush1.msra.mxu0 %v2157
        %2168 = vmatprep.subr.mxu0 %v2160
        %2169 = vmatpush1.msra.mxu0 %v2159
        %2170 = vmatprep.subr.mxu0 0.0
        %2171 = vmatpush1.msra.mxu0 0.0
        %2172 = vmatprep.subr.mxu0 0.0
        %2173 = vmatpush1.msra.mxu0 0.0
        %2174 = vmatprep.subr.mxu0 0.0
        %2175 = vmatpush1.msra.mxu0 0.0
        %2176 = vmatprep.subr.mxu0 0.0
        %2177 = vmatpush1.msra.mxu0 0.0
        %2178 = vmatprep.subr.mxu0 0.0
        %2179 = vmatpush1.msra.mxu0 0.0
        %2180 = vmatprep.subr.mxu0 0.0
        %2181 = vmatpush1.msra.mxu0 0.0
        %2182 = vmatprep.subr.mxu0 0.0
        %2183 = vmatpush1.msra.mxu0 0.0
        %2184 = vmatprep.subr.mxu0 0.0
        %2185 = vmatpush1.msra.mxu0 0.0
        %2186 = vmatprep.subr.mxu0 0.0
        %2187 = vmatpush1.msra.mxu0 0.0
        %2188 = vmatprep.subr.mxu0 0.0
        %2189 = vmatpush1.msra.mxu0 0.0
        %2190 = vmatprep.subr.mxu0 0.0
        %2191 = vmatpush1.msra.mxu0 0.0
        %2192 = vmatprep.subr.mxu0 0.0
        %2193 = vmatpush1.msra.mxu0 0.0
        %2194 = vmatprep.subr.mxu0 0.0
        %2195 = vmatpush1.msra.mxu0 0.0
        %2196 = vmatprep.subr.mxu0 0.0
        %2197 = vmatpush1.msra.mxu0 0.0
        %2198 = vmatprep.subr.mxu0 0.0
        %2199 = vmatpush1.msra.mxu0 0.0
        %2200 = vmatprep.subr.mxu0 0.0
        %2201 = vmatpush1.msra.mxu0 0.0
        %2202 = vmatprep.subr.mxu0 0.0
        %2203 = vmatpush1.msra.mxu0 0.0
        %2204 = vmatprep.subr.mxu0 0.0
        %2205 = vmatpush1.msra.mxu0 0.0
        %2206 = vmatprep.subr.mxu0 0.0
        %2207 = vmatpush1.msra.mxu0 0.0
        %2208 = vmatprep.subr.mxu0 0.0
        %2209 = vmatpush1.msra.mxu0 0.0
        %2210 = vmatprep.subr.mxu0 0.0
        %2211 = vmatpush1.msra.mxu0 0.0
        %2212 = vmatprep.subr.mxu0 0.0
        %2213 = vmatpush1.msra.mxu0 0.0
        %2214 = vmatprep.subr.mxu0 0.0
        %2215 = vmatpush1.msra.mxu0 0.0
        %2216 = vmatprep.subr.mxu0 0.0
        %2217 = vmatpush1.msra.mxu0 0.0
        %2218 = vmatprep.subr.mxu0 0.0
        %2219 = vmatpush1.msra.mxu0 0.0
        %2220 = vmatprep.subr.mxu0 0.0
        %2221 = vmatpush1.msra.mxu0 0.0
        %2222 = vmatprep.subr.mxu0 0.0
        %2223 = vmatpush1.msra.mxu0 0.0
        %2224 = vmatprep.subr.mxu0 0.0
        %2225 = vmatpush1.msra.mxu0 0.0
        %2226 = vmatprep.subr.mxu0 0.0
        %2227 = vmatpush1.msra.mxu0 0.0
        %2228 = vmatprep.subr.mxu0 0.0
        %2229 = vmatpush1.msra.mxu0 0.0
        %2230 = vmatprep.mubr.f32.mxu0 0.0
        %2231 = vmatmul.mubr.f32.gmra.mrb[0].mxu0 %v2164
        %v2232 = vpop.f32.mrb[0].mxu0
        %v2233 = vadd.f32 0.0, %v2232
        %v2234 = vpop.f32.mrb[0].mxu0
        %v2235 = vadd.f32 0.0, %v2234
        %2236 = vdwg.mxu0
        %v2237 = vadd.f32 %v2143, %v2233
        %v2238 = vadd.f32 %v2144, %v2235
        %s2239 = scalar_lea.vmem %s7, 36
        %v2240 = vld [vmem:[%s2239] sm:$0xf]
        %v2242 = vsel %vm836, %v2240, 0
        %2244 = vmatprep.subr.mxu0 %v1814
        %2245 = vmatpush1.msra.mxu0 %v1813
        %2246 = vmatprep.subr.mxu0 %v1816
        %2247 = vmatpush1.msra.mxu0 %v1815
        %2248 = vmatprep.subr.mxu0 0.0
        %2249 = vmatpush1.msra.mxu0 0.0
        %2250 = vmatprep.subr.mxu0 0.0
        %2251 = vmatpush1.msra.mxu0 0.0
        %2252 = vmatprep.subr.mxu0 0.0
        %2253 = vmatpush1.msra.mxu0 0.0
        %2254 = vmatprep.subr.mxu0 0.0
        %2255 = vmatpush1.msra.mxu0 0.0
        %2256 = vmatprep.subr.mxu0 0.0
        %2257 = vmatpush1.msra.mxu0 0.0
        %2258 = vmatprep.subr.mxu0 0.0
        %2259 = vmatpush1.msra.mxu0 0.0
        %2260 = vmatprep.subr.mxu0 0.0
        %2261 = vmatpush1.msra.mxu0 0.0
        %2262 = vmatprep.subr.mxu0 0.0
        %2263 = vmatpush1.msra.mxu0 0.0
        %2264 = vmatprep.subr.mxu0 0.0
        %2265 = vmatpush1.msra.mxu0 0.0
        %2266 = vmatprep.subr.mxu0 0.0
        %2267 = vmatpush1.msra.mxu0 0.0
        %2268 = vmatprep.subr.mxu0 0.0
        %2269 = vmatpush1.msra.mxu0 0.0
        %2270 = vmatprep.subr.mxu0 0.0
        %2271 = vmatpush1.msra.mxu0 0.0
        %2272 = vmatprep.subr.mxu0 0.0
        %2273 = vmatpush1.msra.mxu0 0.0
        %2274 = vmatprep.subr.mxu0 0.0
        %2275 = vmatpush1.msra.mxu0 0.0
        %2276 = vmatprep.subr.mxu0 0.0
        %2277 = vmatpush1.msra.mxu0 0.0
        %2278 = vmatprep.subr.mxu0 0.0
        %2279 = vmatpush1.msra.mxu0 0.0
        %2280 = vmatprep.subr.mxu0 0.0
        %2281 = vmatpush1.msra.mxu0 0.0
        %2282 = vmatprep.subr.mxu0 0.0
        %2283 = vmatpush1.msra.mxu0 0.0
        %2284 = vmatprep.subr.mxu0 0.0
        %2285 = vmatpush1.msra.mxu0 0.0
        %2286 = vmatprep.subr.mxu0 0.0
        %2287 = vmatpush1.msra.mxu0 0.0
        %2288 = vmatprep.subr.mxu0 0.0
        %2289 = vmatpush1.msra.mxu0 0.0
        %2290 = vmatprep.subr.mxu0 0.0
        %2291 = vmatpush1.msra.mxu0 0.0
        %2292 = vmatprep.subr.mxu0 0.0
        %2293 = vmatpush1.msra.mxu0 0.0
        %2294 = vmatprep.subr.mxu0 0.0
        %2295 = vmatpush1.msra.mxu0 0.0
        %2296 = vmatprep.subr.mxu0 0.0
        %2297 = vmatpush1.msra.mxu0 0.0
        %2298 = vmatprep.subr.mxu0 0.0
        %2299 = vmatpush1.msra.mxu0 0.0
        %2300 = vmatprep.subr.mxu0 0.0
        %2301 = vmatpush1.msra.mxu0 0.0
        %2302 = vmatprep.subr.mxu0 0.0
        %2303 = vmatpush1.msra.mxu0 0.0
        %2304 = vmatprep.subr.mxu0 0.0
        %2305 = vmatpush1.msra.mxu0 0.0
        %2306 = vmatprep.subr.mxu0 0.0
        %2307 = vmatpush1.msra.mxu0 0.0
        %2308 = vmatprep.mubr.f32.mxu0 0.0
        %2309 = vmatmul.mubr.f32.gmra.mrb[0].mxu0 %v2242
        %v2310 = vpop.f32.mrb[0].mxu0
        %v2311 = vadd.f32 0.0, %v2310
        %v2312 = vpop.f32.mrb[0].mxu0
        %v2313 = vadd.f32 0.0, %v2312
        %2314 = vdwg.mxu0
        %v2315 = vadd.f32 %v2237, %v2311
        %v2316 = vadd.f32 %v2238, %v2313
        %2317 = vrot.lane.b32.xlu0 %v1813, 127
        %v2318 = vpop.permute.xlu0 %2317
        %2319 = vrot.lane.b32.xlu0 %v1815, 127
        %v2320 = vpop.permute.xlu0 %2319
        %2321 = vrot.lane.b32.xlu0 %v1814, 127
        %v2322 = vpop.permute.xlu0 %2321
        %2323 = vrot.lane.b32.xlu0 %v1816, 127
        %v2324 = vpop.permute.xlu0 %2323
        %v2325 = vsel %vm1082, %v2318, %v2322
        %v2326 = vsel %vm1082, %v2320, %v2324
        %v2327 = vsel %vm1082, %v2322, %v2318
        %v2328 = vsel %vm1082, %v2324, %v2320
        %v2329 = vmul.f32 %v2325, %v1372
        %v2330 = vmul.f32 %v2327, %v1376
        %v2331 = vmul.f32 %v2326, %v1372
        %v2332 = vmul.f32 %v2328, %v1376
        %s2333 = scalar_lea.vmem %s7, 44
        %v2334 = vld [vmem:[%s2333] sm:$0xf]
        %v2336 = vsel %vm836, %v2334, 0
        %2338 = vmatprep.subr.mxu0 %v2330
        %2339 = vmatpush1.msra.mxu0 %v2329
        %2340 = vmatprep.subr.mxu0 %v2332
        %2341 = vmatpush1.msra.mxu0 %v2331
        %2342 = vmatprep.subr.mxu0 0.0
        %2343 = vmatpush1.msra.mxu0 0.0
        %2344 = vmatprep.subr.mxu0 0.0
        %2345 = vmatpush1.msra.mxu0 0.0
        %2346 = vmatprep.subr.mxu0 0.0
        %2347 = vmatpush1.msra.mxu0 0.0
        %2348 = vmatprep.subr.mxu0 0.0
        %2349 = vmatpush1.msra.mxu0 0.0
        %2350 = vmatprep.subr.mxu0 0.0
        %2351 = vmatpush1.msra.mxu0 0.0
        %2352 = vmatprep.subr.mxu0 0.0
        %2353 = vmatpush1.msra.mxu0 0.0
        %2354 = vmatprep.subr.mxu0 0.0
        %2355 = vmatpush1.msra.mxu0 0.0
        %2356 = vmatprep.subr.mxu0 0.0
        %2357 = vmatpush1.msra.mxu0 0.0
        %2358 = vmatprep.subr.mxu0 0.0
        %2359 = vmatpush1.msra.mxu0 0.0
        %2360 = vmatprep.subr.mxu0 0.0
        %2361 = vmatpush1.msra.mxu0 0.0
        %2362 = vmatprep.subr.mxu0 0.0
        %2363 = vmatpush1.msra.mxu0 0.0
        %2364 = vmatprep.subr.mxu0 0.0
        %2365 = vmatpush1.msra.mxu0 0.0
        %2366 = vmatprep.subr.mxu0 0.0
        %2367 = vmatpush1.msra.mxu0 0.0
        %2368 = vmatprep.subr.mxu0 0.0
        %2369 = vmatpush1.msra.mxu0 0.0
        %2370 = vmatprep.subr.mxu0 0.0
        %2371 = vmatpush1.msra.mxu0 0.0
        %2372 = vmatprep.subr.mxu0 0.0
        %2373 = vmatpush1.msra.mxu0 0.0
        %2374 = vmatprep.subr.mxu0 0.0
        %2375 = vmatpush1.msra.mxu0 0.0
        %2376 = vmatprep.subr.mxu0 0.0
        %2377 = vmatpush1.msra.mxu0 0.0
        %2378 = vmatprep.subr.mxu0 0.0
        %2379 = vmatpush1.msra.mxu0 0.0
        %2380 = vmatprep.subr.mxu0 0.0
        %2381 = vmatpush1.msra.mxu0 0.0
        %2382 = vmatprep.subr.mxu0 0.0
        %2383 = vmatpush1.msra.mxu0 0.0
        %2384 = vmatprep.subr.mxu0 0.0
        %2385 = vmatpush1.msra.mxu0 0.0
        %2386 = vmatprep.subr.mxu0 0.0
        %2387 = vmatpush1.msra.mxu0 0.0
        %2388 = vmatprep.subr.mxu0 0.0
        %2389 = vmatpush1.msra.mxu0 0.0
        %2390 = vmatprep.subr.mxu0 0.0
        %2391 = vmatpush1.msra.mxu0 0.0
        %2392 = vmatprep.subr.mxu0 0.0
        %2393 = vmatpush1.msra.mxu0 0.0
        %2394 = vmatprep.subr.mxu0 0.0
        %2395 = vmatpush1.msra.mxu0 0.0
        %2396 = vmatprep.subr.mxu0 0.0
        %2397 = vmatpush1.msra.mxu0 0.0
        %2398 = vmatprep.subr.mxu0 0.0
        %2399 = vmatpush1.msra.mxu0 0.0
        %2400 = vmatprep.subr.mxu0 0.0
        %2401 = vmatpush1.msra.mxu0 0.0
        %2402 = vmatprep.mubr.f32.mxu0 0.0
        %2403 = vmatmul.mubr.f32.gmra.mrb[0].mxu0 %v2336
        %v2404 = vpop.f32.mrb[0].mxu0
        %v2405 = vadd.f32 0.0, %v2404
        %v2406 = vpop.f32.mrb[0].mxu0
        %v2407 = vadd.f32 0.0, %v2406
        %2408 = vdwg.mxu0
        %v2409 = vadd.f32 %v2315, %v2405
        %v2410 = vadd.f32 %v2316, %v2407
        %2413 = vrot.lane.b32.xlu0 %v1813, 112
        %v2414 = vpop.permute.xlu0 %2413
        %2415 = vrot.lane.b32.xlu0 %v1814, 112
        %v2416 = vpop.permute.xlu0 %2415
        %2417 = vrot.lane.b32.xlu0 %v1819, 112
        %v2418 = vpop.permute.xlu0 %2417
        %2419 = vrot.lane.b32.xlu0 %v1815, 112
        %v2420 = vpop.permute.xlu0 %2419
        %2421 = vrot.lane.b32.xlu0 %v1816, 112
        %v2422 = vpop.permute.xlu0 %2421
        %2423 = vrot.lane.b32.xlu0 %v1820, 112
        %v2424 = vpop.permute.xlu0 %2423
        %v2425 = vsel %vm887, %v2414, %v2416
        %v2426 = vsel %vm887, %v2416, %v2418
        %v2427 = vsel %vm887, %v2420, %v2422
        %v2428 = vsel %vm887, %v2422, %v2424
        %2433 = vrot.lane.b32.xlu0 %v2425, 1
        %v2434 = vpop.permute.xlu0 %2433
        %2435 = vrot.lane.b32.xlu0 %v2427, 1
        %v2436 = vpop.permute.xlu0 %2435
        %2437 = vrot.lane.b32.xlu0 %v2426, 1
        %v2438 = vpop.permute.xlu0 %2437
        %2439 = vrot.lane.b32.xlu0 %v2428, 1
        %v2440 = vpop.permute.xlu0 %2439
        %v2441 = vsel %vm855, %v2434, %v2438
        %v2442 = vsel %vm855, %v2436, %v2440
        %v2443 = vsel %vm855, %v2438, %v2434
        %v2444 = vsel %vm855, %v2440, %v2436
        %v2445 = vmul.f32 %v2443, %v1496
        %v2446 = vmul.f32 %v2441, %v1500
        %v2447 = vmul.f32 %v2444, %v1496
        %v2448 = vmul.f32 %v2442, %v1500
        %s2449 = scalar_lea.vmem %s7, 52
        %v2450 = vld [vmem:[%s2449] sm:$0xf]
        %v2452 = vsel %vm836, %v2450, 0
        %2454 = vmatprep.subr.mxu0 %v2446
        %2455 = vmatpush1.msra.mxu0 %v2445
        %2456 = vmatprep.subr.mxu0 %v2448
        %2457 = vmatpush1.msra.mxu0 %v2447
        %2458 = vmatprep.subr.mxu0 0.0
        %2459 = vmatpush1.msra.mxu0 0.0
        %2460 = vmatprep.subr.mxu0 0.0
        %2461 = vmatpush1.msra.mxu0 0.0
        %2462 = vmatprep.subr.mxu0 0.0
        %2463 = vmatpush1.msra.mxu0 0.0
        %2464 = vmatprep.subr.mxu0 0.0
        %2465 = vmatpush1.msra.mxu0 0.0
        %2466 = vmatprep.subr.mxu0 0.0
        %2467 = vmatpush1.msra.mxu0 0.0
        %2468 = vmatprep.subr.mxu0 0.0
        %2469 = vmatpush1.msra.mxu0 0.0
        %2470 = vmatprep.subr.mxu0 0.0
        %2471 = vmatpush1.msra.mxu0 0.0
        %2472 = vmatprep.subr.mxu0 0.0
        %2473 = vmatpush1.msra.mxu0 0.0
        %2474 = vmatprep.subr.mxu0 0.0
        %2475 = vmatpush1.msra.mxu0 0.0
        %2476 = vmatprep.subr.mxu0 0.0
        %2477 = vmatpush1.msra.mxu0 0.0
        %2478 = vmatprep.subr.mxu0 0.0
        %2479 = vmatpush1.msra.mxu0 0.0
        %2480 = vmatprep.subr.mxu0 0.0
        %2481 = vmatpush1.msra.mxu0 0.0
        %2482 = vmatprep.subr.mxu0 0.0
        %2483 = vmatpush1.msra.mxu0 0.0
        %2484 = vmatprep.subr.mxu0 0.0
        %2485 = vmatpush1.msra.mxu0 0.0
        %2486 = vmatprep.subr.mxu0 0.0
        %2487 = vmatpush1.msra.mxu0 0.0
        %2488 = vmatprep.subr.mxu0 0.0
        %2489 = vmatpush1.msra.mxu0 0.0
        %2490 = vmatprep.subr.mxu0 0.0
        %2491 = vmatpush1.msra.mxu0 0.0
        %2492 = vmatprep.subr.mxu0 0.0
        %2493 = vmatpush1.msra.mxu0 0.0
        %2494 = vmatprep.subr.mxu0 0.0
        %2495 = vmatpush1.msra.mxu0 0.0
        %2496 = vmatprep.subr.mxu0 0.0
        %2497 = vmatpush1.msra.mxu0 0.0
        %2498 = vmatprep.subr.mxu0 0.0
        %2499 = vmatpush1.msra.mxu0 0.0
        %2500 = vmatprep.subr.mxu0 0.0
        %2501 = vmatpush1.msra.mxu0 0.0
        %2502 = vmatprep.subr.mxu0 0.0
        %2503 = vmatpush1.msra.mxu0 0.0
        %2504 = vmatprep.subr.mxu0 0.0
        %2505 = vmatpush1.msra.mxu0 0.0
        %2506 = vmatprep.subr.mxu0 0.0
        %2507 = vmatpush1.msra.mxu0 0.0
        %2508 = vmatprep.subr.mxu0 0.0
        %2509 = vmatpush1.msra.mxu0 0.0
        %2510 = vmatprep.subr.mxu0 0.0
        %2511 = vmatpush1.msra.mxu0 0.0
        %2512 = vmatprep.subr.mxu0 0.0
        %2513 = vmatpush1.msra.mxu0 0.0
        %2514 = vmatprep.subr.mxu0 0.0
        %2515 = vmatpush1.msra.mxu0 0.0
        %2516 = vmatprep.subr.mxu0 0.0
        %2517 = vmatpush1.msra.mxu0 0.0
        %2518 = vmatprep.mubr.f32.mxu0 0.0
        %2519 = vmatmul.mubr.f32.gmra.mrb[0].mxu0 %v2452
        %v2520 = vpop.f32.mrb[0].mxu0
        %v2521 = vadd.f32 0.0, %v2520
        %v2522 = vpop.f32.mrb[0].mxu0
        %v2523 = vadd.f32 0.0, %v2522
        %2524 = vdwg.mxu0
        %v2525 = vadd.f32 %v2409, %v2521
        %v2526 = vadd.f32 %v2410, %v2523
        %v2527 = vmul.f32 %v1813, %v1594
        %v2528 = vmul.f32 %v1814, %v1597
        %v2529 = vmul.f32 %v1819, %v1596
        %v2530 = vmul.f32 %v1815, %v1594
        %v2531 = vmul.f32 %v1816, %v1597
        %v2532 = vmul.f32 %v1820, %v1596
        %s2533 = scalar_lea.vmem %s7, 60
        %v2534 = vld [vmem:[%s2533] sm:$0xf]
        %2541 = vrot.lane.b32.xlu0 %v2527, 112
        %v2542 = vpop.permute.xlu0 %2541
        %2543 = vrot.lane.b32.xlu0 %v2528, 112
        %v2544 = vpop.permute.xlu0 %2543
        %2545 = vrot.lane.b32.xlu0 %v2529, 112
        %v2546 = vpop.permute.xlu0 %2545
        %2547 = vrot.lane.b32.xlu0 %v2530, 112
        %v2548 = vpop.permute.xlu0 %2547
        %2549 = vrot.lane.b32.xlu0 %v2531, 112
        %v2550 = vpop.permute.xlu0 %2549
        %2551 = vrot.lane.b32.xlu0 %v2532, 112
        %v2552 = vpop.permute.xlu0 %2551
        %v2553 = vsel %vm887, %v2542, %v2544
        %v2554 = vsel %vm887, %v2544, %v2546
        %v2555 = vsel %vm887, %v2548, %v2550
        %v2556 = vsel %vm887, %v2550, %v2552
        %v2562 = vsel %vm836, %v2534, 0
        %2564 = vmatprep.subr.mxu0 %v2554
        %2565 = vmatpush1.msra.mxu0 %v2553
        %2566 = vmatprep.subr.mxu0 %v2556
        %2567 = vmatpush1.msra.mxu0 %v2555
        %2568 = vmatprep.subr.mxu0 0.0
        %2569 = vmatpush1.msra.mxu0 0.0
        %2570 = vmatprep.subr.mxu0 0.0
        %2571 = vmatpush1.msra.mxu0 0.0
        %2572 = vmatprep.subr.mxu0 0.0
        %2573 = vmatpush1.msra.mxu0 0.0
        %2574 = vmatprep.subr.mxu0 0.0
        %2575 = vmatpush1.msra.mxu0 0.0
        %2576 = vmatprep.subr.mxu0 0.0
        %2577 = vmatpush1.msra.mxu0 0.0
        %2578 = vmatprep.subr.mxu0 0.0
        %2579 = vmatpush1.msra.mxu0 0.0
        %2580 = vmatprep.subr.mxu0 0.0
        %2581 = vmatpush1.msra.mxu0 0.0
        %2582 = vmatprep.subr.mxu0 0.0
        %2583 = vmatpush1.msra.mxu0 0.0
        %2584 = vmatprep.subr.mxu0 0.0
        %2585 = vmatpush1.msra.mxu0 0.0
        %2586 = vmatprep.subr.mxu0 0.0
        %2587 = vmatpush1.msra.mxu0 0.0
        %2588 = vmatprep.subr.mxu0 0.0
        %2589 = vmatpush1.msra.mxu0 0.0
        %2590 = vmatprep.subr.mxu0 0.0
        %2591 = vmatpush1.msra.mxu0 0.0
        %2592 = vmatprep.subr.mxu0 0.0
        %2593 = vmatpush1.msra.mxu0 0.0
        %2594 = vmatprep.subr.mxu0 0.0
        %2595 = vmatpush1.msra.mxu0 0.0
        %2596 = vmatprep.subr.mxu0 0.0
        %2597 = vmatpush1.msra.mxu0 0.0
        %2598 = vmatprep.subr.mxu0 0.0
        %2599 = vmatpush1.msra.mxu0 0.0
        %2600 = vmatprep.subr.mxu0 0.0
        %2601 = vmatpush1.msra.mxu0 0.0
        %2602 = vmatprep.subr.mxu0 0.0
        %2603 = vmatpush1.msra.mxu0 0.0
        %2604 = vmatprep.subr.mxu0 0.0
        %2605 = vmatpush1.msra.mxu0 0.0
        %2606 = vmatprep.subr.mxu0 0.0
        %2607 = vmatpush1.msra.mxu0 0.0
        %2608 = vmatprep.subr.mxu0 0.0
        %2609 = vmatpush1.msra.mxu0 0.0
        %2610 = vmatprep.subr.mxu0 0.0
        %2611 = vmatpush1.msra.mxu0 0.0
        %2612 = vmatprep.subr.mxu0 0.0
        %2613 = vmatpush1.msra.mxu0 0.0
        %2614 = vmatprep.subr.mxu0 0.0
        %2615 = vmatpush1.msra.mxu0 0.0
        %2616 = vmatprep.subr.mxu0 0.0
        %2617 = vmatpush1.msra.mxu0 0.0
        %2618 = vmatprep.subr.mxu0 0.0
        %2619 = vmatpush1.msra.mxu0 0.0
        %2620 = vmatprep.subr.mxu0 0.0
        %2621 = vmatpush1.msra.mxu0 0.0
        %2622 = vmatprep.subr.mxu0 0.0
        %2623 = vmatpush1.msra.mxu0 0.0
        %2624 = vmatprep.subr.mxu0 0.0
        %2625 = vmatpush1.msra.mxu0 0.0
        %2626 = vmatprep.subr.mxu0 0.0
        %2627 = vmatpush1.msra.mxu0 0.0
        %2628 = vmatprep.mubr.f32.mxu0 0.0
        %2629 = vmatmul.mubr.f32.gmra.mrb[0].mxu0 %v2562
        %v2630 = vpop.f32.mrb[0].mxu0
        %v2631 = vadd.f32 0.0, %v2630
        %v2632 = vpop.f32.mrb[0].mxu0
        %v2633 = vadd.f32 0.0, %v2632
        %2634 = vdwg.mxu0
        %v2635 = vadd.f32 %v2525, %v2631
        %v2636 = vadd.f32 %v2526, %v2633
        %2637 = vrot.lane.b32.xlu0 %v2425, 127
        %v2638 = vpop.permute.xlu0 %2637
        %2639 = vrot.lane.b32.xlu0 %v2427, 127
        %v2640 = vpop.permute.xlu0 %2639
        %2641 = vrot.lane.b32.xlu0 %v2426, 127
        %v2642 = vpop.permute.xlu0 %2641
        %2643 = vrot.lane.b32.xlu0 %v2428, 127
        %v2644 = vpop.permute.xlu0 %2643
        %v2645 = vsel %vm1082, %v2638, %v2642
        %v2646 = vsel %vm1082, %v2640, %v2644
        %v2647 = vsel %vm1082, %v2642, %v2638
        %v2648 = vsel %vm1082, %v2644, %v2640
        %v2649 = vmul.f32 %v2645, %v1726
        %v2650 = vmul.f32 %v2647, %v1730
        %v2651 = vmul.f32 %v2646, %v1726
        %v2652 = vmul.f32 %v2648, %v1730
        %s2653 = scalar_lea.vmem %s7, 68
        %v2654 = vld [vmem:[%s2653] sm:$0xf]
        %v2656 = vsel %vm836, %v2654, 0
        %2658 = vmatprep.subr.mxu0 %v2650
        %2659 = vmatpush1.msra.mxu0 %v2649
        %2660 = vmatprep.subr.mxu0 %v2652
        %2661 = vmatpush1.msra.mxu0 %v2651
        %2662 = vmatprep.subr.mxu0 0.0
        %2663 = vmatpush1.msra.mxu0 0.0
        %2664 = vmatprep.subr.mxu0 0.0
        %2665 = vmatpush1.msra.mxu0 0.0
        %2666 = vmatprep.subr.mxu0 0.0
        %2667 = vmatpush1.msra.mxu0 0.0
        %2668 = vmatprep.subr.mxu0 0.0
        %2669 = vmatpush1.msra.mxu0 0.0
        %2670 = vmatprep.subr.mxu0 0.0
        %2671 = vmatpush1.msra.mxu0 0.0
        %2672 = vmatprep.subr.mxu0 0.0
        %2673 = vmatpush1.msra.mxu0 0.0
        %2674 = vmatprep.subr.mxu0 0.0
        %2675 = vmatpush1.msra.mxu0 0.0
        %2676 = vmatprep.subr.mxu0 0.0
        %2677 = vmatpush1.msra.mxu0 0.0
        %2678 = vmatprep.subr.mxu0 0.0
        %2679 = vmatpush1.msra.mxu0 0.0
        %2680 = vmatprep.subr.mxu0 0.0
        %2681 = vmatpush1.msra.mxu0 0.0
        %2682 = vmatprep.subr.mxu0 0.0
        %2683 = vmatpush1.msra.mxu0 0.0
        %2684 = vmatprep.subr.mxu0 0.0
        %2685 = vmatpush1.msra.mxu0 0.0
        %2686 = vmatprep.subr.mxu0 0.0
        %2687 = vmatpush1.msra.mxu0 0.0
        %2688 = vmatprep.subr.mxu0 0.0
        %2689 = vmatpush1.msra.mxu0 0.0
        %2690 = vmatprep.subr.mxu0 0.0
        %2691 = vmatpush1.msra.mxu0 0.0
        %2692 = vmatprep.subr.mxu0 0.0
        %2693 = vmatpush1.msra.mxu0 0.0
        %2694 = vmatprep.subr.mxu0 0.0
        %2695 = vmatpush1.msra.mxu0 0.0
        %2696 = vmatprep.subr.mxu0 0.0
        %2697 = vmatpush1.msra.mxu0 0.0
        %2698 = vmatprep.subr.mxu0 0.0
        %2699 = vmatpush1.msra.mxu0 0.0
        %2700 = vmatprep.subr.mxu0 0.0
        %2701 = vmatpush1.msra.mxu0 0.0
        %2702 = vmatprep.subr.mxu0 0.0
        %2703 = vmatpush1.msra.mxu0 0.0
        %2704 = vmatprep.subr.mxu0 0.0
        %2705 = vmatpush1.msra.mxu0 0.0
        %2706 = vmatprep.subr.mxu0 0.0
        %2707 = vmatpush1.msra.mxu0 0.0
        %2708 = vmatprep.subr.mxu0 0.0
        %2709 = vmatpush1.msra.mxu0 0.0
        %2710 = vmatprep.subr.mxu0 0.0
        %2711 = vmatpush1.msra.mxu0 0.0
        %2712 = vmatprep.subr.mxu0 0.0
        %2713 = vmatpush1.msra.mxu0 0.0
        %2714 = vmatprep.subr.mxu0 0.0
        %2715 = vmatpush1.msra.mxu0 0.0
        %2716 = vmatprep.subr.mxu0 0.0
        %2717 = vmatpush1.msra.mxu0 0.0
        %2718 = vmatprep.subr.mxu0 0.0
        %2719 = vmatpush1.msra.mxu0 0.0
        %2720 = vmatprep.subr.mxu0 0.0
        %2721 = vmatpush1.msra.mxu0 0.0
        %2722 = vmatprep.mubr.f32.mxu0 0.0
        %2723 = vmatmul.mubr.f32.gmra.mrb[0].mxu0 %v2656
        %v2724 = vpop.f32.mrb[0].mxu0
        %v2725 = vadd.f32 0.0, %v2724
        %v2726 = vpop.f32.mrb[0].mxu0
        %v2727 = vadd.f32 0.0, %v2726
        %2728 = vdwg.mxu0
        %v2729 = vadd.f32 %v2635, %v2725
        %v2730 = vadd.f32 %v2636, %v2727
        %v2731 = vld [vmem:[%s8] sm:$0xf]
        %2733 = vset.pattern.permute.xlu0 0
        %2734 = vperm.xlu0 %2733, %v2731
        %v2735 = vpop.permute.xlu0 %2734
        %v2737 = vadd.f32 %v2729, %v2735
        %v2738 = vadd.f32 %v2730, %v2735
        %v2739 = vmax.f32 %v2737, 0.0
        %v2740 = vmax.f32 %v2738, 0.0
        %v2741 = vld [vmem:[%s9] sm:$0x3]
        %v2742 = vld [vmem:[%s10] sm:$0x3]
        %2744 = vset.pattern.permute.xlu0 0
        %2745 = vperm.xlu0 %2744, %v2742
        %v2746 = vpop.permute.xlu0 %2745
        %vm2748 = vcmask 31744
        %v2750 = vsel %vm2748, %v2741, 0
        %vm2752 = vcmask 1043456
        %v2754 = vsel %vm2752, %v2739, 0
        %v2757 = vsel %vm2752, %v2740, 0
        %2759 = vmatprep.subr.mxu0 %v2757
        %2760 = vmatpush1.msra.mxu0 %v2754
        %2761 = vmatprep.subr.mxu0 0.0
        %2762 = vmatpush1.msra.mxu0 0.0
        %2763 = vmatprep.subr.mxu0 0.0
        %2764 = vmatpush1.msra.mxu0 0.0
        %2765 = vmatprep.subr.mxu0 0.0
        %2766 = vmatpush1.msra.mxu0 0.0
        %2767 = vmatprep.subr.mxu0 0.0
        %2768 = vmatpush1.msra.mxu0 0.0
        %2769 = vmatprep.subr.mxu0 0.0
        %2770 = vmatpush1.msra.mxu0 0.0
        %2771 = vmatprep.subr.mxu0 0.0
        %2772 = vmatpush1.msra.mxu0 0.0
        %2773 = vmatprep.subr.mxu0 0.0
        %2774 = vmatpush1.msra.mxu0 0.0
        %2775 = vmatprep.subr.mxu0 0.0
        %2776 = vmatpush1.msra.mxu0 0.0
        %2777 = vmatprep.subr.mxu0 0.0
        %2778 = vmatpush1.msra.mxu0 0.0
        %2779 = vmatprep.subr.mxu0 0.0
        %2780 = vmatpush1.msra.mxu0 0.0
        %2781 = vmatprep.subr.mxu0 0.0
        %2782 = vmatpush1.msra.mxu0 0.0
        %2783 = vmatprep.subr.mxu0 0.0
        %2784 = vmatpush1.msra.mxu0 0.0
        %2785 = vmatprep.subr.mxu0 0.0
        %2786 = vmatpush1.msra.mxu0 0.0
        %2787 = vmatprep.subr.mxu0 0.0
        %2788 = vmatpush1.msra.mxu0 0.0
        %2789 = vmatprep.subr.mxu0 0.0
        %2790 = vmatpush1.msra.mxu0 0.0
        %2791 = vmatprep.subr.mxu0 0.0
        %2792 = vmatpush1.msra.mxu0 0.0
        %2793 = vmatprep.subr.mxu0 0.0
        %2794 = vmatpush1.msra.mxu0 0.0
        %2795 = vmatprep.subr.mxu0 0.0
        %2796 = vmatpush1.msra.mxu0 0.0
        %2797 = vmatprep.subr.mxu0 0.0
        %2798 = vmatpush1.msra.mxu0 0.0
        %2799 = vmatprep.subr.mxu0 0.0
        %2800 = vmatpush1.msra.mxu0 0.0
        %2801 = vmatprep.subr.mxu0 0.0
        %2802 = vmatpush1.msra.mxu0 0.0
        %2803 = vmatprep.subr.mxu0 0.0
        %2804 = vmatpush1.msra.mxu0 0.0
        %2805 = vmatprep.subr.mxu0 0.0
        %2806 = vmatpush1.msra.mxu0 0.0
        %2807 = vmatprep.subr.mxu0 0.0
        %2808 = vmatpush1.msra.mxu0 0.0
        %2809 = vmatprep.subr.mxu0 0.0
        %2810 = vmatpush1.msra.mxu0 0.0
        %2811 = vmatprep.subr.mxu0 0.0
        %2812 = vmatpush1.msra.mxu0 0.0
        %2813 = vmatprep.subr.mxu0 0.0
        %2814 = vmatpush1.msra.mxu0 0.0
        %2815 = vmatprep.subr.mxu0 0.0
        %2816 = vmatpush1.msra.mxu0 0.0
        %2817 = vmatprep.subr.mxu0 0.0
        %2818 = vmatpush1.msra.mxu0 0.0
        %2819 = vmatprep.subr.mxu0 0.0
        %2820 = vmatpush1.msra.mxu0 0.0
        %2821 = vmatprep.subr.mxu0 0.0
        %2822 = vmatpush1.msra.mxu0 0.0
        %2823 = vmatprep.mubr.f32.mxu0 0.0
        %2824 = vmatmul.mubr.f32.gmra.mrb[0].mxu0 %v2750
        %v2825 = vpop.f32.mrb[0].mxu0
        %v2826 = vadd.f32 %v2746, %v2825
        %v2827 = vpop.f32.mrb[0].mxu0
        %v2828 = vadd.f32 %v2746, %v2827
        %2829 = vdwg.mxu0
        %v2832 = vrot.slane %v2826, 7
        %v2833 = vrot.slane %v2828, 7
        %v2836 = vsub.f32 %v2826, %v2832
        %v2837 = vsub.f32 %v2828, %v2833
        %v2838 = vmul.f32 %v2836, 1.442695
        %v2839 = vpow.pop %v2838
        %v2840 = vmul.f32 %v2837, 1.442695
        %v2841 = vpow.pop %v2840
        %v2842 = vadd.f32 %v2839, 1.0
        %v2843 = vadd.f32 %v2841, 1.0
        %v2844 = vrcp.pop %v2842
        %v2845 = vmul.f32 1.0, %v2844
        %v2846 = vrcp.pop %v2843
        %v2847 = vmul.f32 1.0, %v2846
        %v2848 = vsub.f32 1.0, %v2845
        %v2849 = vsub.f32 1.0, %v2847
        %v2850 = vlaneseq
        %v2851 = vshrl.u32 %v2850, 7
        %v2852 = vsub.s32 1, %v2851
        %v2853 = vrot.slane %v2845, %v2852
        %v2854 = vlaneseq
        %v2855 = vshrl.u32 %v2854, 7
        %v2856 = vsub.s32 1, %v2855
        %v2857 = vrot.slane %v2847, %v2856
        %v2858 = vmul.f32 %v810, %v2853
        %v2859 = vmul.f32 %v811, %v2857
        %v2860 = vmul.f32 %v812, %v2853
        %v2861 = vmul.f32 %v813, %v2857
        %v2862 = vlaneseq
        %v2863 = vshrl.u32 %v2862, 7
        %v2864 = vsub.s32 1, %v2863
        %v2865 = vrot.slane %v2848, %v2864
        %v2866 = vlaneseq
        %v2867 = vshrl.u32 %v2866, 7
        %v2868 = vsub.s32 1, %v2867
        %v2869 = vrot.slane %v2849, %v2868
        %v2870 = vmul.f32 %v1813, %v2865
        %v2871 = vmul.f32 %v1814, %v2869
        %v2872 = vmul.f32 %v1815, %v2865
        %v2873 = vmul.f32 %v1816, %v2869
        %v2874 = vadd.f32 %v2858, %v2870
        %v2875 = vadd.f32 %v2859, %v2871
        %v2876 = vadd.f32 %v2860, %v2872
        %v2877 = vadd.f32 %v2861, %v2873
        %v2878 = vld [vmem:[%s11] sm:$0xff]
        %v2879 = vld [vmem:[%s11 + $0x8] sm:$0xff]
        %2881 = vset.pattern.permute.xlu0 0
        %2882 = vperm.xlu0 %2881, %v2878
        %v2883 = vpop.permute.xlu0 %2882
        %2886 = vset.pattern.permute.xlu0 0
        %2887 = vperm.xlu0 %2886, %v2879
        %v2888 = vpop.permute.xlu0 %2887
        %v2890 = vmul.f32 %v2874, %v2883
        %v2891 = vmul.f32 %v2875, %v2883
        %v2892 = vmul.f32 %v2876, %v2888
        %v2893 = vmul.f32 %v2877, %v2888
        %v2894 = vld [vmem:[%s12] sm:$0xff]
        %v2895 = vld [vmem:[%s12 + $0x8] sm:$0xff]
        %2897 = vset.pattern.permute.xlu0 0
        %2898 = vperm.xlu0 %2897, %v2894
        %v2899 = vpop.permute.xlu0 %2898
        %2902 = vset.pattern.permute.xlu0 0
        %2903 = vperm.xlu0 %2902, %v2895
        %v2904 = vpop.permute.xlu0 %2903
        %v2906 = vadd.f32 %v2890, %v2899
        %v2907 = vadd.f32 %v2891, %v2899
        %v2908 = vadd.f32 %v2892, %v2904
        %v2909 = vadd.f32 %v2893, %v2904
        %2910 = vst [vmem:[%s778] sm:$0xff] %v2906
        %2911 = vst [vmem:[%s778 + $0x8] sm:$0xff] %v2907
        %2912 = vst [vmem:[%s778 + $0x10] sm:$0xff] %v2908
        %2913 = vst [vmem:[%s778 + $0x18] sm:$0xff] %v2909
        %s2914 = sand.u32 %s408, 1
        %s2915 = scalar_lea.sflag [#allocation5], %s2914
        %s2916 = sand.u32 %s408, 1
        %s2917 = smul.addr %s2916, 32
        %s2918 = scalar_lea.vmem [#allocation12], %s2917
        // Predicated region
        $region165: #{tpu_custom_call.1} parent=139 // pred_check
          %p2919 = pneg %p418
        $region166: #{tpu_custom_call.1} parent=139 // pred_check_branch
          %2921 = sbr.rel (%p2919) target = $region168
        $region167: #{tpu_custom_call.1} parent=139 // pred_region
          %s2922 = smul.u32 2, %s39
          %s2924 = ssub.s32 512, 512
          %2925 = vsyncadd %s2915, %s2924
          %s2926 = smul.addr %s38, 4
          %s2927 = sadd.s32 %s2922, %s2926
          %s2928 = smul.addr %s2927, 128
          %s2929 = scalar_lea.hbm %s13, %s2928
          %s2930 = sshll.u32 %s2918, 4
          %s2931 = int_to_ptr.vmem [resolvable:$true] %s2930
          %2936 = dma.vmem_to_hbm [thread:$0]  %s2931, 512, %s2929, %s2915, 256, 256, 16
        $region168: #{tpu_custom_call.1} parent=139 // pred_fallthru
          _
      $region140: #{tpu_custom_call.1} parent=5 // pred_fallthru
        _
      %p2937 = scmp.le.s32.totalorder 2, %s29
      // Predicated region
      $region169: #{tpu_custom_call.1} parent=5 // pred_check
        %p2938 = pneg %p2937
      $region170: #{tpu_custom_call.1} parent=5 // pred_check_branch
        %2940 = sbr.rel (%p2938) target = $region172
      $region171: #{tpu_custom_call.1} parent=5 // pred_region
        %s2941 = ssub.s32 %s29, 2
        // Predicated region
        $region173: #{tpu_custom_call.1} parent=171 // pred_check
          %p2942 = pneg %p424
        $region174: #{tpu_custom_call.1} parent=171 // pred_check_branch
          %2944 = sbr.rel (%p2942) target = $region176
        $region175: #{tpu_custom_call.1} parent=171 // pred_region
          %s2945 = sand.u32 %s409, 1
          %s2946 = scalar_lea.sflag [#allocation5], %s2945
          %s2947 = sand.u32 %s409, 1
          %s2948 = smul.addr %s2947, 32
          %s2949 = scalar_lea.vmem [#allocation12], %s2948
          %2950 = dma.done %s2946, 512
        $region176: #{tpu_custom_call.1} parent=171 // pred_fallthru
          _
      $region172: #{tpu_custom_call.1} parent=5 // pred_fallthru
        _
    $region6: #{tpu_custom_call.1} parent=1 // loop_footer
      %s33 = sadd.s32 1, %s29
    $region7: #{tpu_custom_call.1} parent=1 // loop_footer_branch
      %28 = sbr.rel target = $region3
    $region8: #{tpu_custom_call.1} parent=1 // loop_exit
      _
    %2951 = vsyncpa [#allocation4], 1
    %s2952 = scalar_lea.sflag [#allocation4], 1
    %2953 = vsyncpa %s2952, 1
    %2954 = vsyncpa [#allocation7], 1
    %s2955 = scalar_lea.sflag [#allocation7], 1
    %2956 = vsyncpa %s2955, 1
    %2957 = vsyncpa [#allocation11], 1
    %2958 = vsyncpa [#allocation5], 1
    %s2959 = scalar_lea.sflag [#allocation5], 1
    %2960 = vsyncpa %s2959, 1

</llo_original>
